<compile_context>
chip_gen: v5e
topology: v5e:2x2
jax: 0.10.0
libtpu: 0.0.40
codegen_flags: <defaults>
</compile_context>

<pallas_src>
import jax
import jax.numpy as jnp
from jax.experimental import pallas as pl
from jax.experimental.pallas import tpu as pltpu

EPS = 1e-15                      # same epsilon as torch_geometric dense_diff_pool
MXU_DTYPE = jnp.bfloat16         # matmul input dtype (f32 accumulation)
MASK_DTYPE = jnp.bfloat16        # 0/1 masks shipped at half the HBM bytes


def _tpu_vmem_budget():
    """(vmem_capacity_bytes, vmem_limit_bytes) with safe fallbacks."""
    cap = 128 * 1024 * 1024
    try:
        info = pltpu.get_tpu_info()
        cap = int(getattr(info, "vmem_capacity_bytes", cap) or cap)
    except Exception:
        pass
    # ~96 MiB scoped limit on 128 MiB chips (v5e/v6e), ~48 MiB on v7x (64 MiB).
    limit = min((cap * 3) // 4, 100 * 1024 * 1024)
    return cap, limit


def _graphs_per_block(B, N, fmax, vmem_limit):
    """Largest divisor of B whose level-0 working set fits the VMEM budget.

    Default is Bt = B (one grid step): v5e/v6e have a single TensorCore, so a
    batch split is just a serial loop that halves MXU fill and doubles
    per-step overhead.  Only shrink when VMEM forces tiling (v7x, large N).
    """
    per_graph = (N * N * (2 * 2 + 4 + 2)          # bf16 mask (2x buf) + f32 adj + bf16 adj
                 + 8 * N * max(fmax, 8) * 4       # a handful of [N, fmax] f32 activations
                 + 4096)
    budget = max(vmem_limit // 2, 1)              # headroom for weights / outputs / pipeline
    bt = B
    while bt > 1 and (B % bt != 0 or bt * per_graph > budget):
        bt -= 1
    return max(bt, 1)


# ----------------------- single fused forward kernel ------------------------

def _make_fused_kernel(layer_counts, n_mlp, n_levels):
    """Gauss adj + (pool-GNN, emb-GNN, dense_diff_pool) x levels + MLP head."""

    def kernel(*refs):
        idx = 0
        x_ref = refs[idx]; idx += 1
        pos_ref = refs[idx]; idx += 1
        amask_ref = refs[idx]; idx += 1
        nmask_ref = refs[idx]; idx += 1
        level_w = []
        for n_pool, n_emb in layer_counts:
            pool_refs = refs[idx: idx + 2 * n_pool]; idx += 2 * n_pool
            emb_refs = refs[idx: idx + 2 * n_emb]; idx += 2 * n_emb
            level_w.append((pool_refs, emb_refs))
        mlp_refs = refs[idx: idx + 2 * n_mlp]; idx += 2 * n_mlp
        out_ref, stats_ref = refs[idx], refs[idx + 1]

        x = x_ref[...].astype(jnp.float32)                    # [Bt, N, Fin]
        Bt, N0, _ = x.shape

        # ---- level-0 adjacency: Gauss kernel on masked edges (Gram trick) ---
        p = pos_ref[...].astype(jnp.float32)                  # [Bt, N, P]
        gram = jnp.einsum('bnp,bmp->bnm', p, p,
                          preferred_element_type=jnp.float32)
        sq = jnp.sum(p * p, axis=-1)
        d2 = jnp.maximum(sq[:, :, None] + sq[:, None, :] - 2.0 * gram, 0.0)
        adj = amask_ref[...].astype(jnp.float32) * jnp.exp(-0.5 * d2)
        nmask = nmask_ref[...].astype(jnp.float32)            # [Bt, N, 1]

        def gcn_stack(h, adj_mm, dinv, layer_refs, relu_last):
            # folded GCN normalization: D^-1/2 (A+I) D^-1/2 (A symmetric)
            def norm_prop(t):                                 # Norm(A) @ t
                tn = dinv * t
                at = jnp.einsum('bnm,bmf->bnf', adj_mm, tn.astype(MXU_DTYPE),
                                preferred_element_type=jnp.float32)
                return dinv * (at + tn)

            def matmul_w(t, w_ref):                           # flattened MXU matmul
                fin, fout = w_ref.shape
                bt, n, _ = t.shape
                y = jnp.dot(t.reshape(bt * n, fin).astype(MXU_DTYPE),
                            w_ref[...].astype(MXU_DTYPE),
                            preferred_element_type=jnp.float32)
                return y.reshape(bt, n, fout)

            n_layers = len(layer_refs) // 2
            for li in range(n_layers):
                w_ref, b_ref = layer_refs[2 * li], layer_refs[2 * li + 1]
                fin, fout = w_ref.shape
                if fin <= fout:      # A-side contraction on the smaller dim
                    y = matmul_w(norm_prop(h), w_ref)
                else:
                    y = norm_prop(matmul_w(h, w_ref))
                y = y + b_ref[...].astype(jnp.float32)
                if relu_last or (li < n_layers - 1):
                    y = jnp.maximum(y, 0.0)
                h = y
            return h

        link_parts, ent_parts = [], []
        for lvl in range(n_levels):
            pool_refs, emb_refs = level_w[lvl]
            dinv = jax.lax.rsqrt(jnp.sum(adj, axis=-1, keepdims=True) + 1.0)
            adj_mm = adj.astype(MXU_DTYPE)   # single bf16 MXU copy of A

            s_logits = gcn_stack(x, adj_mm, dinv, pool_refs, relu_last=False)
            x_emb = gcn_stack(x, adj_mm, dinv, emb_refs, relu_last=True)

            # ---- dense_diff_pool: softmax over clusters ----
            m = jnp.max(s_logits, axis=-1, keepdims=True)
            e = jnp.exp(s_logits - m)
            s = e * pl.reciprocal(jnp.sum(e, axis=-1, keepdims=True),
                                  approx=True)                # [Bt, n, C]
            if lvl == 0:                                      # mask padded nodes
                s = s * nmask
                x_emb = x_emb * nmask

            # batched bf16 MXU einsums, f32 accumulation
            s_mm = s.astype(MXU_DTYPE)
            x_mm = x_emb.astype(MXU_DTYPE)
            x_pool = jnp.einsum('bnc,bnf->bcf', s_mm, x_mm,
                                preferred_element_type=jnp.float32)
            sta = jnp.einsum('bnc,bnm->bcm', s_mm, adj_mm,
                             preferred_element_type=jnp.float32)
            adj_pool = jnp.einsum('bcm,bmd->bcd', sta.astype(MXU_DTYPE), s_mm,
                                  preferred_element_type=jnp.float32)
            sst = jnp.einsum('bnc,bmc->bnm', s_mm, s_mm,
                             preferred_element_type=jnp.float32)
            diff = adj - sst
            link_parts.append(jnp.sum(diff * diff).reshape(1, 1))
            ent_parts.append(jnp.sum(-s * jnp.log(s + EPS)).reshape(1, 1))

            # carry to next level entirely inside VMEM, full f32
            x = x_pool
            adj = adj_pool

        # ------------------------------ head ---------------------------------
        h = jnp.mean(x, axis=1)                               # [Bt, Femb]
        for li in range(n_mlp):
            w = mlp_refs[2 * li][...].astype(jnp.float32)
            b = mlp_refs[2 * li + 1][...].astype(jnp.float32)
            h = jnp.dot(h, w, preferred_element_type=jnp.float32) + b
            if li < n_mlp - 1:
                h = jnp.maximum(h, 0.0)
            else:
                h = 1.0 / (1.0 + jnp.exp(-h))                 # exact sigmoid
        dout = h.shape[-1]
        if dout < 128:
            h = jnp.concatenate(
                [h, jnp.zeros((Bt, 128 - dout), jnp.float32)], axis=-1)
        out_ref[...] = jnp.broadcast_to(h[:, None, :], (Bt, 8, 128))

        # lane-dense stats tile: row 0 lane l = link SS partial of level l,
        #                        row 1 lane l = entropy partial of level l.
        row = jax.lax.broadcasted_iota(jnp.int32, (8, 128), 0)
        lane = jax.lax.broadcasted_iota(jnp.int32, (8, 128), 1)
        tile = jnp.zeros((8, 128), jnp.float32)
        for l in range(n_levels):
            tile = tile + jnp.where((row == 0) & (lane == l), link_parts[l], 0.0)
            tile = tile + jnp.where((row == 1) & (lane == l), ent_parts[l], 0.0)
        stats_ref[0] = tile

    return kernel


# ------------------------------ forward --------------------------------------

def gnn_diffpool_forward(params, x, pos, adj_mask, node_mask):
    B, N, Fin = x.shape
    P = pos.shape[-1]
    n_levels = len(params['emb'])
    assert n_levels <= 128
    clusters = [params['pool'][l][-1][0].shape[1] for l in range(n_levels)]
    femb = params['emb'][-1][-1][0].shape[1]
    dout = params['mlp'][-1][0].shape[1]
    assert dout <= 128

    _, vmem_limit = _tpu_vmem_budget()
    Bt = _graphs_per_block(B, N, max(Fin, femb), vmem_limit)
    G = B // Bt

    if adj_mask.dtype != MASK_DTYPE:
        adj_mask = adj_mask.astype(MASK_DTYPE)
    if node_mask.dtype != MASK_DTYPE:
        node_mask = node_mask.astype(MASK_DTYPE)

    inputs = [x, pos, adj_mask, node_mask]
    in_specs = [
        pl.BlockSpec((Bt, N, Fin), lambda g: (g, 0, 0)),
        pl.BlockSpec((Bt, N, P), lambda g: (g, 0, 0)),
        pl.BlockSpec((Bt, N, N), lambda g: (g, 0, 0)),
        pl.BlockSpec((Bt, N, 1), lambda g: (g, 0, 0)),
    ]
    layer_counts = []
    for lvl in range(n_levels):
        pool_layers = params['pool'][lvl]
        emb_layers = params['emb'][lvl]
        layer_counts.append((len(pool_layers), len(emb_layers)))
        for w, b in list(pool_layers) + list(emb_layers):
            inputs += [w, b]
            in_specs += [pl.BlockSpec(w.shape, lambda g: (0, 0)),
                         pl.BlockSpec(b.shape, lambda g: (0, 0))]
    for w, b in params['mlp']:
        inputs += [w, b]
        in_specs += [pl.BlockSpec(w.shape, lambda g: (0, 0)),
                     pl.BlockSpec(b.shape, lambda g: (0, 0))]

    kernel = _make_fused_kernel(tuple(layer_counts), len(params['mlp']),
                                n_levels)
    out3d, stats = pl.pallas_call(
        kernel,
        out_shape=(jax.ShapeDtypeStruct((B, 8, 128), jnp.float32),
                   jax.ShapeDtypeStruct((G, 8, 128), jnp.float32)),
        grid=(G,),
        in_specs=in_specs,
        out_specs=(pl.BlockSpec((Bt, 8, 128), lambda g: (g, 0, 0)),
                   pl.BlockSpec((1, 8, 128), lambda g: (g, 0, 0))),
        compiler_params=pltpu.CompilerParams(
            dimension_semantics=("parallel",),
            vmem_limit_bytes=vmem_limit),
    )(*inputs)

    out = out3d[:, 0, :dout]

    # torch_geometric.dense_diff_pool loss conventions, per level:
    #   link = ||A - S S^T||_F / numel(A);  ent = mean(-S log(S+eps))
    node_counts = [N] + clusters[:-1]
    lsum = jnp.zeros((), jnp.float32)
    esum = jnp.zeros((), jnp.float32)
    for l, n_l in enumerate(node_counts):
        lsum = lsum + jnp.sqrt(jnp.sum(stats[:, 0, l])) / (B * n_l * n_l)
        esum = esum + jnp.sum(stats[:, 1, l]) / (B * n_l)
    return out, lsum, esum


# --------------------------- parameter init ---------------------------------

def _init_linear(key, fan_in, fan_out):
    kw, kb = jax.random.split(key)
    lim = (6.0 / (fan_in + fan_out)) ** 0.5
    w = jax.random.uniform(kw, (fan_in, fan_out), jnp.float32, -lim, lim)
    b = jax.random.uniform(kb, (1, fan_out), jnp.float32, -lim, lim)
    return w, b


def init_params(key, input_dim, emb_dim, pool_dim, num_clusters,
                num_hidden_emblayer, num_hidden_poollayer, num_mlp_layer):
    params = {'emb': [], 'pool': []}
    for i, c in enumerate(num_clusters):
        emb_in = input_dim if i == 0 else emb_dim
        pool_in = input_dim if i == 0 else emb_dim  # see TODO(synk) above
        emb_dims = [emb_in] + [emb_dim] * num_hidden_emblayer + [emb_dim]
        pool_dims = [pool_in] + [pool_dim] * num_hidden_poollayer + [c]
        emb_layers, pool_layers = [], []
        for d_in, d_out in zip(emb_dims[:-1], emb_dims[1:]):
            key, sub = jax.random.split(key)
            emb_layers.append(_init_linear(sub, d_in, d_out))
        for d_in, d_out in zip(pool_dims[:-1], pool_dims[1:]):
            key, sub = jax.random.split(key)
            pool_layers.append(_init_linear(sub, d_in, d_out))
        params['emb'].append(emb_layers)
        params['pool'].append(pool_layers)
    mlp = []
    dims = [emb_dim] + num_mlp_layer
    for d_in, d_out in zip(dims[:-1], dims[1:]):
        key, sub = jax.random.split(key)
        mlp.append(_init_linear(sub, d_in, d_out))
    params['mlp'] = mlp
    return params


# -------------------------------- main ---------------------------------------

if __name__ == "__main__":
    B, N, IN_DIM = 2, 16, 4
    EMB_DIM, POOL_DIM = 32, 16
    CLUSTERS = [8, 4, 2]

    key = jax.random.PRNGKey(0)
    kx, kp, kparam = jax.random.split(key, 3)
    x = jax.random.normal(kx, (B, N, IN_DIM), jnp.float32)
    pos = jax.random.normal(kp, (B, N, 3), jnp.float32)

    # deterministic ring graph: i ~ i±1, i±2 (mod N), symmetric, no self loops
    idx = jnp.arange(N)
    d = (idx[:, None] - idx[None, :]) % N
    mask2d = ((d == 1) | (d == 2) | (d == N - 1) | (d == N - 2))
    adj_mask = jnp.broadcast_to(mask2d, (B, N, N)).astype(MASK_DTYPE)
    node_mask = jnp.ones((B, N, 1), MASK_DTYPE)    # all nodes valid (dense batch)

    params = init_params(kparam, IN_DIM, EMB_DIM, POOL_DIM, CLUSTERS,
                         num_hidden_emblayer=3, num_hidden_poollayer=3,
                         num_mlp_layer=[1])

    fwd = jax.jit(gnn_diffpool_forward)
    out, lsum, esum = fwd(params, x, pos, adj_mask, node_mask)
    jax.block_until_ready((out, lsum, esum))
    assert out.shape == (B, 1)
    print("KERNEL_OK")
</pallas_src>

<mosaic_0001>
module attributes {stable_mosaic.version = 11 : i64} {
  func.func @kernel(%arg0: i32, %arg1: memref<2x16x4xf32, #tpu.memory_space<vmem>>, %arg2: memref<2x16x3xf32, #tpu.memory_space<vmem>>, %arg3: memref<2x16x16xbf16, #tpu.memory_space<vmem>>, %arg4: memref<2x16x1xbf16, #tpu.memory_space<vmem>>, %arg5: memref<4x16xf32, #tpu.memory_space<vmem>>, %arg6: memref<1x16xf32, #tpu.memory_space<vmem>>, %arg7: memref<16x16xf32, #tpu.memory_space<vmem>>, %arg8: memref<1x16xf32, #tpu.memory_space<vmem>>, %arg9: memref<16x16xf32, #tpu.memory_space<vmem>>, %arg10: memref<1x16xf32, #tpu.memory_space<vmem>>, %arg11: memref<16x8xf32, #tpu.memory_space<vmem>>, %arg12: memref<1x8xf32, #tpu.memory_space<vmem>>, %arg13: memref<4x32xf32, #tpu.memory_space<vmem>>, %arg14: memref<1x32xf32, #tpu.memory_space<vmem>>, %arg15: memref<32x32xf32, #tpu.memory_space<vmem>>, %arg16: memref<1x32xf32, #tpu.memory_space<vmem>>, %arg17: memref<32x32xf32, #tpu.memory_space<vmem>>, %arg18: memref<1x32xf32, #tpu.memory_space<vmem>>, %arg19: memref<32x32xf32, #tpu.memory_space<vmem>>, %arg20: memref<1x32xf32, #tpu.memory_space<vmem>>, %arg21: memref<32x16xf32, #tpu.memory_space<vmem>>, %arg22: memref<1x16xf32, #tpu.memory_space<vmem>>, %arg23: memref<16x16xf32, #tpu.memory_space<vmem>>, %arg24: memref<1x16xf32, #tpu.memory_space<vmem>>, %arg25: memref<16x16xf32, #tpu.memory_space<vmem>>, %arg26: memref<1x16xf32, #tpu.memory_space<vmem>>, %arg27: memref<16x4xf32, #tpu.memory_space<vmem>>, %arg28: memref<1x4xf32, #tpu.memory_space<vmem>>, %arg29: memref<32x32xf32, #tpu.memory_space<vmem>>, %arg30: memref<1x32xf32, #tpu.memory_space<vmem>>, %arg31: memref<32x32xf32, #tpu.memory_space<vmem>>, %arg32: memref<1x32xf32, #tpu.memory_space<vmem>>, %arg33: memref<32x32xf32, #tpu.memory_space<vmem>>, %arg34: memref<1x32xf32, #tpu.memory_space<vmem>>, %arg35: memref<32x32xf32, #tpu.memory_space<vmem>>, %arg36: memref<1x32xf32, #tpu.memory_space<vmem>>, %arg37: memref<32x16xf32, #tpu.memory_space<vmem>>, %arg38: memref<1x16xf32, #tpu.memory_space<vmem>>, %arg39: memref<16x16xf32, #tpu.memory_space<vmem>>, %arg40: memref<1x16xf32, #tpu.memory_space<vmem>>, %arg41: memref<16x16xf32, #tpu.memory_space<vmem>>, %arg42: memref<1x16xf32, #tpu.memory_space<vmem>>, %arg43: memref<16x2xf32, #tpu.memory_space<vmem>>, %arg44: memref<1x2xf32, #tpu.memory_space<vmem>>, %arg45: memref<32x32xf32, #tpu.memory_space<vmem>>, %arg46: memref<1x32xf32, #tpu.memory_space<vmem>>, %arg47: memref<32x32xf32, #tpu.memory_space<vmem>>, %arg48: memref<1x32xf32, #tpu.memory_space<vmem>>, %arg49: memref<32x32xf32, #tpu.memory_space<vmem>>, %arg50: memref<1x32xf32, #tpu.memory_space<vmem>>, %arg51: memref<32x32xf32, #tpu.memory_space<vmem>>, %arg52: memref<1x32xf32, #tpu.memory_space<vmem>>, %arg53: memref<32x1xf32, #tpu.memory_space<vmem>>, %arg54: memref<1x1xf32, #tpu.memory_space<vmem>>, %arg55: memref<2x8x128xf32, #tpu.memory_space<vmem>>, %arg56: memref<1x8x128xf32, #tpu.memory_space<vmem>>) attributes {dimension_semantics = [#tpu.dimension_semantics<parallel>], iteration_bounds = array<i64: 1>, scalar_prefetch = 0 : i64, scratch_operands = 0 : i64, tpu.core_type = #tpu.core_type<tc>, window_params = [{transform_indices = @transform_0, window_bounds = array<i64: 2, 16, 4>}, {transform_indices = @transform_1, window_bounds = array<i64: 2, 16, 3>}, {transform_indices = @transform_2, window_bounds = array<i64: 2, 16, 16>}, {transform_indices = @transform_3, window_bounds = array<i64: 2, 16, 1>}, {pipeline_mode = #tpu.pipeline_mode<synchronous>, transform_indices = @transform_4, window_bounds = array<i64: 4, 16>}, {pipeline_mode = #tpu.pipeline_mode<synchronous>, transform_indices = @transform_5, window_bounds = array<i64: 1, 16>}, {pipeline_mode = #tpu.pipeline_mode<synchronous>, transform_indices = @transform_6, window_bounds = array<i64: 16, 16>}, {pipeline_mode = #tpu.pipeline_mode<synchronous>, transform_indices = @transform_7, window_bounds = array<i64: 1, 16>}, {pipeline_mode = #tpu.pipeline_mode<synchronous>, transform_indices = @transform_8, window_bounds = array<i64: 16, 16>}, {pipeline_mode = #tpu.pipeline_mode<synchronous>, transform_indices = @transform_9, window_bounds = array<i64: 1, 16>}, {pipeline_mode = #tpu.pipeline_mode<synchronous>, transform_indices = @transform_10, window_bounds = array<i64: 16, 8>}, {pipeline_mode = #tpu.pipeline_mode<synchronous>, transform_indices = @transform_11, window_bounds = array<i64: 1, 8>}, {pipeline_mode = #tpu.pipeline_mode<synchronous>, transform_indices = @transform_12, window_bounds = array<i64: 4, 32>}, {pipeline_mode = #tpu.pipeline_mode<synchronous>, transform_indices = @transform_13, window_bounds = array<i64: 1, 32>}, {pipeline_mode = #tpu.pipeline_mode<synchronous>, transform_indices = @transform_14, window_bounds = array<i64: 32, 32>}, {pipeline_mode = #tpu.pipeline_mode<synchronous>, transform_indices = @transform_15, window_bounds = array<i64: 1, 32>}, {pipeline_mode = #tpu.pipeline_mode<synchronous>, transform_indices = @transform_16, window_bounds = array<i64: 32, 32>}, {pipeline_mode = #tpu.pipeline_mode<synchronous>, transform_indices = @transform_17, window_bounds = array<i64: 1, 32>}, {pipeline_mode = #tpu.pipeline_mode<synchronous>, transform_indices = @transform_18, window_bounds = array<i64: 32, 32>}, {pipeline_mode = #tpu.pipeline_mode<synchronous>, transform_indices = @transform_19, window_bounds = array<i64: 1, 32>}, {pipeline_mode = #tpu.pipeline_mode<synchronous>, transform_indices = @transform_20, window_bounds = array<i64: 32, 16>}, {pipeline_mode = #tpu.pipeline_mode<synchronous>, transform_indices = @transform_21, window_bounds = array<i64: 1, 16>}, {pipeline_mode = #tpu.pipeline_mode<synchronous>, transform_indices = @transform_22, window_bounds = array<i64: 16, 16>}, {pipeline_mode = #tpu.pipeline_mode<synchronous>, transform_indices = @transform_23, window_bounds = array<i64: 1, 16>}, {pipeline_mode = #tpu.pipeline_mode<synchronous>, transform_indices = @transform_24, window_bounds = array<i64: 16, 16>}, {pipeline_mode = #tpu.pipeline_mode<synchronous>, transform_indices = @transform_25, window_bounds = array<i64: 1, 16>}, {pipeline_mode = #tpu.pipeline_mode<synchronous>, transform_indices = @transform_26, window_bounds = array<i64: 16, 4>}, {pipeline_mode = #tpu.pipeline_mode<synchronous>, transform_indices = @transform_27, window_bounds = array<i64: 1, 4>}, {pipeline_mode = #tpu.pipeline_mode<synchronous>, transform_indices = @transform_28, window_bounds = array<i64: 32, 32>}, {pipeline_mode = #tpu.pipeline_mode<synchronous>, transform_indices = @transform_29, window_bounds = array<i64: 1, 32>}, {pipeline_mode = #tpu.pipeline_mode<synchronous>, transform_indices = @transform_30, window_bounds = array<i64: 32, 32>}, {pipeline_mode = #tpu.pipeline_mode<synchronous>, transform_indices = @transform_31, window_bounds = array<i64: 1, 32>}, {pipeline_mode = #tpu.pipeline_mode<synchronous>, transform_indices = @transform_32, window_bounds = array<i64: 32, 32>}, {pipeline_mode = #tpu.pipeline_mode<synchronous>, transform_indices = @transform_33, window_bounds = array<i64: 1, 32>}, {pipeline_mode = #tpu.pipeline_mode<synchronous>, transform_indices = @transform_34, window_bounds = array<i64: 32, 32>}, {pipeline_mode = #tpu.pipeline_mode<synchronous>, transform_indices = @transform_35, window_bounds = array<i64: 1, 32>}, {pipeline_mode = #tpu.pipeline_mode<synchronous>, transform_indices = @transform_36, window_bounds = array<i64: 32, 16>}, {pipeline_mode = #tpu.pipeline_mode<synchronous>, transform_indices = @transform_37, window_bounds = array<i64: 1, 16>}, {pipeline_mode = #tpu.pipeline_mode<synchronous>, transform_indices = @transform_38, window_bounds = array<i64: 16, 16>}, {pipeline_mode = #tpu.pipeline_mode<synchronous>, transform_indices = @transform_39, window_bounds = array<i64: 1, 16>}, {pipeline_mode = #tpu.pipeline_mode<synchronous>, transform_indices = @transform_40, window_bounds = array<i64: 16, 16>}, {pipeline_mode = #tpu.pipeline_mode<synchronous>, transform_indices = @transform_41, window_bounds = array<i64: 1, 16>}, {pipeline_mode = #tpu.pipeline_mode<synchronous>, transform_indices = @transform_42, window_bounds = array<i64: 16, 2>}, {pipeline_mode = #tpu.pipeline_mode<synchronous>, transform_indices = @transform_43, window_bounds = array<i64: 1, 2>}, {pipeline_mode = #tpu.pipeline_mode<synchronous>, transform_indices = @transform_44, window_bounds = array<i64: 32, 32>}, {pipeline_mode = #tpu.pipeline_mode<synchronous>, transform_indices = @transform_45, window_bounds = array<i64: 1, 32>}, {pipeline_mode = #tpu.pipeline_mode<synchronous>, transform_indices = @transform_46, window_bounds = array<i64: 32, 32>}, {pipeline_mode = #tpu.pipeline_mode<synchronous>, transform_indices = @transform_47, window_bounds = array<i64: 1, 32>}, {pipeline_mode = #tpu.pipeline_mode<synchronous>, transform_indices = @transform_48, window_bounds = array<i64: 32, 32>}, {pipeline_mode = #tpu.pipeline_mode<synchronous>, transform_indices = @transform_49, window_bounds = array<i64: 1, 32>}, {pipeline_mode = #tpu.pipeline_mode<synchronous>, transform_indices = @transform_50, window_bounds = array<i64: 32, 32>}, {pipeline_mode = #tpu.pipeline_mode<synchronous>, transform_indices = @transform_51, window_bounds = array<i64: 1, 32>}, {pipeline_mode = #tpu.pipeline_mode<synchronous>, transform_indices = @transform_52, window_bounds = array<i64: 32, 1>}, {pipeline_mode = #tpu.pipeline_mode<synchronous>, transform_indices = @transform_53, window_bounds = array<i64: 1, 1>}, {transform_indices = @transform_54, window_bounds = array<i64: 2, 8, 128>}, {transform_indices = @transform_55, window_bounds = array<i64: 1, 8, 128>}]} {
    %c0 = arith.constant 0 : index
    %c0_0 = arith.constant 0 : index
    %c0_1 = arith.constant 0 : index
    %0 = vector.load %arg1[%c0, %c0_0, %c0_1] : memref<2x16x4xf32, #tpu.memory_space<vmem>>, vector<2x16x4xf32>
    %c0_2 = arith.constant 0 : index
    %c0_3 = arith.constant 0 : index
    %c0_4 = arith.constant 0 : index
    %1 = vector.load %arg2[%c0_2, %c0_3, %c0_4] : memref<2x16x3xf32, #tpu.memory_space<vmem>>, vector<2x16x3xf32>
    "tpu.trace_start"() <{level = 10 : i32, message = "bnp,bmp->bnm"}> : () -> ()
    %cst = arith.constant dense<0.000000e+00> : vector<2x16x16xf32>
    %2 = tpu.matmul %1, %1, %cst {dimension_numbers = #tpu.dot_dimension_numbers<[2], [2], [1], [1], [0, 0, 0, 1, 1, 1], [0], [0]>} : vector<2x16x3xf32>, vector<2x16x3xf32>, vector<2x16x16xf32> -> vector<2x16x16xf32>
    "tpu.trace_stop"() : () -> ()
    %3 = arith.mulf %1, %1 : vector<2x16x3xf32>
    %cst_5 = arith.constant dense<0.000000e+00> : vector<2x16xf32>
    %4 = vector.multi_reduction <add>, %3, %cst_5 [2] : vector<2x16x3xf32> to vector<2x16xf32>
    %5 = vector.shape_cast %4 : vector<2x16xf32> to vector<2x16x1xf32>
    %6 = vector.shape_cast %4 : vector<2x16xf32> to vector<2x1x16xf32>
    %7 = vector.broadcast %5 : vector<2x16x1xf32> to vector<2x16x16xf32>
    %8 = vector.broadcast %6 : vector<2x1x16xf32> to vector<2x16x16xf32>
    %9 = arith.addf %7, %8 : vector<2x16x16xf32>
    %cst_6 = arith.constant 2.000000e+00 : f32
    %10 = vector.broadcast %cst_6 : f32 to vector<2x16x16xf32>
    %11 = arith.mulf %10, %2 : vector<2x16x16xf32>
    %12 = arith.subf %9, %11 : vector<2x16x16xf32>
    %cst_7 = arith.constant 0.000000e+00 : f32
    %13 = vector.broadcast %cst_7 : f32 to vector<2x16x16xf32>
    %14 = arith.maximumf %12, %13 : vector<2x16x16xf32>
    %c0_8 = arith.constant 0 : index
    %c0_9 = arith.constant 0 : index
    %c0_10 = arith.constant 0 : index
    %15 = vector.load %arg3[%c0_8, %c0_9, %c0_10] : memref<2x16x16xbf16, #tpu.memory_space<vmem>>, vector<2x16x16xbf16>
    %16 = arith.extf %15 : vector<2x16x16xbf16> to vector<2x16x16xf32>
    %cst_11 = arith.constant -5.000000e-01 : f32
    %17 = vector.broadcast %cst_11 : f32 to vector<2x16x16xf32>
    %18 = arith.mulf %17, %14 : vector<2x16x16xf32>
    %19 = math.exp %18 : vector<2x16x16xf32>
    %20 = arith.mulf %16, %19 : vector<2x16x16xf32>
    %c0_12 = arith.constant 0 : index
    %c0_13 = arith.constant 0 : index
    %c0_14 = arith.constant 0 : index
    %21 = vector.load %arg4[%c0_12, %c0_13, %c0_14] : memref<2x16x1xbf16, #tpu.memory_space<vmem>>, vector<2x16x1xbf16>
    %22 = arith.extf %21 : vector<2x16x1xbf16> to vector<2x16x1xf32>
    %cst_15 = arith.constant dense<0.000000e+00> : vector<2x16xf32>
    %23 = vector.multi_reduction <add>, %20, %cst_15 [2] : vector<2x16x16xf32> to vector<2x16xf32>
    %24 = vector.shape_cast %23 : vector<2x16xf32> to vector<2x16x1xf32>
    %cst_16 = arith.constant 1.000000e+00 : f32
    %25 = vector.broadcast %cst_16 : f32 to vector<2x16x1xf32>
    %26 = arith.addf %24, %25 : vector<2x16x1xf32>
    %27 = math.rsqrt %26 : vector<2x16x1xf32>
    %28 = arith.truncf %20 : vector<2x16x16xf32> to vector<2x16x16xbf16>
    %29 = vector.broadcast %27 : vector<2x16x1xf32> to vector<2x16x4xf32>
    %30 = arith.mulf %29, %0 : vector<2x16x4xf32>
    %31 = arith.truncf %30 : vector<2x16x4xf32> to vector<2x16x4xbf16>
    "tpu.trace_start"() <{level = 10 : i32, message = "bnm,bmf->bnf"}> : () -> ()
    %cst_17 = arith.constant dense<0.000000e+00> : vector<2x16x4xf32>
    %32 = tpu.matmul %28, %31, %cst_17 {dimension_numbers = #tpu.dot_dimension_numbers<[2], [1], [1], [2], [0, 0, 0, 1, 1, 2], [0], [0]>} : vector<2x16x16xbf16>, vector<2x16x4xbf16>, vector<2x16x4xf32> -> vector<2x16x4xf32>
    "tpu.trace_stop"() : () -> ()
    %33 = arith.addf %32, %30 : vector<2x16x4xf32>
    %34 = vector.broadcast %27 : vector<2x16x1xf32> to vector<2x16x4xf32>
    %35 = arith.mulf %34, %33 : vector<2x16x4xf32>
    %36 = vector.shape_cast %35 : vector<2x16x4xf32> to vector<32x4xf32>
    %37 = arith.truncf %36 : vector<32x4xf32> to vector<32x4xbf16>
    %c0_18 = arith.constant 0 : index
    %c0_19 = arith.constant 0 : index
    %38 = vector.load %arg5[%c0_18, %c0_19] : memref<4x16xf32, #tpu.memory_space<vmem>>, vector<4x16xf32>
    %39 = arith.truncf %38 : vector<4x16xf32> to vector<4x16xbf16>
    %cst_20 = arith.constant dense<0.000000e+00> : vector<32x16xf32>
    %40 = tpu.matmul %37, %39, %cst_20 {dimension_numbers = #tpu.dot_dimension_numbers<[1], [0], [0], [1], [0, 0, 1, 1], [], []>} : vector<32x4xbf16>, vector<4x16xbf16>, vector<32x16xf32> -> vector<32x16xf32>
    %41 = vector.shape_cast %40 : vector<32x16xf32> to vector<2x16x16xf32>
    %c0_21 = arith.constant 0 : index
    %c0_22 = arith.constant 0 : index
    %42 = vector.load %arg6[%c0_21, %c0_22] : memref<1x16xf32, #tpu.memory_space<vmem>>, vector<1x16xf32>
    %43 = vector.shape_cast %42 : vector<1x16xf32> to vector<1x1x16xf32>
    %44 = vector.broadcast %43 : vector<1x1x16xf32> to vector<2x16x16xf32>
    %45 = arith.addf %41, %44 : vector<2x16x16xf32>
    %cst_23 = arith.constant 0.000000e+00 : f32
    %46 = vector.broadcast %cst_23 : f32 to vector<2x16x16xf32>
    %47 = arith.maximumf %45, %46 : vector<2x16x16xf32>
    %48 = vector.broadcast %27 : vector<2x16x1xf32> to vector<2x16x16xf32>
    %49 = arith.mulf %48, %47 : vector<2x16x16xf32>
    %50 = arith.truncf %49 : vector<2x16x16xf32> to vector<2x16x16xbf16>
    "tpu.trace_start"() <{level = 10 : i32, message = "bnm,bmf->bnf"}> : () -> ()
    %cst_24 = arith.constant dense<0.000000e+00> : vector<2x16x16xf32>
    %51 = tpu.matmul %28, %50, %cst_24 {dimension_numbers = #tpu.dot_dimension_numbers<[2], [1], [1], [2], [0, 0, 0, 1, 1, 2], [0], [0]>} : vector<2x16x16xbf16>, vector<2x16x16xbf16>, vector<2x16x16xf32> -> vector<2x16x16xf32>
    "tpu.trace_stop"() : () -> ()
    %52 = arith.addf %51, %49 : vector<2x16x16xf32>
    %53 = vector.broadcast %27 : vector<2x16x1xf32> to vector<2x16x16xf32>
    %54 = arith.mulf %53, %52 : vector<2x16x16xf32>
    %55 = vector.shape_cast %54 : vector<2x16x16xf32> to vector<32x16xf32>
    %56 = arith.truncf %55 : vector<32x16xf32> to vector<32x16xbf16>
    %c0_25 = arith.constant 0 : index
    %c0_26 = arith.constant 0 : index
    %57 = vector.load %arg7[%c0_25, %c0_26] : memref<16x16xf32, #tpu.memory_space<vmem>>, vector<16x16xf32>
    %58 = arith.truncf %57 : vector<16x16xf32> to vector<16x16xbf16>
    %cst_27 = arith.constant dense<0.000000e+00> : vector<32x16xf32>
    %59 = tpu.matmul %56, %58, %cst_27 {dimension_numbers = #tpu.dot_dimension_numbers<[1], [0], [0], [1], [0, 0, 1, 1], [], []>} : vector<32x16xbf16>, vector<16x16xbf16>, vector<32x16xf32> -> vector<32x16xf32>
    %60 = vector.shape_cast %59 : vector<32x16xf32> to vector<2x16x16xf32>
    %c0_28 = arith.constant 0 : index
    %c0_29 = arith.constant 0 : index
    %61 = vector.load %arg8[%c0_28, %c0_29] : memref<1x16xf32, #tpu.memory_space<vmem>>, vector<1x16xf32>
    %62 = vector.shape_cast %61 : vector<1x16xf32> to vector<1x1x16xf32>
    %63 = vector.broadcast %62 : vector<1x1x16xf32> to vector<2x16x16xf32>
    %64 = arith.addf %60, %63 : vector<2x16x16xf32>
    %cst_30 = arith.constant 0.000000e+00 : f32
    %65 = vector.broadcast %cst_30 : f32 to vector<2x16x16xf32>
    %66 = arith.maximumf %64, %65 : vector<2x16x16xf32>
    %67 = vector.broadcast %27 : vector<2x16x1xf32> to vector<2x16x16xf32>
    %68 = arith.mulf %67, %66 : vector<2x16x16xf32>
    %69 = arith.truncf %68 : vector<2x16x16xf32> to vector<2x16x16xbf16>
    "tpu.trace_start"() <{level = 10 : i32, message = "bnm,bmf->bnf"}> : () -> ()
    %cst_31 = arith.constant dense<0.000000e+00> : vector<2x16x16xf32>
    %70 = tpu.matmul %28, %69, %cst_31 {dimension_numbers = #tpu.dot_dimension_numbers<[2], [1], [1], [2], [0, 0, 0, 1, 1, 2], [0], [0]>} : vector<2x16x16xbf16>, vector<2x16x16xbf16>, vector<2x16x16xf32> -> vector<2x16x16xf32>
    "tpu.trace_stop"() : () -> ()
    %71 = arith.addf %70, %68 : vector<2x16x16xf32>
    %72 = vector.broadcast %27 : vector<2x16x1xf32> to vector<2x16x16xf32>
    %73 = arith.mulf %72, %71 : vector<2x16x16xf32>
    %74 = vector.shape_cast %73 : vector<2x16x16xf32> to vector<32x16xf32>
    %75 = arith.truncf %74 : vector<32x16xf32> to vector<32x16xbf16>
    %c0_32 = arith.constant 0 : index
    %c0_33 = arith.constant 0 : index
    %76 = vector.load %arg9[%c0_32, %c0_33] : memref<16x16xf32, #tpu.memory_space<vmem>>, vector<16x16xf32>
    %77 = arith.truncf %76 : vector<16x16xf32> to vector<16x16xbf16>
    %cst_34 = arith.constant dense<0.000000e+00> : vector<32x16xf32>
    %78 = tpu.matmul %75, %77, %cst_34 {dimension_numbers = #tpu.dot_dimension_numbers<[1], [0], [0], [1], [0, 0, 1, 1], [], []>} : vector<32x16xbf16>, vector<16x16xbf16>, vector<32x16xf32> -> vector<32x16xf32>
    %79 = vector.shape_cast %78 : vector<32x16xf32> to vector<2x16x16xf32>
    %c0_35 = arith.constant 0 : index
    %c0_36 = arith.constant 0 : index
    %80 = vector.load %arg10[%c0_35, %c0_36] : memref<1x16xf32, #tpu.memory_space<vmem>>, vector<1x16xf32>
    %81 = vector.shape_cast %80 : vector<1x16xf32> to vector<1x1x16xf32>
    %82 = vector.broadcast %81 : vector<1x1x16xf32> to vector<2x16x16xf32>
    %83 = arith.addf %79, %82 : vector<2x16x16xf32>
    %cst_37 = arith.constant 0.000000e+00 : f32
    %84 = vector.broadcast %cst_37 : f32 to vector<2x16x16xf32>
    %85 = arith.maximumf %83, %84 : vector<2x16x16xf32>
    %86 = vector.shape_cast %85 : vector<2x16x16xf32> to vector<32x16xf32>
    %87 = arith.truncf %86 : vector<32x16xf32> to vector<32x16xbf16>
    %c0_38 = arith.constant 0 : index
    %c0_39 = arith.constant 0 : index
    %88 = vector.load %arg11[%c0_38, %c0_39] : memref<16x8xf32, #tpu.memory_space<vmem>>, vector<16x8xf32>
    %89 = arith.truncf %88 : vector<16x8xf32> to vector<16x8xbf16>
    %cst_40 = arith.constant dense<0.000000e+00> : vector<32x8xf32>
    %90 = tpu.matmul %87, %89, %cst_40 {dimension_numbers = #tpu.dot_dimension_numbers<[1], [0], [0], [1], [0, 0, 1, 1], [], []>} : vector<32x16xbf16>, vector<16x8xbf16>, vector<32x8xf32> -> vector<32x8xf32>
    %91 = vector.shape_cast %90 : vector<32x8xf32> to vector<2x16x8xf32>
    %92 = vector.broadcast %27 : vector<2x16x1xf32> to vector<2x16x8xf32>
    %93 = arith.mulf %92, %91 : vector<2x16x8xf32>
    %94 = arith.truncf %93 : vector<2x16x8xf32> to vector<2x16x8xbf16>
    "tpu.trace_start"() <{level = 10 : i32, message = "bnm,bmf->bnf"}> : () -> ()
    %cst_41 = arith.constant dense<0.000000e+00> : vector<2x16x8xf32>
    %95 = tpu.matmul %28, %94, %cst_41 {dimension_numbers = #tpu.dot_dimension_numbers<[2], [1], [1], [2], [0, 0, 0, 1, 1, 2], [0], [0]>} : vector<2x16x16xbf16>, vector<2x16x8xbf16>, vector<2x16x8xf32> -> vector<2x16x8xf32>
    "tpu.trace_stop"() : () -> ()
    %96 = arith.addf %95, %93 : vector<2x16x8xf32>
    %97 = vector.broadcast %27 : vector<2x16x1xf32> to vector<2x16x8xf32>
    %98 = arith.mulf %97, %96 : vector<2x16x8xf32>
    %c0_42 = arith.constant 0 : index
    %c0_43 = arith.constant 0 : index
    %99 = vector.load %arg12[%c0_42, %c0_43] : memref<1x8xf32, #tpu.memory_space<vmem>>, vector<1x8xf32>
    %100 = vector.shape_cast %99 : vector<1x8xf32> to vector<1x1x8xf32>
    %101 = vector.broadcast %100 : vector<1x1x8xf32> to vector<2x16x8xf32>
    %102 = arith.addf %98, %101 : vector<2x16x8xf32>
    %103 = vector.broadcast %27 : vector<2x16x1xf32> to vector<2x16x4xf32>
    %104 = arith.mulf %103, %0 : vector<2x16x4xf32>
    %105 = arith.truncf %104 : vector<2x16x4xf32> to vector<2x16x4xbf16>
    "tpu.trace_start"() <{level = 10 : i32, message = "bnm,bmf->bnf"}> : () -> ()
    %cst_44 = arith.constant dense<0.000000e+00> : vector<2x16x4xf32>
    %106 = tpu.matmul %28, %105, %cst_44 {dimension_numbers = #tpu.dot_dimension_numbers<[2], [1], [1], [2], [0, 0, 0, 1, 1, 2], [0], [0]>} : vector<2x16x16xbf16>, vector<2x16x4xbf16>, vector<2x16x4xf32> -> vector<2x16x4xf32>
    "tpu.trace_stop"() : () -> ()
    %107 = arith.addf %106, %104 : vector<2x16x4xf32>
    %108 = vector.broadcast %27 : vector<2x16x1xf32> to vector<2x16x4xf32>
    %109 = arith.mulf %108, %107 : vector<2x16x4xf32>
    %110 = vector.shape_cast %109 : vector<2x16x4xf32> to vector<32x4xf32>
    %111 = arith.truncf %110 : vector<32x4xf32> to vector<32x4xbf16>
    %c0_45 = arith.constant 0 : index
    %c0_46 = arith.constant 0 : index
    %112 = vector.load %arg13[%c0_45, %c0_46] : memref<4x32xf32, #tpu.memory_space<vmem>>, vector<4x32xf32>
    %113 = arith.truncf %112 : vector<4x32xf32> to vector<4x32xbf16>
    %cst_47 = arith.constant dense<0.000000e+00> : vector<32x32xf32>
    %114 = tpu.matmul %111, %113, %cst_47 {dimension_numbers = #tpu.dot_dimension_numbers<[1], [0], [0], [1], [0, 0, 1, 1], [], []>} : vector<32x4xbf16>, vector<4x32xbf16>, vector<32x32xf32> -> vector<32x32xf32>
    %115 = vector.shape_cast %114 : vector<32x32xf32> to vector<2x16x32xf32>
    %c0_48 = arith.constant 0 : index
    %c0_49 = arith.constant 0 : index
    %116 = vector.load %arg14[%c0_48, %c0_49] : memref<1x32xf32, #tpu.memory_space<vmem>>, vector<1x32xf32>
    %117 = vector.shape_cast %116 : vector<1x32xf32> to vector<1x1x32xf32>
    %118 = vector.broadcast %117 : vector<1x1x32xf32> to vector<2x16x32xf32>
    %119 = arith.addf %115, %118 : vector<2x16x32xf32>
    %cst_50 = arith.constant 0.000000e+00 : f32
    %120 = vector.broadcast %cst_50 : f32 to vector<2x16x32xf32>
    %121 = arith.maximumf %119, %120 : vector<2x16x32xf32>
    %122 = vector.broadcast %27 : vector<2x16x1xf32> to vector<2x16x32xf32>
    %123 = arith.mulf %122, %121 : vector<2x16x32xf32>
    %124 = arith.truncf %123 : vector<2x16x32xf32> to vector<2x16x32xbf16>
    "tpu.trace_start"() <{level = 10 : i32, message = "bnm,bmf->bnf"}> : () -> ()
    %cst_51 = arith.constant dense<0.000000e+00> : vector<2x16x32xf32>
    %125 = tpu.matmul %28, %124, %cst_51 {dimension_numbers = #tpu.dot_dimension_numbers<[2], [1], [1], [2], [0, 0, 0, 1, 1, 2], [0], [0]>} : vector<2x16x16xbf16>, vector<2x16x32xbf16>, vector<2x16x32xf32> -> vector<2x16x32xf32>
    "tpu.trace_stop"() : () -> ()
    %126 = arith.addf %125, %123 : vector<2x16x32xf32>
    %127 = vector.broadcast %27 : vector<2x16x1xf32> to vector<2x16x32xf32>
    %128 = arith.mulf %127, %126 : vector<2x16x32xf32>
    %129 = vector.shape_cast %128 : vector<2x16x32xf32> to vector<32x32xf32>
    %130 = arith.truncf %129 : vector<32x32xf32> to vector<32x32xbf16>
    %c0_52 = arith.constant 0 : index
    %c0_53 = arith.constant 0 : index
    %131 = vector.load %arg15[%c0_52, %c0_53] : memref<32x32xf32, #tpu.memory_space<vmem>>, vector<32x32xf32>
    %132 = arith.truncf %131 : vector<32x32xf32> to vector<32x32xbf16>
    %cst_54 = arith.constant dense<0.000000e+00> : vector<32x32xf32>
    %133 = tpu.matmul %130, %132, %cst_54 {dimension_numbers = #tpu.dot_dimension_numbers<[1], [0], [0], [1], [0, 0, 1, 1], [], []>} : vector<32x32xbf16>, vector<32x32xbf16>, vector<32x32xf32> -> vector<32x32xf32>
    %134 = vector.shape_cast %133 : vector<32x32xf32> to vector<2x16x32xf32>
    %c0_55 = arith.constant 0 : index
    %c0_56 = arith.constant 0 : index
    %135 = vector.load %arg16[%c0_55, %c0_56] : memref<1x32xf32, #tpu.memory_space<vmem>>, vector<1x32xf32>
    %136 = vector.shape_cast %135 : vector<1x32xf32> to vector<1x1x32xf32>
    %137 = vector.broadcast %136 : vector<1x1x32xf32> to vector<2x16x32xf32>
    %138 = arith.addf %134, %137 : vector<2x16x32xf32>
    %cst_57 = arith.constant 0.000000e+00 : f32
    %139 = vector.broadcast %cst_57 : f32 to vector<2x16x32xf32>
    %140 = arith.maximumf %138, %139 : vector<2x16x32xf32>
    %141 = vector.broadcast %27 : vector<2x16x1xf32> to vector<2x16x32xf32>
    %142 = arith.mulf %141, %140 : vector<2x16x32xf32>
    %143 = arith.truncf %142 : vector<2x16x32xf32> to vector<2x16x32xbf16>
    "tpu.trace_start"() <{level = 10 : i32, message = "bnm,bmf->bnf"}> : () -> ()
    %cst_58 = arith.constant dense<0.000000e+00> : vector<2x16x32xf32>
    %144 = tpu.matmul %28, %143, %cst_58 {dimension_numbers = #tpu.dot_dimension_numbers<[2], [1], [1], [2], [0, 0, 0, 1, 1, 2], [0], [0]>} : vector<2x16x16xbf16>, vector<2x16x32xbf16>, vector<2x16x32xf32> -> vector<2x16x32xf32>
    "tpu.trace_stop"() : () -> ()
    %145 = arith.addf %144, %142 : vector<2x16x32xf32>
    %146 = vector.broadcast %27 : vector<2x16x1xf32> to vector<2x16x32xf32>
    %147 = arith.mulf %146, %145 : vector<2x16x32xf32>
    %148 = vector.shape_cast %147 : vector<2x16x32xf32> to vector<32x32xf32>
    %149 = arith.truncf %148 : vector<32x32xf32> to vector<32x32xbf16>
    %c0_59 = arith.constant 0 : index
    %c0_60 = arith.constant 0 : index
    %150 = vector.load %arg17[%c0_59, %c0_60] : memref<32x32xf32, #tpu.memory_space<vmem>>, vector<32x32xf32>
    %151 = arith.truncf %150 : vector<32x32xf32> to vector<32x32xbf16>
    %cst_61 = arith.constant dense<0.000000e+00> : vector<32x32xf32>
    %152 = tpu.matmul %149, %151, %cst_61 {dimension_numbers = #tpu.dot_dimension_numbers<[1], [0], [0], [1], [0, 0, 1, 1], [], []>} : vector<32x32xbf16>, vector<32x32xbf16>, vector<32x32xf32> -> vector<32x32xf32>
    %153 = vector.shape_cast %152 : vector<32x32xf32> to vector<2x16x32xf32>
    %c0_62 = arith.constant 0 : index
    %c0_63 = arith.constant 0 : index
    %154 = vector.load %arg18[%c0_62, %c0_63] : memref<1x32xf32, #tpu.memory_space<vmem>>, vector<1x32xf32>
    %155 = vector.shape_cast %154 : vector<1x32xf32> to vector<1x1x32xf32>
    %156 = vector.broadcast %155 : vector<1x1x32xf32> to vector<2x16x32xf32>
    %157 = arith.addf %153, %156 : vector<2x16x32xf32>
    %cst_64 = arith.constant 0.000000e+00 : f32
    %158 = vector.broadcast %cst_64 : f32 to vector<2x16x32xf32>
    %159 = arith.maximumf %157, %158 : vector<2x16x32xf32>
    %160 = vector.broadcast %27 : vector<2x16x1xf32> to vector<2x16x32xf32>
    %161 = arith.mulf %160, %159 : vector<2x16x32xf32>
    %162 = arith.truncf %161 : vector<2x16x32xf32> to vector<2x16x32xbf16>
    "tpu.trace_start"() <{level = 10 : i32, message = "bnm,bmf->bnf"}> : () -> ()
    %cst_65 = arith.constant dense<0.000000e+00> : vector<2x16x32xf32>
    %163 = tpu.matmul %28, %162, %cst_65 {dimension_numbers = #tpu.dot_dimension_numbers<[2], [1], [1], [2], [0, 0, 0, 1, 1, 2], [0], [0]>} : vector<2x16x16xbf16>, vector<2x16x32xbf16>, vector<2x16x32xf32> -> vector<2x16x32xf32>
    "tpu.trace_stop"() : () -> ()
    %164 = arith.addf %163, %161 : vector<2x16x32xf32>
    %165 = vector.broadcast %27 : vector<2x16x1xf32> to vector<2x16x32xf32>
    %166 = arith.mulf %165, %164 : vector<2x16x32xf32>
    %167 = vector.shape_cast %166 : vector<2x16x32xf32> to vector<32x32xf32>
    %168 = arith.truncf %167 : vector<32x32xf32> to vector<32x32xbf16>
    %c0_66 = arith.constant 0 : index
    %c0_67 = arith.constant 0 : index
    %169 = vector.load %arg19[%c0_66, %c0_67] : memref<32x32xf32, #tpu.memory_space<vmem>>, vector<32x32xf32>
    %170 = arith.truncf %169 : vector<32x32xf32> to vector<32x32xbf16>
    %cst_68 = arith.constant dense<0.000000e+00> : vector<32x32xf32>
    %171 = tpu.matmul %168, %170, %cst_68 {dimension_numbers = #tpu.dot_dimension_numbers<[1], [0], [0], [1], [0, 0, 1, 1], [], []>} : vector<32x32xbf16>, vector<32x32xbf16>, vector<32x32xf32> -> vector<32x32xf32>
    %172 = vector.shape_cast %171 : vector<32x32xf32> to vector<2x16x32xf32>
    %c0_69 = arith.constant 0 : index
    %c0_70 = arith.constant 0 : index
    %173 = vector.load %arg20[%c0_69, %c0_70] : memref<1x32xf32, #tpu.memory_space<vmem>>, vector<1x32xf32>
    %174 = vector.shape_cast %173 : vector<1x32xf32> to vector<1x1x32xf32>
    %175 = vector.broadcast %174 : vector<1x1x32xf32> to vector<2x16x32xf32>
    %176 = arith.addf %172, %175 : vector<2x16x32xf32>
    %cst_71 = arith.constant 0.000000e+00 : f32
    %177 = vector.broadcast %cst_71 : f32 to vector<2x16x32xf32>
    %178 = arith.maximumf %176, %177 : vector<2x16x32xf32>
    %cst_72 = arith.constant dense<0xFF800000> : vector<2x16xf32>
    %179 = vector.multi_reduction <maximumf>, %102, %cst_72 [2] : vector<2x16x8xf32> to vector<2x16xf32>
    %180 = vector.shape_cast %179 : vector<2x16xf32> to vector<2x16x1xf32>
    %181 = vector.broadcast %180 : vector<2x16x1xf32> to vector<2x16x8xf32>
    %182 = arith.subf %102, %181 : vector<2x16x8xf32>
    %183 = math.exp %182 : vector<2x16x8xf32>
    %cst_73 = arith.constant dense<0.000000e+00> : vector<2x16xf32>
    %184 = vector.multi_reduction <add>, %183, %cst_73 [2] : vector<2x16x8xf32> to vector<2x16xf32>
    %185 = vector.shape_cast %184 : vector<2x16xf32> to vector<2x16x1xf32>
    %186 = tpu.reciprocal %185 {approx = true} : vector<2x16x1xf32> -> vector<2x16x1xf32>
    %187 = vector.broadcast %186 : vector<2x16x1xf32> to vector<2x16x8xf32>
    %188 = arith.mulf %183, %187 : vector<2x16x8xf32>
    %189 = vector.broadcast %22 : vector<2x16x1xf32> to vector<2x16x8xf32>
    %190 = arith.mulf %188, %189 : vector<2x16x8xf32>
    %191 = vector.broadcast %22 : vector<2x16x1xf32> to vector<2x16x32xf32>
    %192 = arith.mulf %178, %191 : vector<2x16x32xf32>
    %193 = arith.truncf %190 : vector<2x16x8xf32> to vector<2x16x8xbf16>
    %194 = arith.truncf %192 : vector<2x16x32xf32> to vector<2x16x32xbf16>
    "tpu.trace_start"() <{level = 10 : i32, message = "bnc,bnf->bcf"}> : () -> ()
    %cst_74 = arith.constant dense<0.000000e+00> : vector<2x8x32xf32>
    %195 = tpu.matmul %193, %194, %cst_74 {dimension_numbers = #tpu.dot_dimension_numbers<[1], [1], [2], [2], [0, 0, 0, 2, 1, 2], [0], [0]>} : vector<2x16x8xbf16>, vector<2x16x32xbf16>, vector<2x8x32xf32> -> vector<2x8x32xf32>
    "tpu.trace_stop"() : () -> ()
    "tpu.trace_start"() <{level = 10 : i32, message = "bnc,bnm->bcm"}> : () -> ()
    %cst_75 = arith.constant dense<0.000000e+00> : vector<2x8x16xf32>
    %196 = tpu.matmul %193, %28, %cst_75 {dimension_numbers = #tpu.dot_dimension_numbers<[1], [1], [2], [2], [0, 0, 0, 2, 1, 2], [0], [0]>} : vector<2x16x8xbf16>, vector<2x16x16xbf16>, vector<2x8x16xf32> -> vector<2x8x16xf32>
    "tpu.trace_stop"() : () -> ()
    %197 = arith.truncf %196 : vector<2x8x16xf32> to vector<2x8x16xbf16>
    "tpu.trace_start"() <{level = 10 : i32, message = "bcm,bmd->bcd"}> : () -> ()
    %cst_76 = arith.constant dense<0.000000e+00> : vector<2x8x8xf32>
    %198 = tpu.matmul %197, %193, %cst_76 {dimension_numbers = #tpu.dot_dimension_numbers<[2], [1], [1], [2], [0, 0, 0, 1, 1, 2], [0], [0]>} : vector<2x8x16xbf16>, vector<2x16x8xbf16>, vector<2x8x8xf32> -> vector<2x8x8xf32>
    "tpu.trace_stop"() : () -> ()
    "tpu.trace_start"() <{level = 10 : i32, message = "bnc,bmc->bnm"}> : () -> ()
    %cst_77 = arith.constant dense<0.000000e+00> : vector<2x16x16xf32>
    %199 = tpu.matmul %193, %193, %cst_77 {dimension_numbers = #tpu.dot_dimension_numbers<[2], [2], [1], [1], [0, 0, 0, 1, 1, 1], [0], [0]>} : vector<2x16x8xbf16>, vector<2x16x8xbf16>, vector<2x16x16xf32> -> vector<2x16x16xf32>
    "tpu.trace_stop"() : () -> ()
    %200 = arith.subf %20, %199 : vector<2x16x16xf32>
    %201 = arith.mulf %200, %200 : vector<2x16x16xf32>
    %202 = vector.shape_cast %201 : vector<2x16x16xf32> to vector<1x2x16x16xf32>
    %cst_78 = arith.constant dense<0.000000e+00> : vector<1xf32>
    %203 = vector.multi_reduction <add>, %202, %cst_78 [1, 2, 3] : vector<1x2x16x16xf32> to vector<1xf32>
    %204 = vector.shape_cast %203 : vector<1xf32> to vector<1x1x1x1xf32>
    %205 = vector.extract %204[0, 0, 0, 0] : f32 from vector<1x1x1x1xf32>
    %206 = vector.broadcast %205 : f32 to vector<1x1xf32>
    %cst_79 = arith.constant 0.000000e+00 : f32
    %207 = vector.broadcast %cst_79 : f32 to vector<2x16x8xf32>
    %208 = arith.subf %207, %190 : vector<2x16x8xf32>
    %cst_80 = arith.constant 1.000000e-15 : f32
    %209 = vector.broadcast %cst_80 : f32 to vector<2x16x8xf32>
    %210 = arith.addf %190, %209 : vector<2x16x8xf32>
    %211 = math.log %210 : vector<2x16x8xf32>
    %212 = arith.mulf %208, %211 : vector<2x16x8xf32>
    %213 = vector.shape_cast %212 : vector<2x16x8xf32> to vector<1x2x16x8xf32>
    %cst_81 = arith.constant dense<0.000000e+00> : vector<1xf32>
    %214 = vector.multi_reduction <add>, %213, %cst_81 [1, 2, 3] : vector<1x2x16x8xf32> to vector<1xf32>
    %215 = vector.shape_cast %214 : vector<1xf32> to vector<1x1x1x1xf32>
    %216 = vector.extract %215[0, 0, 0, 0] : f32 from vector<1x1x1x1xf32>
    %217 = vector.broadcast %216 : f32 to vector<1x1xf32>
    %cst_82 = arith.constant dense<0.000000e+00> : vector<2x8xf32>
    %218 = vector.multi_reduction <add>, %198, %cst_82 [2] : vector<2x8x8xf32> to vector<2x8xf32>
    %219 = vector.shape_cast %218 : vector<2x8xf32> to vector<2x8x1xf32>
    %cst_83 = arith.constant 1.000000e+00 : f32
    %220 = vector.broadcast %cst_83 : f32 to vector<2x8x1xf32>
    %221 = arith.addf %219, %220 : vector<2x8x1xf32>
    %222 = math.rsqrt %221 : vector<2x8x1xf32>
    %223 = arith.truncf %198 : vector<2x8x8xf32> to vector<2x8x8xbf16>
    %224 = vector.shape_cast %195 : vector<2x8x32xf32> to vector<16x32xf32>
    %225 = arith.truncf %224 : vector<16x32xf32> to vector<16x32xbf16>
    %c0_84 = arith.constant 0 : index
    %c0_85 = arith.constant 0 : index
    %226 = vector.load %arg21[%c0_84, %c0_85] : memref<32x16xf32, #tpu.memory_space<vmem>>, vector<32x16xf32>
    %227 = arith.truncf %226 : vector<32x16xf32> to vector<32x16xbf16>
    %cst_86 = arith.constant dense<0.000000e+00> : vector<16x16xf32>
    %228 = tpu.matmul %225, %227, %cst_86 {dimension_numbers = #tpu.dot_dimension_numbers<[1], [0], [0], [1], [0, 0, 1, 1], [], []>} : vector<16x32xbf16>, vector<32x16xbf16>, vector<16x16xf32> -> vector<16x16xf32>
    %229 = vector.shape_cast %228 : vector<16x16xf32> to vector<2x8x16xf32>
    %230 = vector.broadcast %222 : vector<2x8x1xf32> to vector<2x8x16xf32>
    %231 = arith.mulf %230, %229 : vector<2x8x16xf32>
    %232 = arith.truncf %231 : vector<2x8x16xf32> to vector<2x8x16xbf16>
    "tpu.trace_start"() <{level = 10 : i32, message = "bnm,bmf->bnf"}> : () -> ()
    %cst_87 = arith.constant dense<0.000000e+00> : vector<2x8x16xf32>
    %233 = tpu.matmul %223, %232, %cst_87 {dimension_numbers = #tpu.dot_dimension_numbers<[2], [1], [1], [2], [0, 0, 0, 1, 1, 2], [0], [0]>} : vector<2x8x8xbf16>, vector<2x8x16xbf16>, vector<2x8x16xf32> -> vector<2x8x16xf32>
    "tpu.trace_stop"() : () -> ()
    %234 = arith.addf %233, %231 : vector<2x8x16xf32>
    %235 = vector.broadcast %222 : vector<2x8x1xf32> to vector<2x8x16xf32>
    %236 = arith.mulf %235, %234 : vector<2x8x16xf32>
    %c0_88 = arith.constant 0 : index
    %c0_89 = arith.constant 0 : index
    %237 = vector.load %arg22[%c0_88, %c0_89] : memref<1x16xf32, #tpu.memory_space<vmem>>, vector<1x16xf32>
    %238 = vector.shape_cast %237 : vector<1x16xf32> to vector<1x1x16xf32>
    %239 = vector.broadcast %238 : vector<1x1x16xf32> to vector<2x8x16xf32>
    %240 = arith.addf %236, %239 : vector<2x8x16xf32>
    %cst_90 = arith.constant 0.000000e+00 : f32
    %241 = vector.broadcast %cst_90 : f32 to vector<2x8x16xf32>
    %242 = arith.maximumf %240, %241 : vector<2x8x16xf32>
    %243 = vector.broadcast %222 : vector<2x8x1xf32> to vector<2x8x16xf32>
    %244 = arith.mulf %243, %242 : vector<2x8x16xf32>
    %245 = arith.truncf %244 : vector<2x8x16xf32> to vector<2x8x16xbf16>
    "tpu.trace_start"() <{level = 10 : i32, message = "bnm,bmf->bnf"}> : () -> ()
    %cst_91 = arith.constant dense<0.000000e+00> : vector<2x8x16xf32>
    %246 = tpu.matmul %223, %245, %cst_91 {dimension_numbers = #tpu.dot_dimension_numbers<[2], [1], [1], [2], [0, 0, 0, 1, 1, 2], [0], [0]>} : vector<2x8x8xbf16>, vector<2x8x16xbf16>, vector<2x8x16xf32> -> vector<2x8x16xf32>
    "tpu.trace_stop"() : () -> ()
    %247 = arith.addf %246, %244 : vector<2x8x16xf32>
    %248 = vector.broadcast %222 : vector<2x8x1xf32> to vector<2x8x16xf32>
    %249 = arith.mulf %248, %247 : vector<2x8x16xf32>
    %250 = vector.shape_cast %249 : vector<2x8x16xf32> to vector<16x16xf32>
    %251 = arith.truncf %250 : vector<16x16xf32> to vector<16x16xbf16>
    %c0_92 = arith.constant 0 : index
    %c0_93 = arith.constant 0 : index
    %252 = vector.load %arg23[%c0_92, %c0_93] : memref<16x16xf32, #tpu.memory_space<vmem>>, vector<16x16xf32>
    %253 = arith.truncf %252 : vector<16x16xf32> to vector<16x16xbf16>
    %cst_94 = arith.constant dense<0.000000e+00> : vector<16x16xf32>
    %254 = tpu.matmul %251, %253, %cst_94 {dimension_numbers = #tpu.dot_dimension_numbers<[1], [0], [0], [1], [0, 0, 1, 1], [], []>} : vector<16x16xbf16>, vector<16x16xbf16>, vector<16x16xf32> -> vector<16x16xf32>
    %255 = vector.shape_cast %254 : vector<16x16xf32> to vector<2x8x16xf32>
    %c0_95 = arith.constant 0 : index
    %c0_96 = arith.constant 0 : index
    %256 = vector.load %arg24[%c0_95, %c0_96] : memref<1x16xf32, #tpu.memory_space<vmem>>, vector<1x16xf32>
    %257 = vector.shape_cast %256 : vector<1x16xf32> to vector<1x1x16xf32>
    %258 = vector.broadcast %257 : vector<1x1x16xf32> to vector<2x8x16xf32>
    %259 = arith.addf %255, %258 : vector<2x8x16xf32>
    %cst_97 = arith.constant 0.000000e+00 : f32
    %260 = vector.broadcast %cst_97 : f32 to vector<2x8x16xf32>
    %261 = arith.maximumf %259, %260 : vector<2x8x16xf32>
    %262 = vector.broadcast %222 : vector<2x8x1xf32> to vector<2x8x16xf32>
    %263 = arith.mulf %262, %261 : vector<2x8x16xf32>
    %264 = arith.truncf %263 : vector<2x8x16xf32> to vector<2x8x16xbf16>
    "tpu.trace_start"() <{level = 10 : i32, message = "bnm,bmf->bnf"}> : () -> ()
    %cst_98 = arith.constant dense<0.000000e+00> : vector<2x8x16xf32>
    %265 = tpu.matmul %223, %264, %cst_98 {dimension_numbers = #tpu.dot_dimension_numbers<[2], [1], [1], [2], [0, 0, 0, 1, 1, 2], [0], [0]>} : vector<2x8x8xbf16>, vector<2x8x16xbf16>, vector<2x8x16xf32> -> vector<2x8x16xf32>
    "tpu.trace_stop"() : () -> ()
    %266 = arith.addf %265, %263 : vector<2x8x16xf32>
    %267 = vector.broadcast %222 : vector<2x8x1xf32> to vector<2x8x16xf32>
    %268 = arith.mulf %267, %266 : vector<2x8x16xf32>
    %269 = vector.shape_cast %268 : vector<2x8x16xf32> to vector<16x16xf32>
    %270 = arith.truncf %269 : vector<16x16xf32> to vector<16x16xbf16>
    %c0_99 = arith.constant 0 : index
    %c0_100 = arith.constant 0 : index
    %271 = vector.load %arg25[%c0_99, %c0_100] : memref<16x16xf32, #tpu.memory_space<vmem>>, vector<16x16xf32>
    %272 = arith.truncf %271 : vector<16x16xf32> to vector<16x16xbf16>
    %cst_101 = arith.constant dense<0.000000e+00> : vector<16x16xf32>
    %273 = tpu.matmul %270, %272, %cst_101 {dimension_numbers = #tpu.dot_dimension_numbers<[1], [0], [0], [1], [0, 0, 1, 1], [], []>} : vector<16x16xbf16>, vector<16x16xbf16>, vector<16x16xf32> -> vector<16x16xf32>
    %274 = vector.shape_cast %273 : vector<16x16xf32> to vector<2x8x16xf32>
    %c0_102 = arith.constant 0 : index
    %c0_103 = arith.constant 0 : index
    %275 = vector.load %arg26[%c0_102, %c0_103] : memref<1x16xf32, #tpu.memory_space<vmem>>, vector<1x16xf32>
    %276 = vector.shape_cast %275 : vector<1x16xf32> to vector<1x1x16xf32>
    %277 = vector.broadcast %276 : vector<1x1x16xf32> to vector<2x8x16xf32>
    %278 = arith.addf %274, %277 : vector<2x8x16xf32>
    %cst_104 = arith.constant 0.000000e+00 : f32
    %279 = vector.broadcast %cst_104 : f32 to vector<2x8x16xf32>
    %280 = arith.maximumf %278, %279 : vector<2x8x16xf32>
    %281 = vector.shape_cast %280 : vector<2x8x16xf32> to vector<16x16xf32>
    %282 = arith.truncf %281 : vector<16x16xf32> to vector<16x16xbf16>
    %c0_105 = arith.constant 0 : index
    %c0_106 = arith.constant 0 : index
    %283 = vector.load %arg27[%c0_105, %c0_106] : memref<16x4xf32, #tpu.memory_space<vmem>>, vector<16x4xf32>
    %284 = arith.truncf %283 : vector<16x4xf32> to vector<16x4xbf16>
    %cst_107 = arith.constant dense<0.000000e+00> : vector<16x4xf32>
    %285 = tpu.matmul %282, %284, %cst_107 {dimension_numbers = #tpu.dot_dimension_numbers<[1], [0], [0], [1], [0, 0, 1, 1], [], []>} : vector<16x16xbf16>, vector<16x4xbf16>, vector<16x4xf32> -> vector<16x4xf32>
    %286 = vector.shape_cast %285 : vector<16x4xf32> to vector<2x8x4xf32>
    %287 = vector.broadcast %222 : vector<2x8x1xf32> to vector<2x8x4xf32>
    %288 = arith.mulf %287, %286 : vector<2x8x4xf32>
    %289 = arith.truncf %288 : vector<2x8x4xf32> to vector<2x8x4xbf16>
    "tpu.trace_start"() <{level = 10 : i32, message = "bnm,bmf->bnf"}> : () -> ()
    %cst_108 = arith.constant dense<0.000000e+00> : vector<2x8x4xf32>
    %290 = tpu.matmul %223, %289, %cst_108 {dimension_numbers = #tpu.dot_dimension_numbers<[2], [1], [1], [2], [0, 0, 0, 1, 1, 2], [0], [0]>} : vector<2x8x8xbf16>, vector<2x8x4xbf16>, vector<2x8x4xf32> -> vector<2x8x4xf32>
    "tpu.trace_stop"() : () -> ()
    %291 = arith.addf %290, %288 : vector<2x8x4xf32>
    %292 = vector.broadcast %222 : vector<2x8x1xf32> to vector<2x8x4xf32>
    %293 = arith.mulf %292, %291 : vector<2x8x4xf32>
    %c0_109 = arith.constant 0 : index
    %c0_110 = arith.constant 0 : index
    %294 = vector.load %arg28[%c0_109, %c0_110] : memref<1x4xf32, #tpu.memory_space<vmem>>, vector<1x4xf32>
    %295 = vector.shape_cast %294 : vector<1x4xf32> to vector<1x1x4xf32>
    %296 = vector.broadcast %295 : vector<1x1x4xf32> to vector<2x8x4xf32>
    %297 = arith.addf %293, %296 : vector<2x8x4xf32>
    %298 = vector.broadcast %222 : vector<2x8x1xf32> to vector<2x8x32xf32>
    %299 = arith.mulf %298, %195 : vector<2x8x32xf32>
    %300 = arith.truncf %299 : vector<2x8x32xf32> to vector<2x8x32xbf16>
    "tpu.trace_start"() <{level = 10 : i32, message = "bnm,bmf->bnf"}> : () -> ()
    %cst_111 = arith.constant dense<0.000000e+00> : vector<2x8x32xf32>
    %301 = tpu.matmul %223, %300, %cst_111 {dimension_numbers = #tpu.dot_dimension_numbers<[2], [1], [1], [2], [0, 0, 0, 1, 1, 2], [0], [0]>} : vector<2x8x8xbf16>, vector<2x8x32xbf16>, vector<2x8x32xf32> -> vector<2x8x32xf32>
    "tpu.trace_stop"() : () -> ()
    %302 = arith.addf %301, %299 : vector<2x8x32xf32>
    %303 = vector.broadcast %222 : vector<2x8x1xf32> to vector<2x8x32xf32>
    %304 = arith.mulf %303, %302 : vector<2x8x32xf32>
    %305 = vector.shape_cast %304 : vector<2x8x32xf32> to vector<16x32xf32>
    %306 = arith.truncf %305 : vector<16x32xf32> to vector<16x32xbf16>
    %c0_112 = arith.constant 0 : index
    %c0_113 = arith.constant 0 : index
    %307 = vector.load %arg29[%c0_112, %c0_113] : memref<32x32xf32, #tpu.memory_space<vmem>>, vector<32x32xf32>
    %308 = arith.truncf %307 : vector<32x32xf32> to vector<32x32xbf16>
    %cst_114 = arith.constant dense<0.000000e+00> : vector<16x32xf32>
    %309 = tpu.matmul %306, %308, %cst_114 {dimension_numbers = #tpu.dot_dimension_numbers<[1], [0], [0], [1], [0, 0, 1, 1], [], []>} : vector<16x32xbf16>, vector<32x32xbf16>, vector<16x32xf32> -> vector<16x32xf32>
    %310 = vector.shape_cast %309 : vector<16x32xf32> to vector<2x8x32xf32>
    %c0_115 = arith.constant 0 : index
    %c0_116 = arith.constant 0 : index
    %311 = vector.load %arg30[%c0_115, %c0_116] : memref<1x32xf32, #tpu.memory_space<vmem>>, vector<1x32xf32>
    %312 = vector.shape_cast %311 : vector<1x32xf32> to vector<1x1x32xf32>
    %313 = vector.broadcast %312 : vector<1x1x32xf32> to vector<2x8x32xf32>
    %314 = arith.addf %310, %313 : vector<2x8x32xf32>
    %cst_117 = arith.constant 0.000000e+00 : f32
    %315 = vector.broadcast %cst_117 : f32 to vector<2x8x32xf32>
    %316 = arith.maximumf %314, %315 : vector<2x8x32xf32>
    %317 = vector.broadcast %222 : vector<2x8x1xf32> to vector<2x8x32xf32>
    %318 = arith.mulf %317, %316 : vector<2x8x32xf32>
    %319 = arith.truncf %318 : vector<2x8x32xf32> to vector<2x8x32xbf16>
    "tpu.trace_start"() <{level = 10 : i32, message = "bnm,bmf->bnf"}> : () -> ()
    %cst_118 = arith.constant dense<0.000000e+00> : vector<2x8x32xf32>
    %320 = tpu.matmul %223, %319, %cst_118 {dimension_numbers = #tpu.dot_dimension_numbers<[2], [1], [1], [2], [0, 0, 0, 1, 1, 2], [0], [0]>} : vector<2x8x8xbf16>, vector<2x8x32xbf16>, vector<2x8x32xf32> -> vector<2x8x32xf32>
    "tpu.trace_stop"() : () -> ()
    %321 = arith.addf %320, %318 : vector<2x8x32xf32>
    %322 = vector.broadcast %222 : vector<2x8x1xf32> to vector<2x8x32xf32>
    %323 = arith.mulf %322, %321 : vector<2x8x32xf32>
    %324 = vector.shape_cast %323 : vector<2x8x32xf32> to vector<16x32xf32>
    %325 = arith.truncf %324 : vector<16x32xf32> to vector<16x32xbf16>
    %c0_119 = arith.constant 0 : index
    %c0_120 = arith.constant 0 : index
    %326 = vector.load %arg31[%c0_119, %c0_120] : memref<32x32xf32, #tpu.memory_space<vmem>>, vector<32x32xf32>
    %327 = arith.truncf %326 : vector<32x32xf32> to vector<32x32xbf16>
    %cst_121 = arith.constant dense<0.000000e+00> : vector<16x32xf32>
    %328 = tpu.matmul %325, %327, %cst_121 {dimension_numbers = #tpu.dot_dimension_numbers<[1], [0], [0], [1], [0, 0, 1, 1], [], []>} : vector<16x32xbf16>, vector<32x32xbf16>, vector<16x32xf32> -> vector<16x32xf32>
    %329 = vector.shape_cast %328 : vector<16x32xf32> to vector<2x8x32xf32>
    %c0_122 = arith.constant 0 : index
    %c0_123 = arith.constant 0 : index
    %330 = vector.load %arg32[%c0_122, %c0_123] : memref<1x32xf32, #tpu.memory_space<vmem>>, vector<1x32xf32>
    %331 = vector.shape_cast %330 : vector<1x32xf32> to vector<1x1x32xf32>
    %332 = vector.broadcast %331 : vector<1x1x32xf32> to vector<2x8x32xf32>
    %333 = arith.addf %329, %332 : vector<2x8x32xf32>
    %cst_124 = arith.constant 0.000000e+00 : f32
    %334 = vector.broadcast %cst_124 : f32 to vector<2x8x32xf32>
    %335 = arith.maximumf %333, %334 : vector<2x8x32xf32>
    %336 = vector.broadcast %222 : vector<2x8x1xf32> to vector<2x8x32xf32>
    %337 = arith.mulf %336, %335 : vector<2x8x32xf32>
    %338 = arith.truncf %337 : vector<2x8x32xf32> to vector<2x8x32xbf16>
    "tpu.trace_start"() <{level = 10 : i32, message = "bnm,bmf->bnf"}> : () -> ()
    %cst_125 = arith.constant dense<0.000000e+00> : vector<2x8x32xf32>
    %339 = tpu.matmul %223, %338, %cst_125 {dimension_numbers = #tpu.dot_dimension_numbers<[2], [1], [1], [2], [0, 0, 0, 1, 1, 2], [0], [0]>} : vector<2x8x8xbf16>, vector<2x8x32xbf16>, vector<2x8x32xf32> -> vector<2x8x32xf32>
    "tpu.trace_stop"() : () -> ()
    %340 = arith.addf %339, %337 : vector<2x8x32xf32>
    %341 = vector.broadcast %222 : vector<2x8x1xf32> to vector<2x8x32xf32>
    %342 = arith.mulf %341, %340 : vector<2x8x32xf32>
    %343 = vector.shape_cast %342 : vector<2x8x32xf32> to vector<16x32xf32>
    %344 = arith.truncf %343 : vector<16x32xf32> to vector<16x32xbf16>
    %c0_126 = arith.constant 0 : index
    %c0_127 = arith.constant 0 : index
    %345 = vector.load %arg33[%c0_126, %c0_127] : memref<32x32xf32, #tpu.memory_space<vmem>>, vector<32x32xf32>
    %346 = arith.truncf %345 : vector<32x32xf32> to vector<32x32xbf16>
    %cst_128 = arith.constant dense<0.000000e+00> : vector<16x32xf32>
    %347 = tpu.matmul %344, %346, %cst_128 {dimension_numbers = #tpu.dot_dimension_numbers<[1], [0], [0], [1], [0, 0, 1, 1], [], []>} : vector<16x32xbf16>, vector<32x32xbf16>, vector<16x32xf32> -> vector<16x32xf32>
    %348 = vector.shape_cast %347 : vector<16x32xf32> to vector<2x8x32xf32>
    %c0_129 = arith.constant 0 : index
    %c0_130 = arith.constant 0 : index
    %349 = vector.load %arg34[%c0_129, %c0_130] : memref<1x32xf32, #tpu.memory_space<vmem>>, vector<1x32xf32>
    %350 = vector.shape_cast %349 : vector<1x32xf32> to vector<1x1x32xf32>
    %351 = vector.broadcast %350 : vector<1x1x32xf32> to vector<2x8x32xf32>
    %352 = arith.addf %348, %351 : vector<2x8x32xf32>
    %cst_131 = arith.constant 0.000000e+00 : f32
    %353 = vector.broadcast %cst_131 : f32 to vector<2x8x32xf32>
    %354 = arith.maximumf %352, %353 : vector<2x8x32xf32>
    %355 = vector.broadcast %222 : vector<2x8x1xf32> to vector<2x8x32xf32>
    %356 = arith.mulf %355, %354 : vector<2x8x32xf32>
    %357 = arith.truncf %356 : vector<2x8x32xf32> to vector<2x8x32xbf16>
    "tpu.trace_start"() <{level = 10 : i32, message = "bnm,bmf->bnf"}> : () -> ()
    %cst_132 = arith.constant dense<0.000000e+00> : vector<2x8x32xf32>
    %358 = tpu.matmul %223, %357, %cst_132 {dimension_numbers = #tpu.dot_dimension_numbers<[2], [1], [1], [2], [0, 0, 0, 1, 1, 2], [0], [0]>} : vector<2x8x8xbf16>, vector<2x8x32xbf16>, vector<2x8x32xf32> -> vector<2x8x32xf32>
    "tpu.trace_stop"() : () -> ()
    %359 = arith.addf %358, %356 : vector<2x8x32xf32>
    %360 = vector.broadcast %222 : vector<2x8x1xf32> to vector<2x8x32xf32>
    %361 = arith.mulf %360, %359 : vector<2x8x32xf32>
    %362 = vector.shape_cast %361 : vector<2x8x32xf32> to vector<16x32xf32>
    %363 = arith.truncf %362 : vector<16x32xf32> to vector<16x32xbf16>
    %c0_133 = arith.constant 0 : index
    %c0_134 = arith.constant 0 : index
    %364 = vector.load %arg35[%c0_133, %c0_134] : memref<32x32xf32, #tpu.memory_space<vmem>>, vector<32x32xf32>
    %365 = arith.truncf %364 : vector<32x32xf32> to vector<32x32xbf16>
    %cst_135 = arith.constant dense<0.000000e+00> : vector<16x32xf32>
    %366 = tpu.matmul %363, %365, %cst_135 {dimension_numbers = #tpu.dot_dimension_numbers<[1], [0], [0], [1], [0, 0, 1, 1], [], []>} : vector<16x32xbf16>, vector<32x32xbf16>, vector<16x32xf32> -> vector<16x32xf32>
    %367 = vector.shape_cast %366 : vector<16x32xf32> to vector<2x8x32xf32>
    %c0_136 = arith.constant 0 : index
    %c0_137 = arith.constant 0 : index
    %368 = vector.load %arg36[%c0_136, %c0_137] : memref<1x32xf32, #tpu.memory_space<vmem>>, vector<1x32xf32>
    %369 = vector.shape_cast %368 : vector<1x32xf32> to vector<1x1x32xf32>
    %370 = vector.broadcast %369 : vector<1x1x32xf32> to vector<2x8x32xf32>
    %371 = arith.addf %367, %370 : vector<2x8x32xf32>
    %cst_138 = arith.constant 0.000000e+00 : f32
    %372 = vector.broadcast %cst_138 : f32 to vector<2x8x32xf32>
    %373 = arith.maximumf %371, %372 : vector<2x8x32xf32>
    %cst_139 = arith.constant dense<0xFF800000> : vector<2x8xf32>
    %374 = vector.multi_reduction <maximumf>, %297, %cst_139 [2] : vector<2x8x4xf32> to vector<2x8xf32>
    %375 = vector.shape_cast %374 : vector<2x8xf32> to vector<2x8x1xf32>
    %376 = vector.broadcast %375 : vector<2x8x1xf32> to vector<2x8x4xf32>
    %377 = arith.subf %297, %376 : vector<2x8x4xf32>
    %378 = math.exp %377 : vector<2x8x4xf32>
    %cst_140 = arith.constant dense<0.000000e+00> : vector<2x8xf32>
    %379 = vector.multi_reduction <add>, %378, %cst_140 [2] : vector<2x8x4xf32> to vector<2x8xf32>
    %380 = vector.shape_cast %379 : vector<2x8xf32> to vector<2x8x1xf32>
    %381 = tpu.reciprocal %380 {approx = true} : vector<2x8x1xf32> -> vector<2x8x1xf32>
    %382 = vector.broadcast %381 : vector<2x8x1xf32> to vector<2x8x4xf32>
    %383 = arith.mulf %378, %382 : vector<2x8x4xf32>
    %384 = arith.truncf %383 : vector<2x8x4xf32> to vector<2x8x4xbf16>
    %385 = arith.truncf %373 : vector<2x8x32xf32> to vector<2x8x32xbf16>
    "tpu.trace_start"() <{level = 10 : i32, message = "bnc,bnf->bcf"}> : () -> ()
    %cst_141 = arith.constant dense<0.000000e+00> : vector<2x4x32xf32>
    %386 = tpu.matmul %384, %385, %cst_141 {dimension_numbers = #tpu.dot_dimension_numbers<[1], [1], [2], [2], [0, 0, 0, 2, 1, 2], [0], [0]>} : vector<2x8x4xbf16>, vector<2x8x32xbf16>, vector<2x4x32xf32> -> vector<2x4x32xf32>
    "tpu.trace_stop"() : () -> ()
    "tpu.trace_start"() <{level = 10 : i32, message = "bnc,bnm->bcm"}> : () -> ()
    %cst_142 = arith.constant dense<0.000000e+00> : vector<2x4x8xf32>
    %387 = tpu.matmul %384, %223, %cst_142 {dimension_numbers = #tpu.dot_dimension_numbers<[1], [1], [2], [2], [0, 0, 0, 2, 1, 2], [0], [0]>} : vector<2x8x4xbf16>, vector<2x8x8xbf16>, vector<2x4x8xf32> -> vector<2x4x8xf32>
    "tpu.trace_stop"() : () -> ()
    %388 = arith.truncf %387 : vector<2x4x8xf32> to vector<2x4x8xbf16>
    "tpu.trace_start"() <{level = 10 : i32, message = "bcm,bmd->bcd"}> : () -> ()
    %cst_143 = arith.constant dense<0.000000e+00> : vector<2x4x4xf32>
    %389 = tpu.matmul %388, %384, %cst_143 {dimension_numbers = #tpu.dot_dimension_numbers<[2], [1], [1], [2], [0, 0, 0, 1, 1, 2], [0], [0]>} : vector<2x4x8xbf16>, vector<2x8x4xbf16>, vector<2x4x4xf32> -> vector<2x4x4xf32>
    "tpu.trace_stop"() : () -> ()
    "tpu.trace_start"() <{level = 10 : i32, message = "bnc,bmc->bnm"}> : () -> ()
    %cst_144 = arith.constant dense<0.000000e+00> : vector<2x8x8xf32>
    %390 = tpu.matmul %384, %384, %cst_144 {dimension_numbers = #tpu.dot_dimension_numbers<[2], [2], [1], [1], [0, 0, 0, 1, 1, 1], [0], [0]>} : vector<2x8x4xbf16>, vector<2x8x4xbf16>, vector<2x8x8xf32> -> vector<2x8x8xf32>
    "tpu.trace_stop"() : () -> ()
    %391 = arith.subf %198, %390 : vector<2x8x8xf32>
    %392 = arith.mulf %391, %391 : vector<2x8x8xf32>
    %393 = vector.shape_cast %392 : vector<2x8x8xf32> to vector<1x2x8x8xf32>
    %cst_145 = arith.constant dense<0.000000e+00> : vector<1xf32>
    %394 = vector.multi_reduction <add>, %393, %cst_145 [1, 2, 3] : vector<1x2x8x8xf32> to vector<1xf32>
    %395 = vector.shape_cast %394 : vector<1xf32> to vector<1x1x1x1xf32>
    %396 = vector.extract %395[0, 0, 0, 0] : f32 from vector<1x1x1x1xf32>
    %397 = vector.broadcast %396 : f32 to vector<1x1xf32>
    %cst_146 = arith.constant 0.000000e+00 : f32
    %398 = vector.broadcast %cst_146 : f32 to vector<2x8x4xf32>
    %399 = arith.subf %398, %383 : vector<2x8x4xf32>
    %cst_147 = arith.constant 1.000000e-15 : f32
    %400 = vector.broadcast %cst_147 : f32 to vector<2x8x4xf32>
    %401 = arith.addf %383, %400 : vector<2x8x4xf32>
    %402 = math.log %401 : vector<2x8x4xf32>
    %403 = arith.mulf %399, %402 : vector<2x8x4xf32>
    %404 = vector.shape_cast %403 : vector<2x8x4xf32> to vector<1x2x8x4xf32>
    %cst_148 = arith.constant dense<0.000000e+00> : vector<1xf32>
    %405 = vector.multi_reduction <add>, %404, %cst_148 [1, 2, 3] : vector<1x2x8x4xf32> to vector<1xf32>
    %406 = vector.shape_cast %405 : vector<1xf32> to vector<1x1x1x1xf32>
    %407 = vector.extract %406[0, 0, 0, 0] : f32 from vector<1x1x1x1xf32>
    %408 = vector.broadcast %407 : f32 to vector<1x1xf32>
    %cst_149 = arith.constant dense<0.000000e+00> : vector<2x4xf32>
    %409 = vector.multi_reduction <add>, %389, %cst_149 [2] : vector<2x4x4xf32> to vector<2x4xf32>
    %410 = vector.shape_cast %409 : vector<2x4xf32> to vector<2x4x1xf32>
    %cst_150 = arith.constant 1.000000e+00 : f32
    %411 = vector.broadcast %cst_150 : f32 to vector<2x4x1xf32>
    %412 = arith.addf %410, %411 : vector<2x4x1xf32>
    %413 = math.rsqrt %412 : vector<2x4x1xf32>
    %414 = arith.truncf %389 : vector<2x4x4xf32> to vector<2x4x4xbf16>
    %415 = vector.shape_cast %386 : vector<2x4x32xf32> to vector<8x32xf32>
    %416 = arith.truncf %415 : vector<8x32xf32> to vector<8x32xbf16>
    %c0_151 = arith.constant 0 : index
    %c0_152 = arith.constant 0 : index
    %417 = vector.load %arg37[%c0_151, %c0_152] : memref<32x16xf32, #tpu.memory_space<vmem>>, vector<32x16xf32>
    %418 = arith.truncf %417 : vector<32x16xf32> to vector<32x16xbf16>
    %cst_153 = arith.constant dense<0.000000e+00> : vector<8x16xf32>
    %419 = tpu.matmul %416, %418, %cst_153 {dimension_numbers = #tpu.dot_dimension_numbers<[1], [0], [0], [1], [0, 0, 1, 1], [], []>} : vector<8x32xbf16>, vector<32x16xbf16>, vector<8x16xf32> -> vector<8x16xf32>
    %420 = vector.shape_cast %419 : vector<8x16xf32> to vector<2x4x16xf32>
    %421 = vector.broadcast %413 : vector<2x4x1xf32> to vector<2x4x16xf32>
    %422 = arith.mulf %421, %420 : vector<2x4x16xf32>
    %423 = arith.truncf %422 : vector<2x4x16xf32> to vector<2x4x16xbf16>
    "tpu.trace_start"() <{level = 10 : i32, message = "bnm,bmf->bnf"}> : () -> ()
    %cst_154 = arith.constant dense<0.000000e+00> : vector<2x4x16xf32>
    %424 = tpu.matmul %414, %423, %cst_154 {dimension_numbers = #tpu.dot_dimension_numbers<[2], [1], [1], [2], [0, 0, 0, 1, 1, 2], [0], [0]>} : vector<2x4x4xbf16>, vector<2x4x16xbf16>, vector<2x4x16xf32> -> vector<2x4x16xf32>
    "tpu.trace_stop"() : () -> ()
    %425 = arith.addf %424, %422 : vector<2x4x16xf32>
    %426 = vector.broadcast %413 : vector<2x4x1xf32> to vector<2x4x16xf32>
    %427 = arith.mulf %426, %425 : vector<2x4x16xf32>
    %c0_155 = arith.constant 0 : index
    %c0_156 = arith.constant 0 : index
    %428 = vector.load %arg38[%c0_155, %c0_156] : memref<1x16xf32, #tpu.memory_space<vmem>>, vector<1x16xf32>
    %429 = vector.shape_cast %428 : vector<1x16xf32> to vector<1x1x16xf32>
    %430 = vector.broadcast %429 : vector<1x1x16xf32> to vector<2x4x16xf32>
    %431 = arith.addf %427, %430 : vector<2x4x16xf32>
    %cst_157 = arith.constant 0.000000e+00 : f32
    %432 = vector.broadcast %cst_157 : f32 to vector<2x4x16xf32>
    %433 = arith.maximumf %431, %432 : vector<2x4x16xf32>
    %434 = vector.broadcast %413 : vector<2x4x1xf32> to vector<2x4x16xf32>
    %435 = arith.mulf %434, %433 : vector<2x4x16xf32>
    %436 = arith.truncf %435 : vector<2x4x16xf32> to vector<2x4x16xbf16>
    "tpu.trace_start"() <{level = 10 : i32, message = "bnm,bmf->bnf"}> : () -> ()
    %cst_158 = arith.constant dense<0.000000e+00> : vector<2x4x16xf32>
    %437 = tpu.matmul %414, %436, %cst_158 {dimension_numbers = #tpu.dot_dimension_numbers<[2], [1], [1], [2], [0, 0, 0, 1, 1, 2], [0], [0]>} : vector<2x4x4xbf16>, vector<2x4x16xbf16>, vector<2x4x16xf32> -> vector<2x4x16xf32>
    "tpu.trace_stop"() : () -> ()
    %438 = arith.addf %437, %435 : vector<2x4x16xf32>
    %439 = vector.broadcast %413 : vector<2x4x1xf32> to vector<2x4x16xf32>
    %440 = arith.mulf %439, %438 : vector<2x4x16xf32>
    %441 = vector.shape_cast %440 : vector<2x4x16xf32> to vector<8x16xf32>
    %442 = arith.truncf %441 : vector<8x16xf32> to vector<8x16xbf16>
    %c0_159 = arith.constant 0 : index
    %c0_160 = arith.constant 0 : index
    %443 = vector.load %arg39[%c0_159, %c0_160] : memref<16x16xf32, #tpu.memory_space<vmem>>, vector<16x16xf32>
    %444 = arith.truncf %443 : vector<16x16xf32> to vector<16x16xbf16>
    %cst_161 = arith.constant dense<0.000000e+00> : vector<8x16xf32>
    %445 = tpu.matmul %442, %444, %cst_161 {dimension_numbers = #tpu.dot_dimension_numbers<[1], [0], [0], [1], [0, 0, 1, 1], [], []>} : vector<8x16xbf16>, vector<16x16xbf16>, vector<8x16xf32> -> vector<8x16xf32>
    %446 = vector.shape_cast %445 : vector<8x16xf32> to vector<2x4x16xf32>
    %c0_162 = arith.constant 0 : index
    %c0_163 = arith.constant 0 : index
    %447 = vector.load %arg40[%c0_162, %c0_163] : memref<1x16xf32, #tpu.memory_space<vmem>>, vector<1x16xf32>
    %448 = vector.shape_cast %447 : vector<1x16xf32> to vector<1x1x16xf32>
    %449 = vector.broadcast %448 : vector<1x1x16xf32> to vector<2x4x16xf32>
    %450 = arith.addf %446, %449 : vector<2x4x16xf32>
    %cst_164 = arith.constant 0.000000e+00 : f32
    %451 = vector.broadcast %cst_164 : f32 to vector<2x4x16xf32>
    %452 = arith.maximumf %450, %451 : vector<2x4x16xf32>
    %453 = vector.broadcast %413 : vector<2x4x1xf32> to vector<2x4x16xf32>
    %454 = arith.mulf %453, %452 : vector<2x4x16xf32>
    %455 = arith.truncf %454 : vector<2x4x16xf32> to vector<2x4x16xbf16>
    "tpu.trace_start"() <{level = 10 : i32, message = "bnm,bmf->bnf"}> : () -> ()
    %cst_165 = arith.constant dense<0.000000e+00> : vector<2x4x16xf32>
    %456 = tpu.matmul %414, %455, %cst_165 {dimension_numbers = #tpu.dot_dimension_numbers<[2], [1], [1], [2], [0, 0, 0, 1, 1, 2], [0], [0]>} : vector<2x4x4xbf16>, vector<2x4x16xbf16>, vector<2x4x16xf32> -> vector<2x4x16xf32>
    "tpu.trace_stop"() : () -> ()
    %457 = arith.addf %456, %454 : vector<2x4x16xf32>
    %458 = vector.broadcast %413 : vector<2x4x1xf32> to vector<2x4x16xf32>
    %459 = arith.mulf %458, %457 : vector<2x4x16xf32>
    %460 = vector.shape_cast %459 : vector<2x4x16xf32> to vector<8x16xf32>
    %461 = arith.truncf %460 : vector<8x16xf32> to vector<8x16xbf16>
    %c0_166 = arith.constant 0 : index
    %c0_167 = arith.constant 0 : index
    %462 = vector.load %arg41[%c0_166, %c0_167] : memref<16x16xf32, #tpu.memory_space<vmem>>, vector<16x16xf32>
    %463 = arith.truncf %462 : vector<16x16xf32> to vector<16x16xbf16>
    %cst_168 = arith.constant dense<0.000000e+00> : vector<8x16xf32>
    %464 = tpu.matmul %461, %463, %cst_168 {dimension_numbers = #tpu.dot_dimension_numbers<[1], [0], [0], [1], [0, 0, 1, 1], [], []>} : vector<8x16xbf16>, vector<16x16xbf16>, vector<8x16xf32> -> vector<8x16xf32>
    %465 = vector.shape_cast %464 : vector<8x16xf32> to vector<2x4x16xf32>
    %c0_169 = arith.constant 0 : index
    %c0_170 = arith.constant 0 : index
    %466 = vector.load %arg42[%c0_169, %c0_170] : memref<1x16xf32, #tpu.memory_space<vmem>>, vector<1x16xf32>
    %467 = vector.shape_cast %466 : vector<1x16xf32> to vector<1x1x16xf32>
    %468 = vector.broadcast %467 : vector<1x1x16xf32> to vector<2x4x16xf32>
    %469 = arith.addf %465, %468 : vector<2x4x16xf32>
    %cst_171 = arith.constant 0.000000e+00 : f32
    %470 = vector.broadcast %cst_171 : f32 to vector<2x4x16xf32>
    %471 = arith.maximumf %469, %470 : vector<2x4x16xf32>
    %472 = vector.shape_cast %471 : vector<2x4x16xf32> to vector<8x16xf32>
    %473 = arith.truncf %472 : vector<8x16xf32> to vector<8x16xbf16>
    %c0_172 = arith.constant 0 : index
    %c0_173 = arith.constant 0 : index
    %474 = vector.load %arg43[%c0_172, %c0_173] : memref<16x2xf32, #tpu.memory_space<vmem>>, vector<16x2xf32>
    %475 = arith.truncf %474 : vector<16x2xf32> to vector<16x2xbf16>
    %cst_174 = arith.constant dense<0.000000e+00> : vector<8x2xf32>
    %476 = tpu.matmul %473, %475, %cst_174 {dimension_numbers = #tpu.dot_dimension_numbers<[1], [0], [0], [1], [0, 0, 1, 1], [], []>} : vector<8x16xbf16>, vector<16x2xbf16>, vector<8x2xf32> -> vector<8x2xf32>
    %477 = vector.shape_cast %476 : vector<8x2xf32> to vector<2x4x2xf32>
    %478 = vector.broadcast %413 : vector<2x4x1xf32> to vector<2x4x2xf32>
    %479 = arith.mulf %478, %477 : vector<2x4x2xf32>
    %480 = arith.truncf %479 : vector<2x4x2xf32> to vector<2x4x2xbf16>
    "tpu.trace_start"() <{level = 10 : i32, message = "bnm,bmf->bnf"}> : () -> ()
    %cst_175 = arith.constant dense<0.000000e+00> : vector<2x4x2xf32>
    %481 = tpu.matmul %414, %480, %cst_175 {dimension_numbers = #tpu.dot_dimension_numbers<[2], [1], [1], [2], [0, 0, 0, 1, 1, 2], [0], [0]>} : vector<2x4x4xbf16>, vector<2x4x2xbf16>, vector<2x4x2xf32> -> vector<2x4x2xf32>
    "tpu.trace_stop"() : () -> ()
    %482 = arith.addf %481, %479 : vector<2x4x2xf32>
    %483 = vector.broadcast %413 : vector<2x4x1xf32> to vector<2x4x2xf32>
    %484 = arith.mulf %483, %482 : vector<2x4x2xf32>
    %c0_176 = arith.constant 0 : index
    %c0_177 = arith.constant 0 : index
    %485 = vector.load %arg44[%c0_176, %c0_177] : memref<1x2xf32, #tpu.memory_space<vmem>>, vector<1x2xf32>
    %486 = vector.shape_cast %485 : vector<1x2xf32> to vector<1x1x2xf32>
    %487 = vector.broadcast %486 : vector<1x1x2xf32> to vector<2x4x2xf32>
    %488 = arith.addf %484, %487 : vector<2x4x2xf32>
    %489 = vector.broadcast %413 : vector<2x4x1xf32> to vector<2x4x32xf32>
    %490 = arith.mulf %489, %386 : vector<2x4x32xf32>
    %491 = arith.truncf %490 : vector<2x4x32xf32> to vector<2x4x32xbf16>
    "tpu.trace_start"() <{level = 10 : i32, message = "bnm,bmf->bnf"}> : () -> ()
    %cst_178 = arith.constant dense<0.000000e+00> : vector<2x4x32xf32>
    %492 = tpu.matmul %414, %491, %cst_178 {dimension_numbers = #tpu.dot_dimension_numbers<[2], [1], [1], [2], [0, 0, 0, 1, 1, 2], [0], [0]>} : vector<2x4x4xbf16>, vector<2x4x32xbf16>, vector<2x4x32xf32> -> vector<2x4x32xf32>
    "tpu.trace_stop"() : () -> ()
    %493 = arith.addf %492, %490 : vector<2x4x32xf32>
    %494 = vector.broadcast %413 : vector<2x4x1xf32> to vector<2x4x32xf32>
    %495 = arith.mulf %494, %493 : vector<2x4x32xf32>
    %496 = vector.shape_cast %495 : vector<2x4x32xf32> to vector<8x32xf32>
    %497 = arith.truncf %496 : vector<8x32xf32> to vector<8x32xbf16>
    %c0_179 = arith.constant 0 : index
    %c0_180 = arith.constant 0 : index
    %498 = vector.load %arg45[%c0_179, %c0_180] : memref<32x32xf32, #tpu.memory_space<vmem>>, vector<32x32xf32>
    %499 = arith.truncf %498 : vector<32x32xf32> to vector<32x32xbf16>
    %cst_181 = arith.constant dense<0.000000e+00> : vector<8x32xf32>
    %500 = tpu.matmul %497, %499, %cst_181 {dimension_numbers = #tpu.dot_dimension_numbers<[1], [0], [0], [1], [0, 0, 1, 1], [], []>} : vector<8x32xbf16>, vector<32x32xbf16>, vector<8x32xf32> -> vector<8x32xf32>
    %501 = vector.shape_cast %500 : vector<8x32xf32> to vector<2x4x32xf32>
    %c0_182 = arith.constant 0 : index
    %c0_183 = arith.constant 0 : index
    %502 = vector.load %arg46[%c0_182, %c0_183] : memref<1x32xf32, #tpu.memory_space<vmem>>, vector<1x32xf32>
    %503 = vector.shape_cast %502 : vector<1x32xf32> to vector<1x1x32xf32>
    %504 = vector.broadcast %503 : vector<1x1x32xf32> to vector<2x4x32xf32>
    %505 = arith.addf %501, %504 : vector<2x4x32xf32>
    %cst_184 = arith.constant 0.000000e+00 : f32
    %506 = vector.broadcast %cst_184 : f32 to vector<2x4x32xf32>
    %507 = arith.maximumf %505, %506 : vector<2x4x32xf32>
    %508 = vector.broadcast %413 : vector<2x4x1xf32> to vector<2x4x32xf32>
    %509 = arith.mulf %508, %507 : vector<2x4x32xf32>
    %510 = arith.truncf %509 : vector<2x4x32xf32> to vector<2x4x32xbf16>
    "tpu.trace_start"() <{level = 10 : i32, message = "bnm,bmf->bnf"}> : () -> ()
    %cst_185 = arith.constant dense<0.000000e+00> : vector<2x4x32xf32>
    %511 = tpu.matmul %414, %510, %cst_185 {dimension_numbers = #tpu.dot_dimension_numbers<[2], [1], [1], [2], [0, 0, 0, 1, 1, 2], [0], [0]>} : vector<2x4x4xbf16>, vector<2x4x32xbf16>, vector<2x4x32xf32> -> vector<2x4x32xf32>
    "tpu.trace_stop"() : () -> ()
    %512 = arith.addf %511, %509 : vector<2x4x32xf32>
    %513 = vector.broadcast %413 : vector<2x4x1xf32> to vector<2x4x32xf32>
    %514 = arith.mulf %513, %512 : vector<2x4x32xf32>
    %515 = vector.shape_cast %514 : vector<2x4x32xf32> to vector<8x32xf32>
    %516 = arith.truncf %515 : vector<8x32xf32> to vector<8x32xbf16>
    %c0_186 = arith.constant 0 : index
    %c0_187 = arith.constant 0 : index
    %517 = vector.load %arg47[%c0_186, %c0_187] : memref<32x32xf32, #tpu.memory_space<vmem>>, vector<32x32xf32>
    %518 = arith.truncf %517 : vector<32x32xf32> to vector<32x32xbf16>
    %cst_188 = arith.constant dense<0.000000e+00> : vector<8x32xf32>
    %519 = tpu.matmul %516, %518, %cst_188 {dimension_numbers = #tpu.dot_dimension_numbers<[1], [0], [0], [1], [0, 0, 1, 1], [], []>} : vector<8x32xbf16>, vector<32x32xbf16>, vector<8x32xf32> -> vector<8x32xf32>
    %520 = vector.shape_cast %519 : vector<8x32xf32> to vector<2x4x32xf32>
    %c0_189 = arith.constant 0 : index
    %c0_190 = arith.constant 0 : index
    %521 = vector.load %arg48[%c0_189, %c0_190] : memref<1x32xf32, #tpu.memory_space<vmem>>, vector<1x32xf32>
    %522 = vector.shape_cast %521 : vector<1x32xf32> to vector<1x1x32xf32>
    %523 = vector.broadcast %522 : vector<1x1x32xf32> to vector<2x4x32xf32>
    %524 = arith.addf %520, %523 : vector<2x4x32xf32>
    %cst_191 = arith.constant 0.000000e+00 : f32
    %525 = vector.broadcast %cst_191 : f32 to vector<2x4x32xf32>
    %526 = arith.maximumf %524, %525 : vector<2x4x32xf32>
    %527 = vector.broadcast %413 : vector<2x4x1xf32> to vector<2x4x32xf32>
    %528 = arith.mulf %527, %526 : vector<2x4x32xf32>
    %529 = arith.truncf %528 : vector<2x4x32xf32> to vector<2x4x32xbf16>
    "tpu.trace_start"() <{level = 10 : i32, message = "bnm,bmf->bnf"}> : () -> ()
    %cst_192 = arith.constant dense<0.000000e+00> : vector<2x4x32xf32>
    %530 = tpu.matmul %414, %529, %cst_192 {dimension_numbers = #tpu.dot_dimension_numbers<[2], [1], [1], [2], [0, 0, 0, 1, 1, 2], [0], [0]>} : vector<2x4x4xbf16>, vector<2x4x32xbf16>, vector<2x4x32xf32> -> vector<2x4x32xf32>
    "tpu.trace_stop"() : () -> ()
    %531 = arith.addf %530, %528 : vector<2x4x32xf32>
    %532 = vector.broadcast %413 : vector<2x4x1xf32> to vector<2x4x32xf32>
    %533 = arith.mulf %532, %531 : vector<2x4x32xf32>
    %534 = vector.shape_cast %533 : vector<2x4x32xf32> to vector<8x32xf32>
    %535 = arith.truncf %534 : vector<8x32xf32> to vector<8x32xbf16>
    %c0_193 = arith.constant 0 : index
    %c0_194 = arith.constant 0 : index
    %536 = vector.load %arg49[%c0_193, %c0_194] : memref<32x32xf32, #tpu.memory_space<vmem>>, vector<32x32xf32>
    %537 = arith.truncf %536 : vector<32x32xf32> to vector<32x32xbf16>
    %cst_195 = arith.constant dense<0.000000e+00> : vector<8x32xf32>
    %538 = tpu.matmul %535, %537, %cst_195 {dimension_numbers = #tpu.dot_dimension_numbers<[1], [0], [0], [1], [0, 0, 1, 1], [], []>} : vector<8x32xbf16>, vector<32x32xbf16>, vector<8x32xf32> -> vector<8x32xf32>
    %539 = vector.shape_cast %538 : vector<8x32xf32> to vector<2x4x32xf32>
    %c0_196 = arith.constant 0 : index
    %c0_197 = arith.constant 0 : index
    %540 = vector.load %arg50[%c0_196, %c0_197] : memref<1x32xf32, #tpu.memory_space<vmem>>, vector<1x32xf32>
    %541 = vector.shape_cast %540 : vector<1x32xf32> to vector<1x1x32xf32>
    %542 = vector.broadcast %541 : vector<1x1x32xf32> to vector<2x4x32xf32>
    %543 = arith.addf %539, %542 : vector<2x4x32xf32>
    %cst_198 = arith.constant 0.000000e+00 : f32
    %544 = vector.broadcast %cst_198 : f32 to vector<2x4x32xf32>
    %545 = arith.maximumf %543, %544 : vector<2x4x32xf32>
    %546 = vector.broadcast %413 : vector<2x4x1xf32> to vector<2x4x32xf32>
    %547 = arith.mulf %546, %545 : vector<2x4x32xf32>
    %548 = arith.truncf %547 : vector<2x4x32xf32> to vector<2x4x32xbf16>
    "tpu.trace_start"() <{level = 10 : i32, message = "bnm,bmf->bnf"}> : () -> ()
    %cst_199 = arith.constant dense<0.000000e+00> : vector<2x4x32xf32>
    %549 = tpu.matmul %414, %548, %cst_199 {dimension_numbers = #tpu.dot_dimension_numbers<[2], [1], [1], [2], [0, 0, 0, 1, 1, 2], [0], [0]>} : vector<2x4x4xbf16>, vector<2x4x32xbf16>, vector<2x4x32xf32> -> vector<2x4x32xf32>
    "tpu.trace_stop"() : () -> ()
    %550 = arith.addf %549, %547 : vector<2x4x32xf32>
    %551 = vector.broadcast %413 : vector<2x4x1xf32> to vector<2x4x32xf32>
    %552 = arith.mulf %551, %550 : vector<2x4x32xf32>
    %553 = vector.shape_cast %552 : vector<2x4x32xf32> to vector<8x32xf32>
    %554 = arith.truncf %553 : vector<8x32xf32> to vector<8x32xbf16>
    %c0_200 = arith.constant 0 : index
    %c0_201 = arith.constant 0 : index
    %555 = vector.load %arg51[%c0_200, %c0_201] : memref<32x32xf32, #tpu.memory_space<vmem>>, vector<32x32xf32>
    %556 = arith.truncf %555 : vector<32x32xf32> to vector<32x32xbf16>
    %cst_202 = arith.constant dense<0.000000e+00> : vector<8x32xf32>
    %557 = tpu.matmul %554, %556, %cst_202 {dimension_numbers = #tpu.dot_dimension_numbers<[1], [0], [0], [1], [0, 0, 1, 1], [], []>} : vector<8x32xbf16>, vector<32x32xbf16>, vector<8x32xf32> -> vector<8x32xf32>
    %558 = vector.shape_cast %557 : vector<8x32xf32> to vector<2x4x32xf32>
    %c0_203 = arith.constant 0 : index
    %c0_204 = arith.constant 0 : index
    %559 = vector.load %arg52[%c0_203, %c0_204] : memref<1x32xf32, #tpu.memory_space<vmem>>, vector<1x32xf32>
    %560 = vector.shape_cast %559 : vector<1x32xf32> to vector<1x1x32xf32>
    %561 = vector.broadcast %560 : vector<1x1x32xf32> to vector<2x4x32xf32>
    %562 = arith.addf %558, %561 : vector<2x4x32xf32>
    %cst_205 = arith.constant 0.000000e+00 : f32
    %563 = vector.broadcast %cst_205 : f32 to vector<2x4x32xf32>
    %564 = arith.maximumf %562, %563 : vector<2x4x32xf32>
    %cst_206 = arith.constant dense<0xFF800000> : vector<2x4xf32>
    %565 = vector.multi_reduction <maximumf>, %488, %cst_206 [2] : vector<2x4x2xf32> to vector<2x4xf32>
    %566 = vector.shape_cast %565 : vector<2x4xf32> to vector<2x4x1xf32>
    %567 = vector.broadcast %566 : vector<2x4x1xf32> to vector<2x4x2xf32>
    %568 = arith.subf %488, %567 : vector<2x4x2xf32>
    %569 = math.exp %568 : vector<2x4x2xf32>
    %cst_207 = arith.constant dense<0.000000e+00> : vector<2x4xf32>
    %570 = vector.multi_reduction <add>, %569, %cst_207 [2] : vector<2x4x2xf32> to vector<2x4xf32>
    %571 = vector.shape_cast %570 : vector<2x4xf32> to vector<2x4x1xf32>
    %572 = tpu.reciprocal %571 {approx = true} : vector<2x4x1xf32> -> vector<2x4x1xf32>
    %573 = vector.broadcast %572 : vector<2x4x1xf32> to vector<2x4x2xf32>
    %574 = arith.mulf %569, %573 : vector<2x4x2xf32>
    %575 = arith.truncf %574 : vector<2x4x2xf32> to vector<2x4x2xbf16>
    %576 = arith.truncf %564 : vector<2x4x32xf32> to vector<2x4x32xbf16>
    "tpu.trace_start"() <{level = 10 : i32, message = "bnc,bnf->bcf"}> : () -> ()
    %cst_208 = arith.constant dense<0.000000e+00> : vector<2x2x32xf32>
    %577 = tpu.matmul %575, %576, %cst_208 {dimension_numbers = #tpu.dot_dimension_numbers<[1], [1], [2], [2], [0, 0, 0, 2, 1, 2], [0], [0]>} : vector<2x4x2xbf16>, vector<2x4x32xbf16>, vector<2x2x32xf32> -> vector<2x2x32xf32>
    "tpu.trace_stop"() : () -> ()
    "tpu.trace_start"() <{level = 10 : i32, message = "bnc,bmc->bnm"}> : () -> ()
    %cst_209 = arith.constant dense<0.000000e+00> : vector<2x4x4xf32>
    %578 = tpu.matmul %575, %575, %cst_209 {dimension_numbers = #tpu.dot_dimension_numbers<[2], [2], [1], [1], [0, 0, 0, 1, 1, 1], [0], [0]>} : vector<2x4x2xbf16>, vector<2x4x2xbf16>, vector<2x4x4xf32> -> vector<2x4x4xf32>
    "tpu.trace_stop"() : () -> ()
    %579 = arith.subf %389, %578 : vector<2x4x4xf32>
    %580 = arith.mulf %579, %579 : vector<2x4x4xf32>
    %581 = vector.shape_cast %580 : vector<2x4x4xf32> to vector<1x2x4x4xf32>
    %cst_210 = arith.constant dense<0.000000e+00> : vector<1xf32>
    %582 = vector.multi_reduction <add>, %581, %cst_210 [1, 2, 3] : vector<1x2x4x4xf32> to vector<1xf32>
    %583 = vector.shape_cast %582 : vector<1xf32> to vector<1x1x1x1xf32>
    %584 = vector.extract %583[0, 0, 0, 0] : f32 from vector<1x1x1x1xf32>
    %585 = vector.broadcast %584 : f32 to vector<1x1xf32>
    %cst_211 = arith.constant 0.000000e+00 : f32
    %586 = vector.broadcast %cst_211 : f32 to vector<2x4x2xf32>
    %587 = arith.subf %586, %574 : vector<2x4x2xf32>
    %cst_212 = arith.constant 1.000000e-15 : f32
    %588 = vector.broadcast %cst_212 : f32 to vector<2x4x2xf32>
    %589 = arith.addf %574, %588 : vector<2x4x2xf32>
    %590 = math.log %589 : vector<2x4x2xf32>
    %591 = arith.mulf %587, %590 : vector<2x4x2xf32>
    %592 = vector.shape_cast %591 : vector<2x4x2xf32> to vector<1x2x4x2xf32>
    %cst_213 = arith.constant dense<0.000000e+00> : vector<1xf32>
    %593 = vector.multi_reduction <add>, %592, %cst_213 [1, 2, 3] : vector<1x2x4x2xf32> to vector<1xf32>
    %594 = vector.shape_cast %593 : vector<1xf32> to vector<1x1x1x1xf32>
    %595 = vector.extract %594[0, 0, 0, 0] : f32 from vector<1x1x1x1xf32>
    %596 = vector.broadcast %595 : f32 to vector<1x1xf32>
    %cst_214 = arith.constant dense<0.000000e+00> : vector<2x32xf32>
    %597 = vector.multi_reduction <add>, %577, %cst_214 [1] : vector<2x2x32xf32> to vector<2x32xf32>
    %cst_215 = arith.constant 2.000000e+00 : f32
    %598 = vector.broadcast %cst_215 : f32 to vector<2x32xf32>
    %599 = arith.divf %597, %598 : vector<2x32xf32>
    %c0_216 = arith.constant 0 : index
    %c0_217 = arith.constant 0 : index
    %600 = vector.load %arg53[%c0_216, %c0_217] : memref<32x1xf32, #tpu.memory_space<vmem>>, vector<32x1xf32>
    %c0_218 = arith.constant 0 : index
    %c0_219 = arith.constant 0 : index
    %601 = vector.load %arg54[%c0_218, %c0_219] : memref<1x1xf32, #tpu.memory_space<vmem>>, vector<1x1xf32>
    %cst_220 = arith.constant dense<0.000000e+00> : vector<2x1xf32>
    %602 = tpu.matmul %599, %600, %cst_220 {dimension_numbers = #tpu.dot_dimension_numbers<[1], [0], [0], [1], [0, 0, 1, 1], [], []>} : vector<2x32xf32>, vector<32x1xf32>, vector<2x1xf32> -> vector<2x1xf32>
    %603 = vector.broadcast %601 : vector<1x1xf32> to vector<2x1xf32>
    %604 = arith.addf %602, %603 : vector<2x1xf32>
    %cst_221 = arith.constant 0.000000e+00 : f32
    %605 = vector.broadcast %cst_221 : f32 to vector<2x1xf32>
    %606 = arith.subf %605, %604 : vector<2x1xf32>
    %607 = math.exp %606 : vector<2x1xf32>
    %cst_222 = arith.constant 1.000000e+00 : f32
    %608 = vector.broadcast %cst_222 : f32 to vector<2x1xf32>
    %609 = arith.addf %608, %607 : vector<2x1xf32>
    %cst_223 = arith.constant 1.000000e+00 : f32
    %610 = vector.broadcast %cst_223 : f32 to vector<2x1xf32>
    %611 = arith.divf %610, %609 : vector<2x1xf32>
    %cst_224 = arith.constant 0.000000e+00 : f32
    %612 = vector.broadcast %cst_224 : f32 to vector<2x127xf32>
    %613 = tpu.concatenate %611, %612 in 1 : vector<2x1xf32>, vector<2x127xf32> -> vector<2x128xf32>
    %614 = vector.shape_cast %613 : vector<2x128xf32> to vector<2x1x128xf32>
    %615 = vector.shape_cast %614 : vector<2x1x128xf32> to vector<2x1x128xf32>
    %616 = vector.broadcast %615 : vector<2x1x128xf32> to vector<2x8x128xf32>
    %c0_225 = arith.constant 0 : index
    %c0_226 = arith.constant 0 : index
    %c0_227 = arith.constant 0 : index
    %617 = vector.load %arg55[%c0_225, %c0_226, %c0_227] : memref<2x8x128xf32, #tpu.memory_space<vmem>>, vector<2x8x128xf32>
    tpu.vector_store %arg55[%c0_225, %c0_226, %c0_227], %616 {strides = array<i32>} : memref<2x8x128xf32, #tpu.memory_space<vmem>>, vector<2x8x128xf32>,
    %618 = tpu.iota {dimensions = array<i32: 0>} : vector<8x128xi32>
    %619 = tpu.iota {dimensions = array<i32: 1>} : vector<8x128xi32>
    %cst_228 = arith.constant 0.000000e+00 : f32
    %620 = vector.broadcast %cst_228 : f32 to vector<8x128xf32>
    %c0_i32 = arith.constant 0 : i32
    %621 = vector.broadcast %c0_i32 : i32 to vector<8x128xi32>
    %622 = arith.cmpi eq, %618, %621 : vector<8x128xi32>
    %c0_i32_229 = arith.constant 0 : i32
    %623 = vector.broadcast %c0_i32_229 : i32 to vector<8x128xi32>
    %624 = arith.cmpi eq, %619, %623 : vector<8x128xi32>
    %625 = arith.andi %622, %624 : vector<8x128xi1>
    %cst_230 = arith.constant 0.000000e+00 : f32
    %626 = vector.shape_cast %206 : vector<1x1xf32> to vector<1x1xf32>
    %627 = vector.broadcast %626 : vector<1x1xf32> to vector<8x128xf32>
    %628 = vector.broadcast %cst_230 : f32 to vector<8x128xf32>
    %629 = arith.select %625, %627, %628 : vector<8x128xi1>, vector<8x128xf32>
    %630 = arith.addf %620, %629 : vector<8x128xf32>
    %c1_i32 = arith.constant 1 : i32
    %631 = vector.broadcast %c1_i32 : i32 to vector<8x128xi32>
    %632 = arith.cmpi eq, %618, %631 : vector<8x128xi32>
    %c0_i32_231 = arith.constant 0 : i32
    %633 = vector.broadcast %c0_i32_231 : i32 to vector<8x128xi32>
    %634 = arith.cmpi eq, %619, %633 : vector<8x128xi32>
    %635 = arith.andi %632, %634 : vector<8x128xi1>
    %cst_232 = arith.constant 0.000000e+00 : f32
    %636 = vector.shape_cast %217 : vector<1x1xf32> to vector<1x1xf32>
    %637 = vector.broadcast %636 : vector<1x1xf32> to vector<8x128xf32>
    %638 = vector.broadcast %cst_232 : f32 to vector<8x128xf32>
    %639 = arith.select %635, %637, %638 : vector<8x128xi1>, vector<8x128xf32>
    %640 = arith.addf %630, %639 : vector<8x128xf32>
    %c0_i32_233 = arith.constant 0 : i32
    %641 = vector.broadcast %c0_i32_233 : i32 to vector<8x128xi32>
    %642 = arith.cmpi eq, %618, %641 : vector<8x128xi32>
    %c1_i32_234 = arith.constant 1 : i32
    %643 = vector.broadcast %c1_i32_234 : i32 to vector<8x128xi32>
    %644 = arith.cmpi eq, %619, %643 : vector<8x128xi32>
    %645 = arith.andi %642, %644 : vector<8x128xi1>
    %cst_235 = arith.constant 0.000000e+00 : f32
    %646 = vector.shape_cast %397 : vector<1x1xf32> to vector<1x1xf32>
    %647 = vector.broadcast %646 : vector<1x1xf32> to vector<8x128xf32>
    %648 = vector.broadcast %cst_235 : f32 to vector<8x128xf32>
    %649 = arith.select %645, %647, %648 : vector<8x128xi1>, vector<8x128xf32>
    %650 = arith.addf %640, %649 : vector<8x128xf32>
    %c1_i32_236 = arith.constant 1 : i32
    %651 = vector.broadcast %c1_i32_236 : i32 to vector<8x128xi32>
    %652 = arith.cmpi eq, %618, %651 : vector<8x128xi32>
    %c1_i32_237 = arith.constant 1 : i32
    %653 = vector.broadcast %c1_i32_237 : i32 to vector<8x128xi32>
    %654 = arith.cmpi eq, %619, %653 : vector<8x128xi32>
    %655 = arith.andi %652, %654 : vector<8x128xi1>
    %cst_238 = arith.constant 0.000000e+00 : f32
    %656 = vector.shape_cast %408 : vector<1x1xf32> to vector<1x1xf32>
    %657 = vector.broadcast %656 : vector<1x1xf32> to vector<8x128xf32>
    %658 = vector.broadcast %cst_238 : f32 to vector<8x128xf32>
    %659 = arith.select %655, %657, %658 : vector<8x128xi1>, vector<8x128xf32>
    %660 = arith.addf %650, %659 : vector<8x128xf32>
    %c0_i32_239 = arith.constant 0 : i32
    %661 = vector.broadcast %c0_i32_239 : i32 to vector<8x128xi32>
    %662 = arith.cmpi eq, %618, %661 : vector<8x128xi32>
    %c2_i32 = arith.constant 2 : i32
    %663 = vector.broadcast %c2_i32 : i32 to vector<8x128xi32>
    %664 = arith.cmpi eq, %619, %663 : vector<8x128xi32>
    %665 = arith.andi %662, %664 : vector<8x128xi1>
    %cst_240 = arith.constant 0.000000e+00 : f32
    %666 = vector.shape_cast %585 : vector<1x1xf32> to vector<1x1xf32>
    %667 = vector.broadcast %666 : vector<1x1xf32> to vector<8x128xf32>
    %668 = vector.broadcast %cst_240 : f32 to vector<8x128xf32>
    %669 = arith.select %665, %667, %668 : vector<8x128xi1>, vector<8x128xf32>
    %670 = arith.addf %660, %669 : vector<8x128xf32>
    %c1_i32_241 = arith.constant 1 : i32
    %671 = vector.broadcast %c1_i32_241 : i32 to vector<8x128xi32>
    %672 = arith.cmpi eq, %618, %671 : vector<8x128xi32>
    %c2_i32_242 = arith.constant 2 : i32
    %673 = vector.broadcast %c2_i32_242 : i32 to vector<8x128xi32>
    %674 = arith.cmpi eq, %619, %673 : vector<8x128xi32>
    %675 = arith.andi %672, %674 : vector<8x128xi1>
    %cst_243 = arith.constant 0.000000e+00 : f32
    %676 = vector.shape_cast %596 : vector<1x1xf32> to vector<1x1xf32>
    %677 = vector.broadcast %676 : vector<1x1xf32> to vector<8x128xf32>
    %678 = vector.broadcast %cst_243 : f32 to vector<8x128xf32>
    %679 = arith.select %675, %677, %678 : vector<8x128xi1>, vector<8x128xf32>
    %680 = arith.addf %670, %679 : vector<8x128xf32>
    %c0_244 = arith.constant 0 : index
    %c0_245 = arith.constant 0 : index
    %c0_246 = arith.constant 0 : index
    %681 = vector.load %arg56[%c0_244, %c0_245, %c0_246] : memref<1x8x128xf32, #tpu.memory_space<vmem>>, vector<1x8x128xf32>
    %682 = vector.shape_cast %681 : vector<1x8x128xf32> to vector<8x128xf32>
    %683 = vector.shape_cast %680 : vector<8x128xf32> to vector<1x8x128xf32>
    tpu.vector_store %arg56[%c0_244, %c0_245, %c0_246], %683 {strides = array<i32>} : memref<1x8x128xf32, #tpu.memory_space<vmem>>, vector<1x8x128xf32>,
    return
  }
  func.func @transform_0(%arg0: i32) -> (i32, i32, i32) {
    %c0_i32 = arith.constant 0 : i32
    %c0_i32_0 = arith.constant 0 : i32
    %c0_i32_1 = arith.constant 0 : i32
    return %arg0, %c0_i32, %c0_i32_0 : i32, i32, i32
  }
  func.func @transform_1(%arg0: i32) -> (i32, i32, i32) {
    %c0_i32 = arith.constant 0 : i32
    %c0_i32_0 = arith.constant 0 : i32
    %c0_i32_1 = arith.constant 0 : i32
    return %arg0, %c0_i32, %c0_i32_0 : i32, i32, i32
  }
  func.func @transform_2(%arg0: i32) -> (i32, i32, i32) {
    %c0_i32 = arith.constant 0 : i32
    %c0_i32_0 = arith.constant 0 : i32
    %c0_i32_1 = arith.constant 0 : i32
    return %arg0, %c0_i32, %c0_i32_0 : i32, i32, i32
  }
  func.func @transform_3(%arg0: i32) -> (i32, i32, i32) {
    %c0_i32 = arith.constant 0 : i32
    %c0_i32_0 = arith.constant 0 : i32
    %c0_i32_1 = arith.constant 0 : i32
    return %arg0, %c0_i32, %c0_i32_0 : i32, i32, i32
  }
  func.func @transform_4(%arg0: i32) -> (i32, i32) {
    %c0_i32 = arith.constant 0 : i32
    %c0_i32_0 = arith.constant 0 : i32
    %c0_i32_1 = arith.constant 0 : i32
    return %c0_i32, %c0_i32_0 : i32, i32
  }
  func.func @transform_5(%arg0: i32) -> (i32, i32) {
    %c0_i32 = arith.constant 0 : i32
    %c0_i32_0 = arith.constant 0 : i32
    %c0_i32_1 = arith.constant 0 : i32
    return %c0_i32, %c0_i32_0 : i32, i32
  }
  func.func @transform_6(%arg0: i32) -> (i32, i32) {
    %c0_i32 = arith.constant 0 : i32
    %c0_i32_0 = arith.constant 0 : i32
    %c0_i32_1 = arith.constant 0 : i32
    return %c0_i32, %c0_i32_0 : i32, i32
  }
  func.func @transform_7(%arg0: i32) -> (i32, i32) {
    %c0_i32 = arith.constant 0 : i32
    %c0_i32_0 = arith.constant 0 : i32
    %c0_i32_1 = arith.constant 0 : i32
    return %c0_i32, %c0_i32_0 : i32, i32
  }
  func.func @transform_8(%arg0: i32) -> (i32, i32) {
    %c0_i32 = arith.constant 0 : i32
    %c0_i32_0 = arith.constant 0 : i32
    %c0_i32_1 = arith.constant 0 : i32
    return %c0_i32, %c0_i32_0 : i32, i32
  }
  func.func @transform_9(%arg0: i32) -> (i32, i32) {
    %c0_i32 = arith.constant 0 : i32
    %c0_i32_0 = arith.constant 0 : i32
    %c0_i32_1 = arith.constant 0 : i32
    return %c0_i32, %c0_i32_0 : i32, i32
  }
  func.func @transform_10(%arg0: i32) -> (i32, i32) {
    %c0_i32 = arith.constant 0 : i32
    %c0_i32_0 = arith.constant 0 : i32
    %c0_i32_1 = arith.constant 0 : i32
    return %c0_i32, %c0_i32_0 : i32, i32
  }
  func.func @transform_11(%arg0: i32) -> (i32, i32) {
    %c0_i32 = arith.constant 0 : i32
    %c0_i32_0 = arith.constant 0 : i32
    %c0_i32_1 = arith.constant 0 : i32
    return %c0_i32, %c0_i32_0 : i32, i32
  }
  func.func @transform_12(%arg0: i32) -> (i32, i32) {
    %c0_i32 = arith.constant 0 : i32
    %c0_i32_0 = arith.constant 0 : i32
    %c0_i32_1 = arith.constant 0 : i32
    return %c0_i32, %c0_i32_0 : i32, i32
  }
  func.func @transform_13(%arg0: i32) -> (i32, i32) {
    %c0_i32 = arith.constant 0 : i32
    %c0_i32_0 = arith.constant 0 : i32
    %c0_i32_1 = arith.constant 0 : i32
    return %c0_i32, %c0_i32_0 : i32, i32
  }
  func.func @transform_14(%arg0: i32) -> (i32, i32) {
    %c0_i32 = arith.constant 0 : i32
    %c0_i32_0 = arith.constant 0 : i32
    %c0_i32_1 = arith.constant 0 : i32
    return %c0_i32, %c0_i32_0 : i32, i32
  }
  func.func @transform_15(%arg0: i32) -> (i32, i32) {
    %c0_i32 = arith.constant 0 : i32
    %c0_i32_0 = arith.constant 0 : i32
    %c0_i32_1 = arith.constant 0 : i32
    return %c0_i32, %c0_i32_0 : i32, i32
  }
  func.func @transform_16(%arg0: i32) -> (i32, i32) {
    %c0_i32 = arith.constant 0 : i32
    %c0_i32_0 = arith.constant 0 : i32
    %c0_i32_1 = arith.constant 0 : i32
    return %c0_i32, %c0_i32_0 : i32, i32
  }
  func.func @transform_17(%arg0: i32) -> (i32, i32) {
    %c0_i32 = arith.constant 0 : i32
    %c0_i32_0 = arith.constant 0 : i32
    %c0_i32_1 = arith.constant 0 : i32
    return %c0_i32, %c0_i32_0 : i32, i32
  }
  func.func @transform_18(%arg0: i32) -> (i32, i32) {
    %c0_i32 = arith.constant 0 : i32
    %c0_i32_0 = arith.constant 0 : i32
    %c0_i32_1 = arith.constant 0 : i32
    return %c0_i32, %c0_i32_0 : i32, i32
  }
  func.func @transform_19(%arg0: i32) -> (i32, i32) {
    %c0_i32 = arith.constant 0 : i32
    %c0_i32_0 = arith.constant 0 : i32
    %c0_i32_1 = arith.constant 0 : i32
    return %c0_i32, %c0_i32_0 : i32, i32
  }
  func.func @transform_20(%arg0: i32) -> (i32, i32) {
    %c0_i32 = arith.constant 0 : i32
    %c0_i32_0 = arith.constant 0 : i32
    %c0_i32_1 = arith.constant 0 : i32
    return %c0_i32, %c0_i32_0 : i32, i32
  }
  func.func @transform_21(%arg0: i32) -> (i32, i32) {
    %c0_i32 = arith.constant 0 : i32
    %c0_i32_0 = arith.constant 0 : i32
    %c0_i32_1 = arith.constant 0 : i32
    return %c0_i32, %c0_i32_0 : i32, i32
  }
  func.func @transform_22(%arg0: i32) -> (i32, i32) {
    %c0_i32 = arith.constant 0 : i32
    %c0_i32_0 = arith.constant 0 : i32
    %c0_i32_1 = arith.constant 0 : i32
    return %c0_i32, %c0_i32_0 : i32, i32
  }
  func.func @transform_23(%arg0: i32) -> (i32, i32) {
    %c0_i32 = arith.constant 0 : i32
    %c0_i32_0 = arith.constant 0 : i32
    %c0_i32_1 = arith.constant 0 : i32
    return %c0_i32, %c0_i32_0 : i32, i32
  }
  func.func @transform_24(%arg0: i32) -> (i32, i32) {
    %c0_i32 = arith.constant 0 : i32
    %c0_i32_0 = arith.constant 0 : i32
    %c0_i32_1 = arith.constant 0 : i32
    return %c0_i32, %c0_i32_0 : i32, i32
  }
  func.func @transform_25(%arg0: i32) -> (i32, i32) {
    %c0_i32 = arith.constant 0 : i32
    %c0_i32_0 = arith.constant 0 : i32
    %c0_i32_1 = arith.constant 0 : i32
    return %c0_i32, %c0_i32_0 : i32, i32
  }
  func.func @transform_26(%arg0: i32) -> (i32, i32) {
    %c0_i32 = arith.constant 0 : i32
    %c0_i32_0 = arith.constant 0 : i32
    %c0_i32_1 = arith.constant 0 : i32
    return %c0_i32, %c0_i32_0 : i32, i32
  }
  func.func @transform_27(%arg0: i32) -> (i32, i32) {
    %c0_i32 = arith.constant 0 : i32
    %c0_i32_0 = arith.constant 0 : i32
    %c0_i32_1 = arith.constant 0 : i32
    return %c0_i32, %c0_i32_0 : i32, i32
  }
  func.func @transform_28(%arg0: i32) -> (i32, i32) {
    %c0_i32 = arith.constant 0 : i32
    %c0_i32_0 = arith.constant 0 : i32
    %c0_i32_1 = arith.constant 0 : i32
    return %c0_i32, %c0_i32_0 : i32, i32
  }
  func.func @transform_29(%arg0: i32) -> (i32, i32) {
    %c0_i32 = arith.constant 0 : i32
    %c0_i32_0 = arith.constant 0 : i32
    %c0_i32_1 = arith.constant 0 : i32
    return %c0_i32, %c0_i32_0 : i32, i32
  }
  func.func @transform_30(%arg0: i32) -> (i32, i32) {
    %c0_i32 = arith.constant 0 : i32
    %c0_i32_0 = arith.constant 0 : i32
    %c0_i32_1 = arith.constant 0 : i32
    return %c0_i32, %c0_i32_0 : i32, i32
  }
  func.func @transform_31(%arg0: i32) -> (i32, i32) {
    %c0_i32 = arith.constant 0 : i32
    %c0_i32_0 = arith.constant 0 : i32
    %c0_i32_1 = arith.constant 0 : i32
    return %c0_i32, %c0_i32_0 : i32, i32
  }
  func.func @transform_32(%arg0: i32) -> (i32, i32) {
    %c0_i32 = arith.constant 0 : i32
    %c0_i32_0 = arith.constant 0 : i32
    %c0_i32_1 = arith.constant 0 : i32
    return %c0_i32, %c0_i32_0 : i32, i32
  }
  func.func @transform_33(%arg0: i32) -> (i32, i32) {
    %c0_i32 = arith.constant 0 : i32
    %c0_i32_0 = arith.constant 0 : i32
    %c0_i32_1 = arith.constant 0 : i32
    return %c0_i32, %c0_i32_0 : i32, i32
  }
  func.func @transform_34(%arg0: i32) -> (i32, i32) {
    %c0_i32 = arith.constant 0 : i32
    %c0_i32_0 = arith.constant 0 : i32
    %c0_i32_1 = arith.constant 0 : i32
    return %c0_i32, %c0_i32_0 : i32, i32
  }
  func.func @transform_35(%arg0: i32) -> (i32, i32) {
    %c0_i32 = arith.constant 0 : i32
    %c0_i32_0 = arith.constant 0 : i32
    %c0_i32_1 = arith.constant 0 : i32
    return %c0_i32, %c0_i32_0 : i32, i32
  }
  func.func @transform_36(%arg0: i32) -> (i32, i32) {
    %c0_i32 = arith.constant 0 : i32
    %c0_i32_0 = arith.constant 0 : i32
    %c0_i32_1 = arith.constant 0 : i32
    return %c0_i32, %c0_i32_0 : i32, i32
  }
  func.func @transform_37(%arg0: i32) -> (i32, i32) {
    %c0_i32 = arith.constant 0 : i32
    %c0_i32_0 = arith.constant 0 : i32
    %c0_i32_1 = arith.constant 0 : i32
    return %c0_i32, %c0_i32_0 : i32, i32
  }
  func.func @transform_38(%arg0: i32) -> (i32, i32) {
    %c0_i32 = arith.constant 0 : i32
    %c0_i32_0 = arith.constant 0 : i32
    %c0_i32_1 = arith.constant 0 : i32
    return %c0_i32, %c0_i32_0 : i32, i32
  }
  func.func @transform_39(%arg0: i32) -> (i32, i32) {
    %c0_i32 = arith.constant 0 : i32
    %c0_i32_0 = arith.constant 0 : i32
    %c0_i32_1 = arith.constant 0 : i32
    return %c0_i32, %c0_i32_0 : i32, i32
  }
  func.func @transform_40(%arg0: i32) -> (i32, i32) {
    %c0_i32 = arith.constant 0 : i32
    %c0_i32_0 = arith.constant 0 : i32
    %c0_i32_1 = arith.constant 0 : i32
    return %c0_i32, %c0_i32_0 : i32, i32
  }
  func.func @transform_41(%arg0: i32) -> (i32, i32) {
    %c0_i32 = arith.constant 0 : i32
    %c0_i32_0 = arith.constant 0 : i32
    %c0_i32_1 = arith.constant 0 : i32
    return %c0_i32, %c0_i32_0 : i32, i32
  }
  func.func @transform_42(%arg0: i32) -> (i32, i32) {
    %c0_i32 = arith.constant 0 : i32
    %c0_i32_0 = arith.constant 0 : i32
    %c0_i32_1 = arith.constant 0 : i32
    return %c0_i32, %c0_i32_0 : i32, i32
  }
  func.func @transform_43(%arg0: i32) -> (i32, i32) {
    %c0_i32 = arith.constant 0 : i32
    %c0_i32_0 = arith.constant 0 : i32
    %c0_i32_1 = arith.constant 0 : i32
    return %c0_i32, %c0_i32_0 : i32, i32
  }
  func.func @transform_44(%arg0: i32) -> (i32, i32) {
    %c0_i32 = arith.constant 0 : i32
    %c0_i32_0 = arith.constant 0 : i32
    %c0_i32_1 = arith.constant 0 : i32
    return %c0_i32, %c0_i32_0 : i32, i32
  }
  func.func @transform_45(%arg0: i32) -> (i32, i32) {
    %c0_i32 = arith.constant 0 : i32
    %c0_i32_0 = arith.constant 0 : i32
    %c0_i32_1 = arith.constant 0 : i32
    return %c0_i32, %c0_i32_0 : i32, i32
  }
  func.func @transform_46(%arg0: i32) -> (i32, i32) {
    %c0_i32 = arith.constant 0 : i32
    %c0_i32_0 = arith.constant 0 : i32
    %c0_i32_1 = arith.constant 0 : i32
    return %c0_i32, %c0_i32_0 : i32, i32
  }
  func.func @transform_47(%arg0: i32) -> (i32, i32) {
    %c0_i32 = arith.constant 0 : i32
    %c0_i32_0 = arith.constant 0 : i32
    %c0_i32_1 = arith.constant 0 : i32
    return %c0_i32, %c0_i32_0 : i32, i32
  }
  func.func @transform_48(%arg0: i32) -> (i32, i32) {
    %c0_i32 = arith.constant 0 : i32
    %c0_i32_0 = arith.constant 0 : i32
    %c0_i32_1 = arith.constant 0 : i32
    return %c0_i32, %c0_i32_0 : i32, i32
  }
  func.func @transform_49(%arg0: i32) -> (i32, i32) {
    %c0_i32 = arith.constant 0 : i32
    %c0_i32_0 = arith.constant 0 : i32
    %c0_i32_1 = arith.constant 0 : i32
    return %c0_i32, %c0_i32_0 : i32, i32
  }
  func.func @transform_50(%arg0: i32) -> (i32, i32) {
    %c0_i32 = arith.constant 0 : i32
    %c0_i32_0 = arith.constant 0 : i32
    %c0_i32_1 = arith.constant 0 : i32
    return %c0_i32, %c0_i32_0 : i32, i32
  }
  func.func @transform_51(%arg0: i32) -> (i32, i32) {
    %c0_i32 = arith.constant 0 : i32
    %c0_i32_0 = arith.constant 0 : i32
    %c0_i32_1 = arith.constant 0 : i32
    return %c0_i32, %c0_i32_0 : i32, i32
  }
  func.func @transform_52(%arg0: i32) -> (i32, i32) {
    %c0_i32 = arith.constant 0 : i32
    %c0_i32_0 = arith.constant 0 : i32
    %c0_i32_1 = arith.constant 0 : i32
    return %c0_i32, %c0_i32_0 : i32, i32
  }
  func.func @transform_53(%arg0: i32) -> (i32, i32) {
    %c0_i32 = arith.constant 0 : i32
    %c0_i32_0 = arith.constant 0 : i32
    %c0_i32_1 = arith.constant 0 : i32
    return %c0_i32, %c0_i32_0 : i32, i32
  }
  func.func @transform_54(%arg0: i32) -> (i32, i32, i32) {
    %c0_i32 = arith.constant 0 : i32
    %c0_i32_0 = arith.constant 0 : i32
    %c0_i32_1 = arith.constant 0 : i32
    return %arg0, %c0_i32, %c0_i32_0 : i32, i32, i32
  }
  func.func @transform_55(%arg0: i32) -> (i32, i32, i32) {
    %c0_i32 = arith.constant 0 : i32
    %c0_i32_0 = arith.constant 0 : i32
    %c0_i32_1 = arith.constant 0 : i32
    return %arg0, %c0_i32, %c0_i32_0 : i32, i32, i32
  }
}

</mosaic_0001>

<llo_original>
// kernel: gnn_diffpool_forward.1
$region0: #{gnn_diffpool_forward.1}
  #allocation0 [shape = 'u32[]', space=smem, size = 0x4, offset = 0x4, fixed_abs, tag = 'smem constant byte address 0x4 - core index']
  #allocation1 [shape = 'u32[72,128]{1,0:T(1,128)}', space=vmem, size = 0x9000, scoped, tag = 'internal scratch']
  #allocation2 [shape = 'f32[1,1]{1,0:T(1,128)S(1)}', space=vmem, size = 0x200, scoped, tag = 'scoped memory for gnn_diffpool_forward.1']
  %s0 = inlined_call_operand.smem [shape: u32[56], index: -1, kind: input, shape index: {}]
  %s1 = sld [smem:[%s0]]
  %s2 = scalar_lea.smem %s0, 1
  %s3 = sld [smem:[%s2]]
  %s4 = scalar_lea.smem %s0, 2
  %s5 = sld [smem:[%s4]]
  %s6 = scalar_lea.smem %s0, 3
  %s7 = sld [smem:[%s6]]
  %s8 = scalar_lea.smem %s0, 4
  %s9 = sld [smem:[%s8]]
  %s10 = scalar_lea.smem %s0, 5
  %s11 = sld [smem:[%s10]]
  %s12 = scalar_lea.smem %s0, 6
  %s13 = sld [smem:[%s12]]
  %s14 = scalar_lea.smem %s0, 7
  %s15 = sld [smem:[%s14]]
  %s16 = scalar_lea.smem %s0, 8
  %s17 = sld [smem:[%s16]]
  %s18 = scalar_lea.smem %s0, 9
  %s19 = sld [smem:[%s18]]
  %s20 = scalar_lea.smem %s0, 10
  %s21 = sld [smem:[%s20]]
  %s22 = scalar_lea.smem %s0, 11
  %s23 = sld [smem:[%s22]]
  %s24 = scalar_lea.smem %s0, 12
  %s25 = sld [smem:[%s24]]
  %s26 = scalar_lea.smem %s0, 13
  %s27 = sld [smem:[%s26]]
  %s28 = scalar_lea.smem %s0, 14
  %s29 = sld [smem:[%s28]]
  %s30 = scalar_lea.smem %s0, 15
  %s31 = sld [smem:[%s30]]
  %s32 = scalar_lea.smem %s0, 16
  %s33 = sld [smem:[%s32]]
  %s34 = scalar_lea.smem %s0, 17
  %s35 = sld [smem:[%s34]]
  %s36 = scalar_lea.smem %s0, 18
  %s37 = sld [smem:[%s36]]
  %s38 = scalar_lea.smem %s0, 19
  %s39 = sld [smem:[%s38]]
  %s40 = scalar_lea.smem %s0, 20
  %s41 = sld [smem:[%s40]]
  %s42 = scalar_lea.smem %s0, 21
  %s43 = sld [smem:[%s42]]
  %s44 = scalar_lea.smem %s0, 22
  %s45 = sld [smem:[%s44]]
  %s46 = scalar_lea.smem %s0, 23
  %s47 = sld [smem:[%s46]]
  %s48 = scalar_lea.smem %s0, 24
  %s49 = sld [smem:[%s48]]
  %s50 = scalar_lea.smem %s0, 25
  %s51 = sld [smem:[%s50]]
  %s52 = scalar_lea.smem %s0, 26
  %s53 = sld [smem:[%s52]]
  %s54 = scalar_lea.smem %s0, 27
  %s55 = sld [smem:[%s54]]
  %s56 = scalar_lea.smem %s0, 28
  %s57 = sld [smem:[%s56]]
  %s58 = scalar_lea.smem %s0, 29
  %s59 = sld [smem:[%s58]]
  %s60 = scalar_lea.smem %s0, 30
  %s61 = sld [smem:[%s60]]
  %s62 = scalar_lea.smem %s0, 31
  %s63 = sld [smem:[%s62]]
  %s64 = scalar_lea.smem %s0, 32
  %s65 = sld [smem:[%s64]]
  %s66 = scalar_lea.smem %s0, 33
  %s67 = sld [smem:[%s66]]
  %s68 = scalar_lea.smem %s0, 34
  %s69 = sld [smem:[%s68]]
  %s70 = scalar_lea.smem %s0, 35
  %s71 = sld [smem:[%s70]]
  %s72 = scalar_lea.smem %s0, 36
  %s73 = sld [smem:[%s72]]
  %s74 = scalar_lea.smem %s0, 37
  %s75 = sld [smem:[%s74]]
  %s76 = scalar_lea.smem %s0, 38
  %s77 = sld [smem:[%s76]]
  %s78 = scalar_lea.smem %s0, 39
  %s79 = sld [smem:[%s78]]
  %s80 = scalar_lea.smem %s0, 40
  %s81 = sld [smem:[%s80]]
  %s82 = scalar_lea.smem %s0, 41
  %s83 = sld [smem:[%s82]]
  %s84 = scalar_lea.smem %s0, 42
  %s85 = sld [smem:[%s84]]
  %s86 = scalar_lea.smem %s0, 43
  %s87 = sld [smem:[%s86]]
  %s88 = scalar_lea.smem %s0, 44
  %s89 = sld [smem:[%s88]]
  %s90 = scalar_lea.smem %s0, 45
  %s91 = sld [smem:[%s90]]
  %s92 = scalar_lea.smem %s0, 46
  %s93 = sld [smem:[%s92]]
  %s94 = scalar_lea.smem %s0, 47
  %s95 = sld [smem:[%s94]]
  %s96 = scalar_lea.smem %s0, 48
  %s97 = sld [smem:[%s96]]
  %s98 = scalar_lea.smem %s0, 49
  %s99 = sld [smem:[%s98]]
  %s100 = scalar_lea.smem %s0, 50
  %s101 = sld [smem:[%s100]]
  %s102 = scalar_lea.smem %s0, 51
  %s103 = sld [smem:[%s102]]
  %s104 = scalar_lea.smem %s0, 52
  %s105 = sld [smem:[%s104]]
  %s106 = scalar_lea.smem %s0, 53
  %s107 = sld [smem:[%s106]]
  %s108 = scalar_lea.smem %s0, 54
  %s109 = sld [smem:[%s108]]
  %s110 = scalar_lea.smem %s0, 55
  %s111 = sld [smem:[%s110]]
  %112 = xla_tuple %s109, %s111
  %s113 = sld [smem:[#allocation0]]
  $region338: #{gnn_diffpool_forward.1} parent=0
    _
  %s115 = ssub.s32 1, %s113
  %s116 = scalar_select 0, %s115, %s113
  %v117 = vstv %s107
  %118 = vst [vmem:[#allocation2] sm:$0x1] %v117
  $region1: #{gnn_diffpool_forward.1} parent=0
    #allocation3 [shape = 'u8[8192]{0}', space=vmem, size = 0x2000, scoped, tag = 'input window, operand 6, single buffered']
    #allocation4 [shape = 's32[1]{0}', space=sflag, size = 0x4, scoped, tag = 'scoped memory for gnn_diffpool_forward.1']
    #allocation5 [shape = 'u8[8192]{0}', space=vmem, size = 0x2000, scoped, tag = 'input window, operand 8, single buffered']
    #allocation6 [shape = 's32[1]{0}', space=sflag, size = 0x4, scoped, tag = 'scoped memory for gnn_diffpool_forward.1']
    #allocation7 [shape = 'u8[2048]{0}', space=vmem, size = 0x800, scoped, tag = 'input window, operand 12, single buffered']
    #allocation8 [shape = 'u8[512]{0}', space=vmem, size = 0x400, scoped, tag = 'input window, operand 17, single buffered']
    #allocation9 [shape = 's32[1]{0}', space=sflag, size = 0x4, scoped, tag = 'scoped memory for gnn_diffpool_forward.1']
    #allocation10 [shape = 'u8[512]{0}', space=vmem, size = 0x400, scoped, tag = 'input window, operand 19, single buffered']
    #allocation11 [shape = 'u8[512]{0}', space=vmem, size = 0x400, scoped, tag = 'input window, operand 21, single buffered']
    #allocation12 [shape = 's32[1]{0}', space=sflag, size = 0x4, scoped, tag = 'scoped memory for gnn_diffpool_forward.1']
    #allocation13 [shape = 'u8[8192]{0}', space=vmem, size = 0x2000, scoped, tag = 'input window, operand 22, single buffered']
    #allocation14 [shape = 'u8[512]{0}', space=vmem, size = 0x400, scoped, tag = 'input window, operand 23, single buffered']
    #allocation15 [shape = 's32[1]{0}', space=sflag, size = 0x4, scoped, tag = 'scoped memory for gnn_diffpool_forward.1']
    #allocation16 [shape = 'u8[8192]{0}', space=vmem, size = 0x2000, scoped, tag = 'input window, operand 24, single buffered']
    #allocation17 [shape = 'u8[512]{0}', space=vmem, size = 0x400, scoped, tag = 'input window, operand 25, single buffered']
    #allocation18 [shape = 's32[1]{0}', space=sflag, size = 0x4, scoped, tag = 'scoped memory for gnn_diffpool_forward.1']
    #allocation19 [shape = 'u8[512]{0}', space=vmem, size = 0x400, scoped, tag = 'input window, operand 27, single buffered']
    #allocation20 [shape = 'u8[512]{0}', space=vmem, size = 0x400, scoped, tag = 'input window, operand 29, single buffered']
    #allocation21 [shape = 's32[1]{0}', space=sflag, size = 0x4, scoped, tag = 'scoped memory for gnn_diffpool_forward.1']
    #allocation22 [shape = 'u8[512]{0}', space=vmem, size = 0x400, scoped, tag = 'input window, operand 31, single buffered']
    #allocation23 [shape = 'u8[512]{0}', space=vmem, size = 0x400, scoped, tag = 'input window, operand 33, single buffered']
    #allocation24 [shape = 's32[1]{0}', space=sflag, size = 0x4, scoped, tag = 'scoped memory for gnn_diffpool_forward.1']
    #allocation25 [shape = 'u8[512]{0}', space=vmem, size = 0x400, scoped, tag = 'input window, operand 35, single buffered']
    #allocation26 [shape = 'u8[512]{0}', space=vmem, size = 0x400, scoped, tag = 'input window, operand 37, single buffered']
    #allocation27 [shape = 's32[1]{0}', space=sflag, size = 0x4, scoped, tag = 'scoped memory for gnn_diffpool_forward.1']
    #allocation28 [shape = 'u8[512]{0}', space=vmem, size = 0x400, scoped, tag = 'input window, operand 39, single buffered']
    #allocation29 [shape = 'u8[8192]{0}', space=vmem, size = 0x2000, scoped, tag = 'input window, operand 40, single buffered']
    #allocation30 [shape = 's32[1]{0}', space=sflag, size = 0x4, scoped, tag = 'scoped memory for gnn_diffpool_forward.1']
    #allocation31 [shape = 'u8[16384]{0}', space=vmem, size = 0x4000, scoped, tag = 'input window, operand 44, single buffered']
    #allocation32 [shape = 'u8[512]{0}', space=vmem, size = 0x400, scoped, tag = 'input window, operand 45, single buffered']
    #allocation33 [shape = 's32[1]{0}', space=sflag, size = 0x4, scoped, tag = 'scoped memory for gnn_diffpool_forward.1']
    #allocation34 [shape = 'u8[16384]{0}', space=vmem, size = 0x4000, scoped, tag = 'input window, operand 46, single buffered']
    #allocation35 [shape = 'u8[512]{0}', space=vmem, size = 0x400, scoped, tag = 'input window, operand 47, single buffered']
    #allocation36 [shape = 's32[1]{0}', space=sflag, size = 0x4, scoped, tag = 'scoped memory for gnn_diffpool_forward.1']
    #allocation37 [shape = 'u8[16384]{0}', space=vmem, size = 0x4000, scoped, tag = 'input window, operand 48, single buffered']
    #allocation38 [shape = 'u8[512]{0}', space=vmem, size = 0x400, scoped, tag = 'input window, operand 49, single buffered']
    #allocation39 [shape = 's32[1]{0}', space=sflag, size = 0x4, scoped, tag = 'scoped memory for gnn_diffpool_forward.1']
    #allocation40 [shape = 'u8[16384]{0}', space=vmem, size = 0x4000, scoped, tag = 'input window, operand 50, single buffered']
    #allocation41 [shape = 'u8[512]{0}', space=vmem, size = 0x400, scoped, tag = 'input window, operand 51, single buffered']
    #allocation42 [shape = 's32[1]{0}', space=sflag, size = 0x4, scoped, tag = 'scoped memory for gnn_diffpool_forward.1']
    %119 = vsyncpa [#allocation4], 0
    %120 = vsyncpa [#allocation6], 0
    %121 = vsyncpa [#allocation9], 0
    %122 = vsyncpa [#allocation12], 0
    %123 = vsyncpa [#allocation15], 0
    %124 = vsyncpa [#allocation18], 0
    %125 = vsyncpa [#allocation21], 0
    %126 = vsyncpa [#allocation24], 0
    %127 = vsyncpa [#allocation27], 0
    %128 = vsyncpa [#allocation30], 0
    %129 = vsyncpa [#allocation33], 0
    %130 = vsyncpa [#allocation36], 0
    %131 = vsyncpa [#allocation39], 0
    %132 = vsyncpa [#allocation42], 0
    // Predicated region
    $region2: #{gnn_diffpool_forward.1} parent=1 // pred_check
      _
    $region3: #{gnn_diffpool_forward.1} parent=1 // pred_check_branch
      %134 = sbr.rel (0) target = $region5
    $region4: #{gnn_diffpool_forward.1} parent=1 // pred_region
      _
    $region5: #{gnn_diffpool_forward.1} parent=1 // pred_fallthru
      _
    // Predicated region
    $region6: #{gnn_diffpool_forward.1} parent=1 // pred_check
      _
    $region7: #{gnn_diffpool_forward.1} parent=1 // pred_check_branch
      %136 = sbr.rel (0) target = $region9
    $region8: #{gnn_diffpool_forward.1} parent=1 // pred_region
      _
    $region9: #{gnn_diffpool_forward.1} parent=1 // pred_fallthru
      _
    // Predicated region
    $region10: #{gnn_diffpool_forward.1} parent=1 // pred_check
      _
    $region11: #{gnn_diffpool_forward.1} parent=1 // pred_check_branch
      %138 = sbr.rel (0) target = $region13
    $region12: #{gnn_diffpool_forward.1} parent=1 // pred_region
      _
    $region13: #{gnn_diffpool_forward.1} parent=1 // pred_fallthru
      _
    // Predicated region
    $region14: #{gnn_diffpool_forward.1} parent=1 // pred_check
      _
    $region15: #{gnn_diffpool_forward.1} parent=1 // pred_check_branch
      %140 = sbr.rel (0) target = $region17
    $region16: #{gnn_diffpool_forward.1} parent=1 // pred_region
      _
    $region17: #{gnn_diffpool_forward.1} parent=1 // pred_fallthru
      _
    // Predicated region
    $region18: #{gnn_diffpool_forward.1} parent=1 // pred_check
      _
    $region19: #{gnn_diffpool_forward.1} parent=1 // pred_check_branch
      %142 = sbr.rel (0) target = $region21
    $region20: #{gnn_diffpool_forward.1} parent=1 // pred_region
      _
    $region21: #{gnn_diffpool_forward.1} parent=1 // pred_fallthru
      _
    // Predicated region
    $region22: #{gnn_diffpool_forward.1} parent=1 // pred_check
      _
    $region23: #{gnn_diffpool_forward.1} parent=1 // pred_check_branch
      %144 = sbr.rel (0) target = $region25
    $region24: #{gnn_diffpool_forward.1} parent=1 // pred_region
      _
    $region25: #{gnn_diffpool_forward.1} parent=1 // pred_fallthru
      _
    // Predicated region
    $region26: #{gnn_diffpool_forward.1} parent=1 // pred_check
      _
    $region27: #{gnn_diffpool_forward.1} parent=1 // pred_check_branch
      %146 = sbr.rel (0) target = $region29
    $region28: #{gnn_diffpool_forward.1} parent=1 // pred_region
      %148 = vsyncadd [#allocation4], 0
      %s149 = sshll.u32 %s13, 4
      %s150 = int_to_ptr.hbm [resolvable:$true] %s149
      %s151 = sshll.u32 [#allocation3], 4
      %s152 = int_to_ptr.vmem [resolvable:$true] %s151
      %157 = dma.hbm_to_vmem [thread:$0]  %s150, 256, %s152, [#allocation4], 128, 128, 8
    $region29: #{gnn_diffpool_forward.1} parent=1 // pred_fallthru
      _
    // Predicated region
    $region30: #{gnn_diffpool_forward.1} parent=1 // pred_check
      _
    $region31: #{gnn_diffpool_forward.1} parent=1 // pred_check_branch
      %159 = sbr.rel (0) target = $region33
    $region32: #{gnn_diffpool_forward.1} parent=1 // pred_region
      _
    $region33: #{gnn_diffpool_forward.1} parent=1 // pred_fallthru
      _
    // Predicated region
    $region34: #{gnn_diffpool_forward.1} parent=1 // pred_check
      _
    $region35: #{gnn_diffpool_forward.1} parent=1 // pred_check_branch
      %161 = sbr.rel (0) target = $region37
    $region36: #{gnn_diffpool_forward.1} parent=1 // pred_region
      %163 = vsyncadd [#allocation6], 0
      %s164 = sshll.u32 %s17, 4
      %s165 = int_to_ptr.hbm [resolvable:$true] %s164
      %s166 = sshll.u32 [#allocation5], 4
      %s167 = int_to_ptr.vmem [resolvable:$true] %s166
      %172 = dma.hbm_to_vmem [thread:$0]  %s165, 256, %s167, [#allocation6], 128, 128, 8
    $region37: #{gnn_diffpool_forward.1} parent=1 // pred_fallthru
      _
    // Predicated region
    $region38: #{gnn_diffpool_forward.1} parent=1 // pred_check
      _
    $region39: #{gnn_diffpool_forward.1} parent=1 // pred_check_branch
      %174 = sbr.rel (0) target = $region41
    $region40: #{gnn_diffpool_forward.1} parent=1 // pred_region
      _
    $region41: #{gnn_diffpool_forward.1} parent=1 // pred_fallthru
      _
    // Predicated region
    $region42: #{gnn_diffpool_forward.1} parent=1 // pred_check
      _
    $region43: #{gnn_diffpool_forward.1} parent=1 // pred_check_branch
      %176 = sbr.rel (0) target = $region45
    $region44: #{gnn_diffpool_forward.1} parent=1 // pred_region
      _
    $region45: #{gnn_diffpool_forward.1} parent=1 // pred_fallthru
      _
    // Predicated region
    $region46: #{gnn_diffpool_forward.1} parent=1 // pred_check
      _
    $region47: #{gnn_diffpool_forward.1} parent=1 // pred_check_branch
      %178 = sbr.rel (0) target = $region49
    $region48: #{gnn_diffpool_forward.1} parent=1 // pred_region
      _
    $region49: #{gnn_diffpool_forward.1} parent=1 // pred_fallthru
      _
    // Predicated region
    $region50: #{gnn_diffpool_forward.1} parent=1 // pred_check
      _
    $region51: #{gnn_diffpool_forward.1} parent=1 // pred_check_branch
      %180 = sbr.rel (0) target = $region53
    $region52: #{gnn_diffpool_forward.1} parent=1 // pred_region
      %182 = vsyncadd [#allocation6], 0
      %s184 = sshll.u32 %s25, 4
      %s185 = int_to_ptr.hbm [resolvable:$true] %s184
      %s186 = sshll.u32 [#allocation7], 4
      %s187 = int_to_ptr.vmem [resolvable:$true] %s186
      %189 = dma.hbm_to_vmem [thread:$0]  %s185, 64, %s187, [#allocation6]
    $region53: #{gnn_diffpool_forward.1} parent=1 // pred_fallthru
      _
    // Predicated region
    $region54: #{gnn_diffpool_forward.1} parent=1 // pred_check
      _
    $region55: #{gnn_diffpool_forward.1} parent=1 // pred_check_branch
      %191 = sbr.rel (0) target = $region57
    $region56: #{gnn_diffpool_forward.1} parent=1 // pred_region
      _
    $region57: #{gnn_diffpool_forward.1} parent=1 // pred_fallthru
      _
    // Predicated region
    $region58: #{gnn_diffpool_forward.1} parent=1 // pred_check
      _
    $region59: #{gnn_diffpool_forward.1} parent=1 // pred_check_branch
      %193 = sbr.rel (0) target = $region61
    $region60: #{gnn_diffpool_forward.1} parent=1 // pred_region
      _
    $region61: #{gnn_diffpool_forward.1} parent=1 // pred_fallthru
      _
    // Predicated region
    $region62: #{gnn_diffpool_forward.1} parent=1 // pred_check
      _
    $region63: #{gnn_diffpool_forward.1} parent=1 // pred_check_branch
      %195 = sbr.rel (0) target = $region65
    $region64: #{gnn_diffpool_forward.1} parent=1 // pred_region
      _
    $region65: #{gnn_diffpool_forward.1} parent=1 // pred_fallthru
      _
    // Predicated region
    $region66: #{gnn_diffpool_forward.1} parent=1 // pred_check
      _
    $region67: #{gnn_diffpool_forward.1} parent=1 // pred_check_branch
      %197 = sbr.rel (0) target = $region69
    $region68: #{gnn_diffpool_forward.1} parent=1 // pred_region
      _
    $region69: #{gnn_diffpool_forward.1} parent=1 // pred_fallthru
      _
    // Predicated region
    $region70: #{gnn_diffpool_forward.1} parent=1 // pred_check
      _
    $region71: #{gnn_diffpool_forward.1} parent=1 // pred_check_branch
      %199 = sbr.rel (0) target = $region73
    $region72: #{gnn_diffpool_forward.1} parent=1 // pred_region
      %201 = vsyncadd [#allocation9], 0
      %s203 = sshll.u32 %s35, 4
      %s204 = int_to_ptr.hbm [resolvable:$true] %s203
      %s205 = sshll.u32 [#allocation8], 4
      %s206 = int_to_ptr.vmem [resolvable:$true] %s205
      %208 = dma.hbm_to_vmem [thread:$0]  %s204, 16, %s206, [#allocation9]
    $region73: #{gnn_diffpool_forward.1} parent=1 // pred_fallthru
      _
    // Predicated region
    $region74: #{gnn_diffpool_forward.1} parent=1 // pred_check
      _
    $region75: #{gnn_diffpool_forward.1} parent=1 // pred_check_branch
      %210 = sbr.rel (0) target = $region77
    $region76: #{gnn_diffpool_forward.1} parent=1 // pred_region
      _
    $region77: #{gnn_diffpool_forward.1} parent=1 // pred_fallthru
      _
    // Predicated region
    $region78: #{gnn_diffpool_forward.1} parent=1 // pred_check
      _
    $region79: #{gnn_diffpool_forward.1} parent=1 // pred_check_branch
      %212 = sbr.rel (0) target = $region81
    $region80: #{gnn_diffpool_forward.1} parent=1 // pred_region
      %214 = vsyncadd [#allocation9], 0
      %s216 = sshll.u32 %s39, 4
      %s217 = int_to_ptr.hbm [resolvable:$true] %s216
      %s218 = sshll.u32 [#allocation10], 4
      %s219 = int_to_ptr.vmem [resolvable:$true] %s218
      %221 = dma.hbm_to_vmem [thread:$0]  %s217, 16, %s219, [#allocation9]
    $region81: #{gnn_diffpool_forward.1} parent=1 // pred_fallthru
      _
    // Predicated region
    $region82: #{gnn_diffpool_forward.1} parent=1 // pred_check
      _
    $region83: #{gnn_diffpool_forward.1} parent=1 // pred_check_branch
      %223 = sbr.rel (0) target = $region85
    $region84: #{gnn_diffpool_forward.1} parent=1 // pred_region
      _
    $region85: #{gnn_diffpool_forward.1} parent=1 // pred_fallthru
      _
    // Predicated region
    $region86: #{gnn_diffpool_forward.1} parent=1 // pred_check
      _
    $region87: #{gnn_diffpool_forward.1} parent=1 // pred_check_branch
      %225 = sbr.rel (0) target = $region89
    $region88: #{gnn_diffpool_forward.1} parent=1 // pred_region
      %227 = vsyncadd [#allocation12], 0
      %s229 = sshll.u32 %s43, 4
      %s230 = int_to_ptr.hbm [resolvable:$true] %s229
      %s231 = sshll.u32 [#allocation11], 4
      %s232 = int_to_ptr.vmem [resolvable:$true] %s231
      %234 = dma.hbm_to_vmem [thread:$0]  %s230, 16, %s232, [#allocation12]
    $region89: #{gnn_diffpool_forward.1} parent=1 // pred_fallthru
      _
    // Predicated region
    $region90: #{gnn_diffpool_forward.1} parent=1 // pred_check
      _
    $region91: #{gnn_diffpool_forward.1} parent=1 // pred_check_branch
      %236 = sbr.rel (0) target = $region93
    $region92: #{gnn_diffpool_forward.1} parent=1 // pred_region
      %238 = vsyncadd [#allocation12], 0
      %s239 = sshll.u32 %s45, 4
      %s240 = int_to_ptr.hbm [resolvable:$true] %s239
      %s241 = sshll.u32 [#allocation13], 4
      %s242 = int_to_ptr.vmem [resolvable:$true] %s241
      %247 = dma.hbm_to_vmem [thread:$0]  %s240, 256, %s242, [#allocation12], 128, 128, 8
    $region93: #{gnn_diffpool_forward.1} parent=1 // pred_fallthru
      _
    // Predicated region
    $region94: #{gnn_diffpool_forward.1} parent=1 // pred_check
      _
    $region95: #{gnn_diffpool_forward.1} parent=1 // pred_check_branch
      %249 = sbr.rel (0) target = $region97
    $region96: #{gnn_diffpool_forward.1} parent=1 // pred_region
      %251 = vsyncadd [#allocation15], 0
      %s253 = sshll.u32 %s47, 4
      %s254 = int_to_ptr.hbm [resolvable:$true] %s253
      %s255 = sshll.u32 [#allocation14], 4
      %s256 = int_to_ptr.vmem [resolvable:$true] %s255
      %258 = dma.hbm_to_vmem [thread:$0]  %s254, 16, %s256, [#allocation15]
    $region97: #{gnn_diffpool_forward.1} parent=1 // pred_fallthru
      _
    // Predicated region
    $region98: #{gnn_diffpool_forward.1} parent=1 // pred_check
      _
    $region99: #{gnn_diffpool_forward.1} parent=1 // pred_check_branch
      %260 = sbr.rel (0) target = $region101
    $region100: #{gnn_diffpool_forward.1} parent=1 // pred_region
      %262 = vsyncadd [#allocation15], 0
      %s263 = sshll.u32 %s49, 4
      %s264 = int_to_ptr.hbm [resolvable:$true] %s263
      %s265 = sshll.u32 [#allocation16], 4
      %s266 = int_to_ptr.vmem [resolvable:$true] %s265
      %271 = dma.hbm_to_vmem [thread:$0]  %s264, 256, %s266, [#allocation15], 128, 128, 8
    $region101: #{gnn_diffpool_forward.1} parent=1 // pred_fallthru
      _
    // Predicated region
    $region102: #{gnn_diffpool_forward.1} parent=1 // pred_check
      _
    $region103: #{gnn_diffpool_forward.1} parent=1 // pred_check_branch
      %273 = sbr.rel (0) target = $region105
    $region104: #{gnn_diffpool_forward.1} parent=1 // pred_region
      %275 = vsyncadd [#allocation18], 0
      %s277 = sshll.u32 %s51, 4
      %s278 = int_to_ptr.hbm [resolvable:$true] %s277
      %s279 = sshll.u32 [#allocation17], 4
      %s280 = int_to_ptr.vmem [resolvable:$true] %s279
      %282 = dma.hbm_to_vmem [thread:$0]  %s278, 16, %s280, [#allocation18]
    $region105: #{gnn_diffpool_forward.1} parent=1 // pred_fallthru
      _
    // Predicated region
    $region106: #{gnn_diffpool_forward.1} parent=1 // pred_check
      _
    $region107: #{gnn_diffpool_forward.1} parent=1 // pred_check_branch
      %284 = sbr.rel (0) target = $region109
    $region108: #{gnn_diffpool_forward.1} parent=1 // pred_region
      _
    $region109: #{gnn_diffpool_forward.1} parent=1 // pred_fallthru
      _
    // Predicated region
    $region110: #{gnn_diffpool_forward.1} parent=1 // pred_check
      _
    $region111: #{gnn_diffpool_forward.1} parent=1 // pred_check_branch
      %286 = sbr.rel (0) target = $region113
    $region112: #{gnn_diffpool_forward.1} parent=1 // pred_region
      %288 = vsyncadd [#allocation18], 0
      %s290 = sshll.u32 %s55, 4
      %s291 = int_to_ptr.hbm [resolvable:$true] %s290
      %s292 = sshll.u32 [#allocation19], 4
      %s293 = int_to_ptr.vmem [resolvable:$true] %s292
      %295 = dma.hbm_to_vmem [thread:$0]  %s291, 16, %s293, [#allocation18]
    $region113: #{gnn_diffpool_forward.1} parent=1 // pred_fallthru
      _
    // Predicated region
    $region114: #{gnn_diffpool_forward.1} parent=1 // pred_check
      _
    $region115: #{gnn_diffpool_forward.1} parent=1 // pred_check_branch
      %297 = sbr.rel (0) target = $region117
    $region116: #{gnn_diffpool_forward.1} parent=1 // pred_region
      _
    $region117: #{gnn_diffpool_forward.1} parent=1 // pred_fallthru
      _
    // Predicated region
    $region118: #{gnn_diffpool_forward.1} parent=1 // pred_check
      _
    $region119: #{gnn_diffpool_forward.1} parent=1 // pred_check_branch
      %299 = sbr.rel (0) target = $region121
    $region120: #{gnn_diffpool_forward.1} parent=1 // pred_region
      %301 = vsyncadd [#allocation21], 0
      %s303 = sshll.u32 %s59, 4
      %s304 = int_to_ptr.hbm [resolvable:$true] %s303
      %s305 = sshll.u32 [#allocation20], 4
      %s306 = int_to_ptr.vmem [resolvable:$true] %s305
      %308 = dma.hbm_to_vmem [thread:$0]  %s304, 16, %s306, [#allocation21]
    $region121: #{gnn_diffpool_forward.1} parent=1 // pred_fallthru
      _
    // Predicated region
    $region122: #{gnn_diffpool_forward.1} parent=1 // pred_check
      _
    $region123: #{gnn_diffpool_forward.1} parent=1 // pred_check_branch
      %310 = sbr.rel (0) target = $region125
    $region124: #{gnn_diffpool_forward.1} parent=1 // pred_region
      _
    $region125: #{gnn_diffpool_forward.1} parent=1 // pred_fallthru
      _
    // Predicated region
    $region126: #{gnn_diffpool_forward.1} parent=1 // pred_check
      _
    $region127: #{gnn_diffpool_forward.1} parent=1 // pred_check_branch
      %312 = sbr.rel (0) target = $region129
    $region128: #{gnn_diffpool_forward.1} parent=1 // pred_region
      %314 = vsyncadd [#allocation21], 0
      %s316 = sshll.u32 %s63, 4
      %s317 = int_to_ptr.hbm [resolvable:$true] %s316
      %s318 = sshll.u32 [#allocation22], 4
      %s319 = int_to_ptr.vmem [resolvable:$true] %s318
      %321 = dma.hbm_to_vmem [thread:$0]  %s317, 16, %s319, [#allocation21]
    $region129: #{gnn_diffpool_forward.1} parent=1 // pred_fallthru
      _
    // Predicated region
    $region130: #{gnn_diffpool_forward.1} parent=1 // pred_check
      _
    $region131: #{gnn_diffpool_forward.1} parent=1 // pred_check_branch
      %323 = sbr.rel (0) target = $region133
    $region132: #{gnn_diffpool_forward.1} parent=1 // pred_region
      _
    $region133: #{gnn_diffpool_forward.1} parent=1 // pred_fallthru
      _
    // Predicated region
    $region134: #{gnn_diffpool_forward.1} parent=1 // pred_check
      _
    $region135: #{gnn_diffpool_forward.1} parent=1 // pred_check_branch
      %325 = sbr.rel (0) target = $region137
    $region136: #{gnn_diffpool_forward.1} parent=1 // pred_region
      %327 = vsyncadd [#allocation24], 0
      %s329 = sshll.u32 %s67, 4
      %s330 = int_to_ptr.hbm [resolvable:$true] %s329
      %s331 = sshll.u32 [#allocation23], 4
      %s332 = int_to_ptr.vmem [resolvable:$true] %s331
      %334 = dma.hbm_to_vmem [thread:$0]  %s330, 16, %s332, [#allocation24]
    $region137: #{gnn_diffpool_forward.1} parent=1 // pred_fallthru
      _
    // Predicated region
    $region138: #{gnn_diffpool_forward.1} parent=1 // pred_check
      _
    $region139: #{gnn_diffpool_forward.1} parent=1 // pred_check_branch
      %336 = sbr.rel (0) target = $region141
    $region140: #{gnn_diffpool_forward.1} parent=1 // pred_region
      _
    $region141: #{gnn_diffpool_forward.1} parent=1 // pred_fallthru
      _
    // Predicated region
    $region142: #{gnn_diffpool_forward.1} parent=1 // pred_check
      _
    $region143: #{gnn_diffpool_forward.1} parent=1 // pred_check_branch
      %338 = sbr.rel (0) target = $region145
    $region144: #{gnn_diffpool_forward.1} parent=1 // pred_region
      %340 = vsyncadd [#allocation24], 0
      %s342 = sshll.u32 %s71, 4
      %s343 = int_to_ptr.hbm [resolvable:$true] %s342
      %s344 = sshll.u32 [#allocation25], 4
      %s345 = int_to_ptr.vmem [resolvable:$true] %s344
      %347 = dma.hbm_to_vmem [thread:$0]  %s343, 16, %s345, [#allocation24]
    $region145: #{gnn_diffpool_forward.1} parent=1 // pred_fallthru
      _
    // Predicated region
    $region146: #{gnn_diffpool_forward.1} parent=1 // pred_check
      _
    $region147: #{gnn_diffpool_forward.1} parent=1 // pred_check_branch
      %349 = sbr.rel (0) target = $region149
    $region148: #{gnn_diffpool_forward.1} parent=1 // pred_region
      _
    $region149: #{gnn_diffpool_forward.1} parent=1 // pred_fallthru
      _
    // Predicated region
    $region150: #{gnn_diffpool_forward.1} parent=1 // pred_check
      _
    $region151: #{gnn_diffpool_forward.1} parent=1 // pred_check_branch
      %351 = sbr.rel (0) target = $region153
    $region152: #{gnn_diffpool_forward.1} parent=1 // pred_region
      %353 = vsyncadd [#allocation27], 0
      %s355 = sshll.u32 %s75, 4
      %s356 = int_to_ptr.hbm [resolvable:$true] %s355
      %s357 = sshll.u32 [#allocation26], 4
      %s358 = int_to_ptr.vmem [resolvable:$true] %s357
      %360 = dma.hbm_to_vmem [thread:$0]  %s356, 16, %s358, [#allocation27]
    $region153: #{gnn_diffpool_forward.1} parent=1 // pred_fallthru
      _
    // Predicated region
    $region154: #{gnn_diffpool_forward.1} parent=1 // pred_check
      _
    $region155: #{gnn_diffpool_forward.1} parent=1 // pred_check_branch
      %362 = sbr.rel (0) target = $region157
    $region156: #{gnn_diffpool_forward.1} parent=1 // pred_region
      _
    $region157: #{gnn_diffpool_forward.1} parent=1 // pred_fallthru
      _
    // Predicated region
    $region158: #{gnn_diffpool_forward.1} parent=1 // pred_check
      _
    $region159: #{gnn_diffpool_forward.1} parent=1 // pred_check_branch
      %364 = sbr.rel (0) target = $region161
    $region160: #{gnn_diffpool_forward.1} parent=1 // pred_region
      %366 = vsyncadd [#allocation27], 0
      %s368 = sshll.u32 %s79, 4
      %s369 = int_to_ptr.hbm [resolvable:$true] %s368
      %s370 = sshll.u32 [#allocation28], 4
      %s371 = int_to_ptr.vmem [resolvable:$true] %s370
      %373 = dma.hbm_to_vmem [thread:$0]  %s369, 16, %s371, [#allocation27]
    $region161: #{gnn_diffpool_forward.1} parent=1 // pred_fallthru
      _
    // Predicated region
    $region162: #{gnn_diffpool_forward.1} parent=1 // pred_check
      _
    $region163: #{gnn_diffpool_forward.1} parent=1 // pred_check_branch
      %375 = sbr.rel (0) target = $region165
    $region164: #{gnn_diffpool_forward.1} parent=1 // pred_region
      %377 = vsyncadd [#allocation30], 0
      %s378 = sshll.u32 %s81, 4
      %s379 = int_to_ptr.hbm [resolvable:$true] %s378
      %s380 = sshll.u32 [#allocation29], 4
      %s381 = int_to_ptr.vmem [resolvable:$true] %s380
      %386 = dma.hbm_to_vmem [thread:$0]  %s379, 256, %s381, [#allocation30], 128, 128, 8
    $region165: #{gnn_diffpool_forward.1} parent=1 // pred_fallthru
      _
    // Predicated region
    $region166: #{gnn_diffpool_forward.1} parent=1 // pred_check
      _
    $region167: #{gnn_diffpool_forward.1} parent=1 // pred_check_branch
      %388 = sbr.rel (0) target = $region169
    $region168: #{gnn_diffpool_forward.1} parent=1 // pred_region
      _
    $region169: #{gnn_diffpool_forward.1} parent=1 // pred_fallthru
      _
    // Predicated region
    $region170: #{gnn_diffpool_forward.1} parent=1 // pred_check
      _
    $region171: #{gnn_diffpool_forward.1} parent=1 // pred_check_branch
      %390 = sbr.rel (0) target = $region173
    $region172: #{gnn_diffpool_forward.1} parent=1 // pred_region
      _
    $region173: #{gnn_diffpool_forward.1} parent=1 // pred_fallthru
      _
    // Predicated region
    $region174: #{gnn_diffpool_forward.1} parent=1 // pred_check
      _
    $region175: #{gnn_diffpool_forward.1} parent=1 // pred_check_branch
      %392 = sbr.rel (0) target = $region177
    $region176: #{gnn_diffpool_forward.1} parent=1 // pred_region
      _
    $region177: #{gnn_diffpool_forward.1} parent=1 // pred_fallthru
      _
    // Predicated region
    $region178: #{gnn_diffpool_forward.1} parent=1 // pred_check
      _
    $region179: #{gnn_diffpool_forward.1} parent=1 // pred_check_branch
      %394 = sbr.rel (0) target = $region181
    $region180: #{gnn_diffpool_forward.1} parent=1 // pred_region
      %396 = vsyncadd [#allocation30], 0
      %s397 = sshll.u32 %s89, 4
      %s398 = int_to_ptr.hbm [resolvable:$true] %s397
      %s399 = sshll.u32 [#allocation31], 4
      %s400 = int_to_ptr.vmem [resolvable:$true] %s399
      %405 = dma.hbm_to_vmem [thread:$0]  %s398, 512, %s400, [#allocation30], 128, 128, 8
    $region181: #{gnn_diffpool_forward.1} parent=1 // pred_fallthru
      _
    // Predicated region
    $region182: #{gnn_diffpool_forward.1} parent=1 // pred_check
      _
    $region183: #{gnn_diffpool_forward.1} parent=1 // pred_check_branch
      %407 = sbr.rel (0) target = $region185
    $region184: #{gnn_diffpool_forward.1} parent=1 // pred_region
      %409 = vsyncadd [#allocation33], 0
      %s411 = sshll.u32 %s91, 4
      %s412 = int_to_ptr.hbm [resolvable:$true] %s411
      %s413 = sshll.u32 [#allocation32], 4
      %s414 = int_to_ptr.vmem [resolvable:$true] %s413
      %416 = dma.hbm_to_vmem [thread:$0]  %s412, 16, %s414, [#allocation33]
    $region185: #{gnn_diffpool_forward.1} parent=1 // pred_fallthru
      _
    // Predicated region
    $region186: #{gnn_diffpool_forward.1} parent=1 // pred_check
      _
    $region187: #{gnn_diffpool_forward.1} parent=1 // pred_check_branch
      %418 = sbr.rel (0) target = $region189
    $region188: #{gnn_diffpool_forward.1} parent=1 // pred_region
      %420 = vsyncadd [#allocation33], 0
      %s421 = sshll.u32 %s93, 4
      %s422 = int_to_ptr.hbm [resolvable:$true] %s421
      %s423 = sshll.u32 [#allocation34], 4
      %s424 = int_to_ptr.vmem [resolvable:$true] %s423
      %429 = dma.hbm_to_vmem [thread:$0]  %s422, 512, %s424, [#allocation33], 128, 128, 8
    $region189: #{gnn_diffpool_forward.1} parent=1 // pred_fallthru
      _
    // Predicated region
    $region190: #{gnn_diffpool_forward.1} parent=1 // pred_check
      _
    $region191: #{gnn_diffpool_forward.1} parent=1 // pred_check_branch
      %431 = sbr.rel (0) target = $region193
    $region192: #{gnn_diffpool_forward.1} parent=1 // pred_region
      %433 = vsyncadd [#allocation36], 0
      %s435 = sshll.u32 %s95, 4
      %s436 = int_to_ptr.hbm [resolvable:$true] %s435
      %s437 = sshll.u32 [#allocation35], 4
      %s438 = int_to_ptr.vmem [resolvable:$true] %s437
      %440 = dma.hbm_to_vmem [thread:$0]  %s436, 16, %s438, [#allocation36]
    $region193: #{gnn_diffpool_forward.1} parent=1 // pred_fallthru
      _
    // Predicated region
    $region194: #{gnn_diffpool_forward.1} parent=1 // pred_check
      _
    $region195: #{gnn_diffpool_forward.1} parent=1 // pred_check_branch
      %442 = sbr.rel (0) target = $region197
    $region196: #{gnn_diffpool_forward.1} parent=1 // pred_region
      %444 = vsyncadd [#allocation36], 0
      %s445 = sshll.u32 %s97, 4
      %s446 = int_to_ptr.hbm [resolvable:$true] %s445
      %s447 = sshll.u32 [#allocation37], 4
      %s448 = int_to_ptr.vmem [resolvable:$true] %s447
      %453 = dma.hbm_to_vmem [thread:$0]  %s446, 512, %s448, [#allocation36], 128, 128, 8
    $region197: #{gnn_diffpool_forward.1} parent=1 // pred_fallthru
      _
    // Predicated region
    $region198: #{gnn_diffpool_forward.1} parent=1 // pred_check
      _
    $region199: #{gnn_diffpool_forward.1} parent=1 // pred_check_branch
      %455 = sbr.rel (0) target = $region201
    $region200: #{gnn_diffpool_forward.1} parent=1 // pred_region
      %457 = vsyncadd [#allocation39], 0
      %s459 = sshll.u32 %s99, 4
      %s460 = int_to_ptr.hbm [resolvable:$true] %s459
      %s461 = sshll.u32 [#allocation38], 4
      %s462 = int_to_ptr.vmem [resolvable:$true] %s461
      %464 = dma.hbm_to_vmem [thread:$0]  %s460, 16, %s462, [#allocation39]
    $region201: #{gnn_diffpool_forward.1} parent=1 // pred_fallthru
      _
    // Predicated region
    $region202: #{gnn_diffpool_forward.1} parent=1 // pred_check
      _
    $region203: #{gnn_diffpool_forward.1} parent=1 // pred_check_branch
      %466 = sbr.rel (0) target = $region205
    $region204: #{gnn_diffpool_forward.1} parent=1 // pred_region
      %468 = vsyncadd [#allocation39], 0
      %s469 = sshll.u32 %s101, 4
      %s470 = int_to_ptr.hbm [resolvable:$true] %s469
      %s471 = sshll.u32 [#allocation40], 4
      %s472 = int_to_ptr.vmem [resolvable:$true] %s471
      %477 = dma.hbm_to_vmem [thread:$0]  %s470, 512, %s472, [#allocation39], 128, 128, 8
    $region205: #{gnn_diffpool_forward.1} parent=1 // pred_fallthru
      _
    // Predicated region
    $region206: #{gnn_diffpool_forward.1} parent=1 // pred_check
      _
    $region207: #{gnn_diffpool_forward.1} parent=1 // pred_check_branch
      %479 = sbr.rel (0) target = $region209
    $region208: #{gnn_diffpool_forward.1} parent=1 // pred_region
      %481 = vsyncadd [#allocation42], 0
      %s483 = sshll.u32 %s103, 4
      %s484 = int_to_ptr.hbm [resolvable:$true] %s483
      %s485 = sshll.u32 [#allocation41], 4
      %s486 = int_to_ptr.vmem [resolvable:$true] %s485
      %488 = dma.hbm_to_vmem [thread:$0]  %s484, 16, %s486, [#allocation42]
    $region209: #{gnn_diffpool_forward.1} parent=1 // pred_fallthru
      _
    // Predicated region
    $region210: #{gnn_diffpool_forward.1} parent=1 // pred_check
      _
    $region211: #{gnn_diffpool_forward.1} parent=1 // pred_check_branch
      %490 = sbr.rel (0) target = $region213
    $region212: #{gnn_diffpool_forward.1} parent=1 // pred_region
      _
    $region213: #{gnn_diffpool_forward.1} parent=1 // pred_fallthru
      _
    // Predicated region
    $region214: #{gnn_diffpool_forward.1} parent=1 // pred_check
      _
    $region215: #{gnn_diffpool_forward.1} parent=1 // pred_check_branch
      %492 = sbr.rel (0) target = $region217
    $region216: #{gnn_diffpool_forward.1} parent=1 // pred_region
      _
    $region217: #{gnn_diffpool_forward.1} parent=1 // pred_fallthru
      _
    // Predicated region
    $region218: #{gnn_diffpool_forward.1} parent=1 // pred_check
      _
    $region219: #{gnn_diffpool_forward.1} parent=1 // pred_check_branch
      %494 = sbr.rel (0) target = $region221
    $region220: #{gnn_diffpool_forward.1} parent=1 // pred_region
      %496 = dma.done [#allocation4], 256
    $region221: #{gnn_diffpool_forward.1} parent=1 // pred_fallthru
      _
    // Predicated region
    $region222: #{gnn_diffpool_forward.1} parent=1 // pred_check
      _
    $region223: #{gnn_diffpool_forward.1} parent=1 // pred_check_branch
      %498 = sbr.rel (0) target = $region225
    $region224: #{gnn_diffpool_forward.1} parent=1 // pred_region
      %500 = dma.done [#allocation6], 256
    $region225: #{gnn_diffpool_forward.1} parent=1 // pred_fallthru
      _
    // Predicated region
    $region226: #{gnn_diffpool_forward.1} parent=1 // pred_check
      _
    $region227: #{gnn_diffpool_forward.1} parent=1 // pred_check_branch
      %502 = sbr.rel (0) target = $region229
    $region228: #{gnn_diffpool_forward.1} parent=1 // pred_region
      %504 = dma.done [#allocation6], 64
    $region229: #{gnn_diffpool_forward.1} parent=1 // pred_fallthru
      _
    // Predicated region
    $region230: #{gnn_diffpool_forward.1} parent=1 // pred_check
      _
    $region231: #{gnn_diffpool_forward.1} parent=1 // pred_check_branch
      %506 = sbr.rel (0) target = $region233
    $region232: #{gnn_diffpool_forward.1} parent=1 // pred_region
      %508 = dma.done [#allocation9], 16
    $region233: #{gnn_diffpool_forward.1} parent=1 // pred_fallthru
      _
    // Predicated region
    $region234: #{gnn_diffpool_forward.1} parent=1 // pred_check
      _
    $region235: #{gnn_diffpool_forward.1} parent=1 // pred_check_branch
      %510 = sbr.rel (0) target = $region237
    $region236: #{gnn_diffpool_forward.1} parent=1 // pred_region
      %512 = dma.done [#allocation9], 16
    $region237: #{gnn_diffpool_forward.1} parent=1 // pred_fallthru
      _
    // Predicated region
    $region238: #{gnn_diffpool_forward.1} parent=1 // pred_check
      _
    $region239: #{gnn_diffpool_forward.1} parent=1 // pred_check_branch
      %514 = sbr.rel (0) target = $region241
    $region240: #{gnn_diffpool_forward.1} parent=1 // pred_region
      %516 = dma.done [#allocation12], 16
    $region241: #{gnn_diffpool_forward.1} parent=1 // pred_fallthru
      _
    // Predicated region
    $region242: #{gnn_diffpool_forward.1} parent=1 // pred_check
      _
    $region243: #{gnn_diffpool_forward.1} parent=1 // pred_check_branch
      %518 = sbr.rel (0) target = $region245
    $region244: #{gnn_diffpool_forward.1} parent=1 // pred_region
      %520 = dma.done [#allocation12], 256
    $region245: #{gnn_diffpool_forward.1} parent=1 // pred_fallthru
      _
    // Predicated region
    $region246: #{gnn_diffpool_forward.1} parent=1 // pred_check
      _
    $region247: #{gnn_diffpool_forward.1} parent=1 // pred_check_branch
      %522 = sbr.rel (0) target = $region249
    $region248: #{gnn_diffpool_forward.1} parent=1 // pred_region
      %524 = dma.done [#allocation15], 16
    $region249: #{gnn_diffpool_forward.1} parent=1 // pred_fallthru
      _
    // Predicated region
    $region250: #{gnn_diffpool_forward.1} parent=1 // pred_check
      _
    $region251: #{gnn_diffpool_forward.1} parent=1 // pred_check_branch
      %526 = sbr.rel (0) target = $region253
    $region252: #{gnn_diffpool_forward.1} parent=1 // pred_region
      %528 = dma.done [#allocation15], 256
    $region253: #{gnn_diffpool_forward.1} parent=1 // pred_fallthru
      _
    // Predicated region
    $region254: #{gnn_diffpool_forward.1} parent=1 // pred_check
      _
    $region255: #{gnn_diffpool_forward.1} parent=1 // pred_check_branch
      %530 = sbr.rel (0) target = $region257
    $region256: #{gnn_diffpool_forward.1} parent=1 // pred_region
      %532 = dma.done [#allocation18], 16
    $region257: #{gnn_diffpool_forward.1} parent=1 // pred_fallthru
      _
    // Predicated region
    $region258: #{gnn_diffpool_forward.1} parent=1 // pred_check
      _
    $region259: #{gnn_diffpool_forward.1} parent=1 // pred_check_branch
      %534 = sbr.rel (0) target = $region261
    $region260: #{gnn_diffpool_forward.1} parent=1 // pred_region
      %536 = dma.done [#allocation18], 16
    $region261: #{gnn_diffpool_forward.1} parent=1 // pred_fallthru
      _
    // Predicated region
    $region262: #{gnn_diffpool_forward.1} parent=1 // pred_check
      _
    $region263: #{gnn_diffpool_forward.1} parent=1 // pred_check_branch
      %538 = sbr.rel (0) target = $region265
    $region264: #{gnn_diffpool_forward.1} parent=1 // pred_region
      %540 = dma.done [#allocation21], 16
    $region265: #{gnn_diffpool_forward.1} parent=1 // pred_fallthru
      _
    // Predicated region
    $region266: #{gnn_diffpool_forward.1} parent=1 // pred_check
      _
    $region267: #{gnn_diffpool_forward.1} parent=1 // pred_check_branch
      %542 = sbr.rel (0) target = $region269
    $region268: #{gnn_diffpool_forward.1} parent=1 // pred_region
      %544 = dma.done [#allocation21], 16
    $region269: #{gnn_diffpool_forward.1} parent=1 // pred_fallthru
      _
    // Predicated region
    $region270: #{gnn_diffpool_forward.1} parent=1 // pred_check
      _
    $region271: #{gnn_diffpool_forward.1} parent=1 // pred_check_branch
      %546 = sbr.rel (0) target = $region273
    $region272: #{gnn_diffpool_forward.1} parent=1 // pred_region
      %548 = dma.done [#allocation24], 16
    $region273: #{gnn_diffpool_forward.1} parent=1 // pred_fallthru
      _
    // Predicated region
    $region274: #{gnn_diffpool_forward.1} parent=1 // pred_check
      _
    $region275: #{gnn_diffpool_forward.1} parent=1 // pred_check_branch
      %550 = sbr.rel (0) target = $region277
    $region276: #{gnn_diffpool_forward.1} parent=1 // pred_region
      %552 = dma.done [#allocation24], 16
    $region277: #{gnn_diffpool_forward.1} parent=1 // pred_fallthru
      _
    // Predicated region
    $region278: #{gnn_diffpool_forward.1} parent=1 // pred_check
      _
    $region279: #{gnn_diffpool_forward.1} parent=1 // pred_check_branch
      %554 = sbr.rel (0) target = $region281
    $region280: #{gnn_diffpool_forward.1} parent=1 // pred_region
      %556 = dma.done [#allocation27], 16
    $region281: #{gnn_diffpool_forward.1} parent=1 // pred_fallthru
      _
    // Predicated region
    $region282: #{gnn_diffpool_forward.1} parent=1 // pred_check
      _
    $region283: #{gnn_diffpool_forward.1} parent=1 // pred_check_branch
      %558 = sbr.rel (0) target = $region285
    $region284: #{gnn_diffpool_forward.1} parent=1 // pred_region
      %560 = dma.done [#allocation27], 16
    $region285: #{gnn_diffpool_forward.1} parent=1 // pred_fallthru
      _
    // Predicated region
    $region286: #{gnn_diffpool_forward.1} parent=1 // pred_check
      _
    $region287: #{gnn_diffpool_forward.1} parent=1 // pred_check_branch
      %562 = sbr.rel (0) target = $region289
    $region288: #{gnn_diffpool_forward.1} parent=1 // pred_region
      %564 = dma.done [#allocation30], 256
    $region289: #{gnn_diffpool_forward.1} parent=1 // pred_fallthru
      _
    // Predicated region
    $region290: #{gnn_diffpool_forward.1} parent=1 // pred_check
      _
    $region291: #{gnn_diffpool_forward.1} parent=1 // pred_check_branch
      %566 = sbr.rel (0) target = $region293
    $region292: #{gnn_diffpool_forward.1} parent=1 // pred_region
      %568 = dma.done [#allocation30], 512
    $region293: #{gnn_diffpool_forward.1} parent=1 // pred_fallthru
      _
    // Predicated region
    $region294: #{gnn_diffpool_forward.1} parent=1 // pred_check
      _
    $region295: #{gnn_diffpool_forward.1} parent=1 // pred_check_branch
      %570 = sbr.rel (0) target = $region297
    $region296: #{gnn_diffpool_forward.1} parent=1 // pred_region
      %572 = dma.done [#allocation33], 16
    $region297: #{gnn_diffpool_forward.1} parent=1 // pred_fallthru
      _
    // Predicated region
    $region298: #{gnn_diffpool_forward.1} parent=1 // pred_check
      _
    $region299: #{gnn_diffpool_forward.1} parent=1 // pred_check_branch
      %574 = sbr.rel (0) target = $region301
    $region300: #{gnn_diffpool_forward.1} parent=1 // pred_region
      %576 = dma.done [#allocation33], 512
    $region301: #{gnn_diffpool_forward.1} parent=1 // pred_fallthru
      _
    // Predicated region
    $region302: #{gnn_diffpool_forward.1} parent=1 // pred_check
      _
    $region303: #{gnn_diffpool_forward.1} parent=1 // pred_check_branch
      %578 = sbr.rel (0) target = $region305
    $region304: #{gnn_diffpool_forward.1} parent=1 // pred_region
      %580 = dma.done [#allocation36], 16
    $region305: #{gnn_diffpool_forward.1} parent=1 // pred_fallthru
      _
    // Predicated region
    $region306: #{gnn_diffpool_forward.1} parent=1 // pred_check
      _
    $region307: #{gnn_diffpool_forward.1} parent=1 // pred_check_branch
      %582 = sbr.rel (0) target = $region309
    $region308: #{gnn_diffpool_forward.1} parent=1 // pred_region
      %584 = dma.done [#allocation36], 512
    $region309: #{gnn_diffpool_forward.1} parent=1 // pred_fallthru
      _
    // Predicated region
    $region310: #{gnn_diffpool_forward.1} parent=1 // pred_check
      _
    $region311: #{gnn_diffpool_forward.1} parent=1 // pred_check_branch
      %586 = sbr.rel (0) target = $region313
    $region312: #{gnn_diffpool_forward.1} parent=1 // pred_region
      %588 = dma.done [#allocation39], 16
    $region313: #{gnn_diffpool_forward.1} parent=1 // pred_fallthru
      _
    // Predicated region
    $region314: #{gnn_diffpool_forward.1} parent=1 // pred_check
      _
    $region315: #{gnn_diffpool_forward.1} parent=1 // pred_check_branch
      %590 = sbr.rel (0) target = $region317
    $region316: #{gnn_diffpool_forward.1} parent=1 // pred_region
      %592 = dma.done [#allocation39], 512
    $region317: #{gnn_diffpool_forward.1} parent=1 // pred_fallthru
      _
    // Predicated region
    $region318: #{gnn_diffpool_forward.1} parent=1 // pred_check
      _
    $region319: #{gnn_diffpool_forward.1} parent=1 // pred_check_branch
      %594 = sbr.rel (0) target = $region321
    $region320: #{gnn_diffpool_forward.1} parent=1 // pred_region
      %596 = dma.done [#allocation42], 16
    $region321: #{gnn_diffpool_forward.1} parent=1 // pred_fallthru
      _
    %v598 = vld [vmem:[%s1] sm:$0xff]
    %v599 = vld [vmem:[%s1 + $0x8] sm:$0xff]
    %v600 = vld [vmem:[%s1 + $0x10] sm:$0xff]
    %v601 = vld [vmem:[%s1 + $0x18] sm:$0xff]
    %v602 = vld [vmem:[%s3] sm:$0xff]
    %v603 = vld [vmem:[%s3 + $0x8] sm:$0xff]
    %v604 = vld [vmem:[%s3 + $0x10] sm:$0xff]
    %v605 = vld [vmem:[%s3 + $0x18] sm:$0xff]
    %vm606 = vcmask 23552
    %v608 = vsel %vm606, %v602, 0
    %v611 = vsel %vm606, %v603, 0
    %613 = vmatpush.xpose.msra.mxu0 0.0
    %614 = vmatpush.xpose.msra.mxu0 0.0
    %615 = vmatpush.xpose.msra.mxu0 0.0
    %616 = vmatpush.xpose.msra.mxu0 0.0
    %617 = vmatpush.xpose.msra.mxu0 0.0
    %618 = vmatpush.xpose.msra.mxu0 0.0
    %619 = vmatpush.xpose.msra.mxu0 0.0
    %620 = vmatpush.xpose.msra.mxu0 0.0
    %621 = vmatpush.xpose.msra.mxu0 0.0
    %622 = vmatpush.xpose.msra.mxu0 0.0
    %623 = vmatpush.xpose.msra.mxu0 0.0
    %624 = vmatpush.xpose.msra.mxu0 0.0
    %625 = vmatpush.xpose.msra.mxu0 0.0
    %626 = vmatpush.xpose.msra.mxu0 0.0
    %627 = vmatpush.xpose.msra.mxu0 %v611
    %628 = vmatpush.xpose.msra.mxu0 %v608
    %629 = vmatmul.f32.gmra.mxu0 %v608
    %v630 = vpop.f32.mrf.mxu0
    %v631 = vadd.f32 0.0, %v630
    %632 = vmatmul.f32.gmra.mxu0 %v611
    %v633 = vpop.f32.mrf.mxu0
    %v634 = vadd.f32 0.0, %v633
    %635 = vdwg.mxu0
    %v637 = vsel %vm606, %v604, 0
    %v640 = vsel %vm606, %v605, 0
    %642 = vmatpush.xpose.msra.mxu0 0.0
    %643 = vmatpush.xpose.msra.mxu0 0.0
    %644 = vmatpush.xpose.msra.mxu0 0.0
    %645 = vmatpush.xpose.msra.mxu0 0.0
    %646 = vmatpush.xpose.msra.mxu0 0.0
    %647 = vmatpush.xpose.msra.mxu0 0.0
    %648 = vmatpush.xpose.msra.mxu0 0.0
    %649 = vmatpush.xpose.msra.mxu0 0.0
    %650 = vmatpush.xpose.msra.mxu0 0.0
    %651 = vmatpush.xpose.msra.mxu0 0.0
    %652 = vmatpush.xpose.msra.mxu0 0.0
    %653 = vmatpush.xpose.msra.mxu0 0.0
    %654 = vmatpush.xpose.msra.mxu0 0.0
    %655 = vmatpush.xpose.msra.mxu0 0.0
    %656 = vmatpush.xpose.msra.mxu0 %v640
    %657 = vmatpush.xpose.msra.mxu0 %v637
    %658 = vmatmul.f32.gmra.mxu0 %v637
    %v659 = vpop.f32.mrf.mxu0
    %v660 = vadd.f32 0.0, %v659
    %661 = vmatmul.f32.gmra.mxu0 %v640
    %v662 = vpop.f32.mrf.mxu0
    %v663 = vadd.f32 0.0, %v662
    %664 = vdwg.mxu0
    %v665 = vmul.f32 %v602, %v602
    %v666 = vmul.f32 %v603, %v603
    %v667 = vmul.f32 %v604, %v604
    %v668 = vmul.f32 %v605, %v605
    %v669 = vsel %vm606, %v665, 0.0
    %670 = vadd.xlane.f32.xlu0 %v669
    %v671 = vpop.xlane.xlu0 %670
    %v672 = vsel %vm606, %v666, 0.0
    %673 = vadd.xlane.f32.xlu0 %v672
    %v674 = vpop.xlane.xlu0 %673
    %v675 = vsel %vm606, %v667, 0.0
    %676 = vadd.xlane.f32.xlu0 %v675
    %v677 = vpop.xlane.xlu0 %676
    %v678 = vsel %vm606, %v668, 0.0
    %679 = vadd.xlane.f32.xlu0 %v678
    %v680 = vpop.xlane.xlu0 %679
    %v685 = vlaneseq
    %v686 = vand.u32 %v685, 127
    %v687 = vperm.slane %v671, %v686
    %v688 = vadd.s32 %v686, 4294967288
    %v689 = vperm.slane %v674, %v688
    %vm690 = vcmask 130112
    %v691 = vsel %vm690, %v689, %v687
    %v692 = vperm.slane %v677, %v686
    %v693 = vperm.slane %v680, %v688
    %v694 = vsel %vm690, %v693, %v692
    %vm695 = vcmask 1041409
    %vm696 = vcmask 1042434
    %v697 = vsel %vm696, %v691, %v691
    %vm698 = vcmask 1043459
    %v699 = vsel %vm698, %v691, %v697
    %vm700 = vcmask 1044484
    %v701 = vsel %vm700, %v691, %v699
    %vm702 = vcmask 1045509
    %v703 = vsel %vm702, %v691, %v701
    %vm704 = vcmask 1046534
    %v705 = vsel %vm704, %v691, %v703
    %vm706 = vcmask 1047559
    %v707 = vsel %vm706, %v691, %v705
    %v708 = vsel %vm696, %v694, %v694
    %v709 = vsel %vm698, %v694, %v708
    %v710 = vsel %vm700, %v694, %v709
    %v711 = vsel %vm702, %v694, %v710
    %v712 = vsel %vm704, %v694, %v711
    %v713 = vsel %vm706, %v694, %v712
    %v716 = vadd.f32 %v671, %v707
    %v717 = vadd.f32 %v674, %v707
    %v718 = vadd.f32 %v677, %v713
    %v719 = vadd.f32 %v680, %v713
    %v720 = vmul.f32 %v631, 2.0
    %v721 = vmul.f32 %v634, 2.0
    %v722 = vmul.f32 %v660, 2.0
    %v723 = vmul.f32 %v663, 2.0
    %v724 = vsub.f32 %v716, %v720
    %v725 = vsub.f32 %v717, %v721
    %v726 = vsub.f32 %v718, %v722
    %v727 = vsub.f32 %v719, %v723
    %v728 = vmax.f32 %v724, 0.0
    %v729 = vmax.f32 %v725, 0.0
    %v730 = vmax.f32 %v726, 0.0
    %v731 = vmax.f32 %v727, 0.0
    %v732 = vld [vmem:[%s5] sm:$0xf]
    %v733 = vld [vmem:[%s5 + $0x4] sm:$0xf]
    %v734 = vld [vmem:[%s5 + $0x8] sm:$0xf]
    %v735 = vld [vmem:[%s5 + $0xc] sm:$0xf]
    %v736 = vunpack.c.l.bf16 %v732
    %v737 = vunpack.c.l.bf16 %v733
    %v738 = vunpack.c.l.bf16 %v734
    %v739 = vunpack.c.l.bf16 %v735
    %v740 = vmul.f32 %v728, -0.5
    %v741 = vmul.f32 %v729, -0.5
    %v742 = vmul.f32 %v730, -0.5
    %v743 = vmul.f32 %v731, -0.5
    %v744 = vmul.f32 %v740, 1.442695
    %v745 = vpow.pop %v744
    %v746 = vmul.f32 %v741, 1.442695
    %v747 = vpow.pop %v746
    %v748 = vmul.f32 %v742, 1.442695
    %v749 = vpow.pop %v748
    %v750 = vmul.f32 %v743, 1.442695
    %v751 = vpow.pop %v750
    %v752 = vmul.f32 %v736, %v745
    %v753 = vmul.f32 %v737, %v747
    %v754 = vmul.f32 %v738, %v749
    %v755 = vmul.f32 %v739, %v751
    %v756 = vld [vmem:[%s7] sm:$0xf]
    %v757 = vld [vmem:[%s7 + $0x4] sm:$0xf]
    %v758 = vld [vmem:[%s7 + $0x8] sm:$0xf]
    %v759 = vld [vmem:[%s7 + $0xc] sm:$0xf]
    %v760 = vunpack.c.l.bf16 %v756
    %v761 = vunpack.c.l.bf16 %v757
    %v762 = vunpack.c.l.bf16 %v758
    %v763 = vunpack.c.l.bf16 %v759
    %vm764 = vcmask 130048
    %v765 = vsel %vm764, %v752, 0.0
    %766 = vadd.xlane.f32.xlu0 %v765
    %v767 = vpop.xlane.xlu0 %766
    %v768 = vsel %vm764, %v753, 0.0
    %769 = vadd.xlane.f32.xlu0 %v768
    %v770 = vpop.xlane.xlu0 %769
    %v771 = vsel %vm764, %v754, 0.0
    %772 = vadd.xlane.f32.xlu0 %v771
    %v773 = vpop.xlane.xlu0 %772
    %v774 = vsel %vm764, %v755, 0.0
    %775 = vadd.xlane.f32.xlu0 %v774
    %v776 = vpop.xlane.xlu0 %775
    %v777 = vadd.f32 %v767, 1.0
    %v778 = vadd.f32 %v770, 1.0
    %v779 = vadd.f32 %v773, 1.0
    %v780 = vadd.f32 %v776, 1.0
    %v781 = vrsqrt.pop %v777
    %v782 = vmul.f32 %v781, %v777
    %v783 = vmul.f32 %v782, %v781
    %v784 = vmul.f32 0.5, %v783
    %v785 = vsub.f32 1.5, %v784
    %v786 = vmul.f32 %v781, %v785
    %vm787 = vweird.f32 %v777
    %vm788 = vweird.f32 %v781
    %vm789 = vmor %vm787, %vm788
    %v790 = vsel %vm789, %v781, %v786
    %v791 = vrsqrt.pop %v778
    %v792 = vmul.f32 %v791, %v778
    %v793 = vmul.f32 %v792, %v791
    %v794 = vmul.f32 0.5, %v793
    %v795 = vsub.f32 1.5, %v794
    %v796 = vmul.f32 %v791, %v795
    %vm797 = vweird.f32 %v778
    %vm798 = vweird.f32 %v791
    %vm799 = vmor %vm797, %vm798
    %v800 = vsel %vm799, %v791, %v796
    %v801 = vrsqrt.pop %v779
    %v802 = vmul.f32 %v801, %v779
    %v803 = vmul.f32 %v802, %v801
    %v804 = vmul.f32 0.5, %v803
    %v805 = vsub.f32 1.5, %v804
    %v806 = vmul.f32 %v801, %v805
    %vm807 = vweird.f32 %v779
    %vm808 = vweird.f32 %v801
    %vm809 = vmor %vm807, %vm808
    %v810 = vsel %vm809, %v801, %v806
    %v811 = vrsqrt.pop %v780
    %v812 = vmul.f32 %v811, %v780
    %v813 = vmul.f32 %v812, %v811
    %v814 = vmul.f32 0.5, %v813
    %v815 = vsub.f32 1.5, %v814
    %v816 = vmul.f32 %v811, %v815
    %vm817 = vweird.f32 %v780
    %vm818 = vweird.f32 %v811
    %vm819 = vmor %vm817, %vm818
    %v820 = vsel %vm819, %v811, %v816
    %v821 = vpack.c.bf16 %v752, %v752
    %v822 = vpack.c.bf16 %v753, %v753
    %v823 = vpack.c.bf16 %v754, %v754
    %v824 = vpack.c.bf16 %v755, %v755
    %v825 = vmul.f32 %v790, %v598
    %v826 = vmul.f32 %v800, %v599
    %v827 = vmul.f32 %v810, %v600
    %v828 = vmul.f32 %v820, %v601
    %v829 = vpack.c.bf16 %v825, %v825
    %v830 = vpack.c.bf16 %v826, %v826
    %v831 = vpack.c.bf16 %v827, %v827
    %v832 = vpack.c.bf16 %v828, %v828
    %v835 = vunpack.c.l.b16 %v821
    %v836 = vunpack.c.l.b16 %v822
    %v837 = vpack.c.b16 %v836, %v835
    %v840 = vunpack.c.l.b16 %v829
    %v841 = vunpack.c.l.b16 %v830
    %v842 = vpack.c.b16 %v841, %v840
    %v845 = vsel %vm764, %v837, 0
    %847 = vmatpush.bf16.msra.mxu0 0
    %848 = vmatpush.bf16.msra.mxu0 0
    %849 = vmatpush.bf16.msra.mxu0 0
    %850 = vmatpush.bf16.msra.mxu0 0
    %851 = vmatpush.bf16.msra.mxu0 0
    %852 = vmatpush.bf16.msra.mxu0 0
    %853 = vmatpush.bf16.msra.mxu0 0
    %854 = vmatpush.bf16.msra.mxu0 %v842
    %855 = vmatmul.bf16.gmra.mxu0 %v845
    %v856 = vpop.f32.mrf.mxu0
    %v857 = vadd.f32 %v825, %v856
    %v858 = vpop.f32.mrf.mxu0
    %v859 = vadd.f32 %v826, %v858
    %860 = vdwg.mxu0
    %v863 = vunpack.c.l.b16 %v823
    %v864 = vunpack.c.l.b16 %v824
    %v865 = vpack.c.b16 %v864, %v863
    %v868 = vunpack.c.l.b16 %v831
    %v869 = vunpack.c.l.b16 %v832
    %v870 = vpack.c.b16 %v869, %v868
    %v873 = vsel %vm764, %v865, 0
    %875 = vmatpush.bf16.msra.mxu0 0
    %876 = vmatpush.bf16.msra.mxu0 0
    %877 = vmatpush.bf16.msra.mxu0 0
    %878 = vmatpush.bf16.msra.mxu0 0
    %879 = vmatpush.bf16.msra.mxu0 0
    %880 = vmatpush.bf16.msra.mxu0 0
    %881 = vmatpush.bf16.msra.mxu0 0
    %882 = vmatpush.bf16.msra.mxu0 %v870
    %883 = vmatmul.bf16.gmra.mxu0 %v873
    %v884 = vpop.f32.mrf.mxu0
    %v885 = vadd.f32 %v827, %v884
    %v886 = vpop.f32.mrf.mxu0
    %v887 = vadd.f32 %v828, %v886
    %888 = vdwg.mxu0
    %v889 = vmul.f32 %v790, %v857
    %v890 = vmul.f32 %v800, %v859
    %v891 = vmul.f32 %v810, %v885
    %v892 = vmul.f32 %v820, %v887
    %v893 = vpack.c.bf16 %v890, %v889
    %v894 = vpack.c.bf16 %v892, %v891
    %v895 = vld [vmem:[%s9] sm:$0xf]
    %v896 = vpack.c.bf16 %v895, %v895
    %vm897 = vcmask 31744
    %v899 = vsel %vm897, %v893, 0
    %v902 = vsel %vm897, %v894, 0
    %vm904 = vcmask 1041408
    %v906 = vsel %vm904, %v896, 0
    %908 = vmatpush.bf16.msra.mxu0 0
    %909 = vmatpush.bf16.msra.mxu0 0
    %910 = vmatpush.bf16.msra.mxu0 0
    %911 = vmatpush.bf16.msra.mxu0 0
    %912 = vmatpush.bf16.msra.mxu0 0
    %913 = vmatpush.bf16.msra.mxu0 0
    %914 = vmatpush.bf16.msra.mxu0 0
    %915 = vmatpush.bf16.msra.mxu0 %v906
    %916 = vmatmul.bf16.gmra.mxu0 %v899
    %v917 = vpop.f32.mrf.mxu0
    %v918 = vadd.f32 0.0, %v917
    %v919 = vpop.f32.mrf.mxu0
    %v920 = vadd.f32 0.0, %v919
    %921 = vmatmul.bf16.gmra.mxu0 %v902
    %v922 = vpop.f32.mrf.mxu0
    %v923 = vadd.f32 0.0, %v922
    %v924 = vpop.f32.mrf.mxu0
    %v925 = vadd.f32 0.0, %v924
    %926 = vdwg.mxu0
    %v927 = vld [vmem:[%s11] sm:$0x1]
    %v929 = vperm.slane %v927, 0
    %v931 = vadd.f32 %v918, %v929
    %v932 = vadd.f32 %v920, %v929
    %v933 = vadd.f32 %v923, %v929
    %v934 = vadd.f32 %v925, %v929
    %v935 = vmax.f32 %v931, 0.0
    %v936 = vmax.f32 %v932, 0.0
    %v937 = vmax.f32 %v933, 0.0
    %v938 = vmax.f32 %v934, 0.0
    %v939 = vmul.f32 %v790, %v935
    %v940 = vmul.f32 %v800, %v936
    %v941 = vmul.f32 %v810, %v937
    %v942 = vmul.f32 %v820, %v938
    %v943 = vpack.c.bf16 %v939, %v939
    %v944 = vpack.c.bf16 %v940, %v940
    %v945 = vpack.c.bf16 %v941, %v941
    %v946 = vpack.c.bf16 %v942, %v942
    %v949 = vunpack.c.l.b16 %v943
    %v950 = vunpack.c.l.b16 %v944
    %v951 = vpack.c.b16 %v950, %v949
    %953 = vmatpush.bf16.msra.mxu0 0
    %954 = vmatpush.bf16.msra.mxu0 0
    %955 = vmatpush.bf16.msra.mxu0 0
    %956 = vmatpush.bf16.msra.mxu0 0
    %957 = vmatpush.bf16.msra.mxu0 0
    %958 = vmatpush.bf16.msra.mxu0 0
    %959 = vmatpush.bf16.msra.mxu0 0
    %960 = vmatpush.bf16.msra.mxu0 %v951
    %961 = vmatmul.bf16.gmra.mxu0 %v845
    %v962 = vpop.f32.mrf.mxu0
    %v963 = vadd.f32 %v939, %v962
    %v964 = vpop.f32.mrf.mxu0
    %v965 = vadd.f32 %v940, %v964
    %966 = vdwg.mxu0
    %v969 = vunpack.c.l.b16 %v945
    %v970 = vunpack.c.l.b16 %v946
    %v971 = vpack.c.b16 %v970, %v969
    %973 = vmatpush.bf16.msra.mxu0 0
    %974 = vmatpush.bf16.msra.mxu0 0
    %975 = vmatpush.bf16.msra.mxu0 0
    %976 = vmatpush.bf16.msra.mxu0 0
    %977 = vmatpush.bf16.msra.mxu0 0
    %978 = vmatpush.bf16.msra.mxu0 0
    %979 = vmatpush.bf16.msra.mxu0 0
    %980 = vmatpush.bf16.msra.mxu0 %v971
    %981 = vmatmul.bf16.gmra.mxu0 %v873
    %v982 = vpop.f32.mrf.mxu0
    %v983 = vadd.f32 %v941, %v982
    %v984 = vpop.f32.mrf.mxu0
    %v985 = vadd.f32 %v942, %v984
    %986 = vdwg.mxu0
    %v987 = vmul.f32 %v790, %v963
    %v988 = vmul.f32 %v800, %v965
    %v989 = vmul.f32 %v810, %v983
    %v990 = vmul.f32 %v820, %v985
    %v991 = vpack.c.bf16 %v988, %v987
    %v992 = vpack.c.bf16 %v990, %v989
    %v993 = vld [vmem:[#allocation3] sm:$0xff]
    %v994 = vld [vmem:[#allocation3 + $0x8] sm:$0xff]
    %v995 = vpack.c.bf16 %v994, %v993
    %v997 = vsel %vm764, %v991, 0
    %v1000 = vsel %vm764, %v992, 0
    %1002 = vmatpush.bf16.msra.mxu0 0
    %1003 = vmatpush.bf16.msra.mxu0 0
    %1004 = vmatpush.bf16.msra.mxu0 0
    %1005 = vmatpush.bf16.msra.mxu0 0
    %1006 = vmatpush.bf16.msra.mxu0 0
    %1007 = vmatpush.bf16.msra.mxu0 0
    %1008 = vmatpush.bf16.msra.mxu0 0
    %1009 = vmatpush.bf16.msra.mxu0 %v995
    %1010 = vmatmul.bf16.gmra.mxu0 %v997
    %v1011 = vpop.f32.mrf.mxu0
    %v1012 = vadd.f32 0.0, %v1011
    %v1013 = vpop.f32.mrf.mxu0
    %v1014 = vadd.f32 0.0, %v1013
    %1015 = vmatmul.bf16.gmra.mxu0 %v1000
    %v1016 = vpop.f32.mrf.mxu0
    %v1017 = vadd.f32 0.0, %v1016
    %v1018 = vpop.f32.mrf.mxu0
    %v1019 = vadd.f32 0.0, %v1018
    %1020 = vdwg.mxu0
    %v1021 = vld [vmem:[%s15] sm:$0x1]
    %v1023 = vperm.slane %v1021, 0
    %v1025 = vadd.f32 %v1012, %v1023
    %v1026 = vadd.f32 %v1014, %v1023
    %v1027 = vadd.f32 %v1017, %v1023
    %v1028 = vadd.f32 %v1019, %v1023
    %v1029 = vmax.f32 %v1025, 0.0
    %v1030 = vmax.f32 %v1026, 0.0
    %v1031 = vmax.f32 %v1027, 0.0
    %v1032 = vmax.f32 %v1028, 0.0
    %v1033 = vmul.f32 %v790, %v1029
    %v1034 = vmul.f32 %v800, %v1030
    %v1035 = vmul.f32 %v810, %v1031
    %v1036 = vmul.f32 %v820, %v1032
    %v1037 = vpack.c.bf16 %v1033, %v1033
    %v1038 = vpack.c.bf16 %v1034, %v1034
    %v1039 = vpack.c.bf16 %v1035, %v1035
    %v1040 = vpack.c.bf16 %v1036, %v1036
    %v1043 = vunpack.c.l.b16 %v1037
    %v1044 = vunpack.c.l.b16 %v1038
    %v1045 = vpack.c.b16 %v1044, %v1043
    %1047 = vmatpush.bf16.msra.mxu0 0
    %1048 = vmatpush.bf16.msra.mxu0 0
    %1049 = vmatpush.bf16.msra.mxu0 0
    %1050 = vmatpush.bf16.msra.mxu0 0
    %1051 = vmatpush.bf16.msra.mxu0 0
    %1052 = vmatpush.bf16.msra.mxu0 0
    %1053 = vmatpush.bf16.msra.mxu0 0
    %1054 = vmatpush.bf16.msra.mxu0 %v1045
    %1055 = vmatmul.bf16.gmra.mxu0 %v845
    %v1056 = vpop.f32.mrf.mxu0
    %v1057 = vadd.f32 %v1033, %v1056
    %v1058 = vpop.f32.mrf.mxu0
    %v1059 = vadd.f32 %v1034, %v1058
    %1060 = vdwg.mxu0
    %v1063 = vunpack.c.l.b16 %v1039
    %v1064 = vunpack.c.l.b16 %v1040
    %v1065 = vpack.c.b16 %v1064, %v1063
    %1067 = vmatpush.bf16.msra.mxu0 0
    %1068 = vmatpush.bf16.msra.mxu0 0
    %1069 = vmatpush.bf16.msra.mxu0 0
    %1070 = vmatpush.bf16.msra.mxu0 0
    %1071 = vmatpush.bf16.msra.mxu0 0
    %1072 = vmatpush.bf16.msra.mxu0 0
    %1073 = vmatpush.bf16.msra.mxu0 0
    %1074 = vmatpush.bf16.msra.mxu0 %v1065
    %1075 = vmatmul.bf16.gmra.mxu0 %v873
    %v1076 = vpop.f32.mrf.mxu0
    %v1077 = vadd.f32 %v1035, %v1076
    %v1078 = vpop.f32.mrf.mxu0
    %v1079 = vadd.f32 %v1036, %v1078
    %1080 = vdwg.mxu0
    %v1081 = vmul.f32 %v790, %v1057
    %v1082 = vmul.f32 %v800, %v1059
    %v1083 = vmul.f32 %v810, %v1077
    %v1084 = vmul.f32 %v820, %v1079
    %v1085 = vpack.c.bf16 %v1082, %v1081
    %v1086 = vpack.c.bf16 %v1084, %v1083
    %v1087 = vld [vmem:[#allocation5] sm:$0xff]
    %v1088 = vld [vmem:[#allocation5 + $0x8] sm:$0xff]
    %v1089 = vpack.c.bf16 %v1088, %v1087
    %v1091 = vsel %vm764, %v1085, 0
    %v1094 = vsel %vm764, %v1086, 0
    %1096 = vmatpush.bf16.msra.mxu0 0
    %1097 = vmatpush.bf16.msra.mxu0 0
    %1098 = vmatpush.bf16.msra.mxu0 0
    %1099 = vmatpush.bf16.msra.mxu0 0
    %1100 = vmatpush.bf16.msra.mxu0 0
    %1101 = vmatpush.bf16.msra.mxu0 0
    %1102 = vmatpush.bf16.msra.mxu0 0
    %1103 = vmatpush.bf16.msra.mxu0 %v1089
    %1104 = vmatmul.bf16.gmra.mxu0 %v1091
    %v1105 = vpop.f32.mrf.mxu0
    %v1106 = vadd.f32 0.0, %v1105
    %v1107 = vpop.f32.mrf.mxu0
    %v1108 = vadd.f32 0.0, %v1107
    %1109 = vmatmul.bf16.gmra.mxu0 %v1094
    %v1110 = vpop.f32.mrf.mxu0
    %v1111 = vadd.f32 0.0, %v1110
    %v1112 = vpop.f32.mrf.mxu0
    %v1113 = vadd.f32 0.0, %v1112
    %1114 = vdwg.mxu0
    %v1115 = vld [vmem:[%s19] sm:$0x1]
    %v1117 = vperm.slane %v1115, 0
    %v1119 = vadd.f32 %v1106, %v1117
    %v1120 = vadd.f32 %v1108, %v1117
    %v1121 = vadd.f32 %v1111, %v1117
    %v1122 = vadd.f32 %v1113, %v1117
    %v1123 = vmax.f32 %v1119, 0.0
    %v1124 = vmax.f32 %v1120, 0.0
    %v1125 = vmax.f32 %v1121, 0.0
    %v1126 = vmax.f32 %v1122, 0.0
    %v1127 = vpack.c.bf16 %v1124, %v1123
    %v1128 = vpack.c.bf16 %v1126, %v1125
    %v1129 = vld [vmem:[%s21] sm:$0xff]
    %v1130 = vld [vmem:[%s21 + $0x8] sm:$0xff]
    %v1131 = vpack.c.bf16 %v1130, %v1129
    %v1133 = vsel %vm764, %v1127, 0
    %v1136 = vsel %vm764, %v1128, 0
    %1138 = vmatpush.bf16.msra.mxu0 0
    %1139 = vmatpush.bf16.msra.mxu0 0
    %1140 = vmatpush.bf16.msra.mxu0 0
    %1141 = vmatpush.bf16.msra.mxu0 0
    %1142 = vmatpush.bf16.msra.mxu0 0
    %1143 = vmatpush.bf16.msra.mxu0 0
    %1144 = vmatpush.bf16.msra.mxu0 0
    %1145 = vmatpush.bf16.msra.mxu0 %v1131
    %1146 = vmatmul.bf16.gmra.mxu0 %v1133
    %v1147 = vpop.f32.mrf.mxu0
    %v1148 = vadd.f32 0.0, %v1147
    %v1149 = vpop.f32.mrf.mxu0
    %v1150 = vadd.f32 0.0, %v1149
    %1151 = vmatmul.bf16.gmra.mxu0 %v1136
    %v1152 = vpop.f32.mrf.mxu0
    %v1153 = vadd.f32 0.0, %v1152
    %v1154 = vpop.f32.mrf.mxu0
    %v1155 = vadd.f32 0.0, %v1154
    %1156 = vdwg.mxu0
    %v1157 = vmul.f32 %v790, %v1148
    %v1158 = vmul.f32 %v800, %v1150
    %v1159 = vmul.f32 %v810, %v1153
    %v1160 = vmul.f32 %v820, %v1155
    %v1161 = vpack.c.bf16 %v1157, %v1157
    %v1162 = vpack.c.bf16 %v1158, %v1158
    %v1163 = vpack.c.bf16 %v1159, %v1159
    %v1164 = vpack.c.bf16 %v1160, %v1160
    %v1167 = vunpack.c.l.b16 %v1161
    %v1168 = vunpack.c.l.b16 %v1162
    %v1169 = vpack.c.b16 %v1168, %v1167
    %1171 = vmatpush.bf16.msra.mxu0 0
    %1172 = vmatpush.bf16.msra.mxu0 0
    %1173 = vmatpush.bf16.msra.mxu0 0
    %1174 = vmatpush.bf16.msra.mxu0 0
    %1175 = vmatpush.bf16.msra.mxu0 0
    %1176 = vmatpush.bf16.msra.mxu0 0
    %1177 = vmatpush.bf16.msra.mxu0 0
    %1178 = vmatpush.bf16.msra.mxu0 %v1169
    %1179 = vmatmul.bf16.gmra.mxu0 %v845
    %v1180 = vpop.f32.mrf.mxu0
    %v1181 = vadd.f32 %v1157, %v1180
    %v1182 = vpop.f32.mrf.mxu0
    %v1183 = vadd.f32 %v1158, %v1182
    %1184 = vdwg.mxu0
    %v1187 = vunpack.c.l.b16 %v1163
    %v1188 = vunpack.c.l.b16 %v1164
    %v1189 = vpack.c.b16 %v1188, %v1187
    %1191 = vmatpush.bf16.msra.mxu0 0
    %1192 = vmatpush.bf16.msra.mxu0 0
    %1193 = vmatpush.bf16.msra.mxu0 0
    %1194 = vmatpush.bf16.msra.mxu0 0
    %1195 = vmatpush.bf16.msra.mxu0 0
    %1196 = vmatpush.bf16.msra.mxu0 0
    %1197 = vmatpush.bf16.msra.mxu0 0
    %1198 = vmatpush.bf16.msra.mxu0 %v1189
    %1199 = vmatmul.bf16.gmra.mxu0 %v873
    %v1200 = vpop.f32.mrf.mxu0
    %v1201 = vadd.f32 %v1159, %v1200
    %v1202 = vpop.f32.mrf.mxu0
    %v1203 = vadd.f32 %v1160, %v1202
    %1204 = vdwg.mxu0
    %v1205 = vmul.f32 %v790, %v1181
    %v1206 = vmul.f32 %v800, %v1183
    %v1207 = vmul.f32 %v810, %v1201
    %v1208 = vmul.f32 %v820, %v1203
    %v1209 = vld [vmem:[%s23] sm:$0x1]
    %v1211 = vperm.slane %v1209, 0
    %v1213 = vadd.f32 %v1205, %v1211
    %v1214 = vadd.f32 %v1206, %v1211
    %v1215 = vadd.f32 %v1207, %v1211
    %v1216 = vadd.f32 %v1208, %v1211
    %v1217 = vld [vmem:[#allocation7] sm:$0xf]
    %v1218 = vpack.c.bf16 %v1217, %v1217
    %v1220 = vsel %vm904, %v1218, 0
    %1222 = vmatpush.bf16.msra.mxu0 0
    %1223 = vmatpush.bf16.msra.mxu0 0
    %1224 = vmatpush.bf16.msra.mxu0 0
    %1225 = vmatpush.bf16.msra.mxu0 0
    %1226 = vmatpush.bf16.msra.mxu0 0
    %1227 = vmatpush.bf16.msra.mxu0 0
    %1228 = vmatpush.bf16.msra.mxu0 0
    %1229 = vmatpush.bf16.msra.mxu0 %v1220
    %1230 = vmatmul.bf16.gmra.mxu0 %v899
    %v1231 = vpop.f32.mrf.mxu0
    %v1232 = vadd.f32 0.0, %v1231
    %v1233 = vpop.f32.mrf.mxu0
    %v1234 = vadd.f32 0.0, %v1233
    %1235 = vmatmul.bf16.gmra.mxu0 %v902
    %v1236 = vpop.f32.mrf.mxu0
    %v1237 = vadd.f32 0.0, %v1236
    %v1238 = vpop.f32.mrf.mxu0
    %v1239 = vadd.f32 0.0, %v1238
    %1240 = vdwg.mxu0
    %v1241 = vld [vmem:[%s27] sm:$0x1]
    %v1243 = vperm.slane %v1241, 0
    %v1245 = vadd.f32 %v1232, %v1243
    %v1246 = vadd.f32 %v1234, %v1243
    %v1247 = vadd.f32 %v1237, %v1243
    %v1248 = vadd.f32 %v1239, %v1243
    %v1249 = vmax.f32 %v1245, 0.0
    %v1250 = vmax.f32 %v1246, 0.0
    %v1251 = vmax.f32 %v1247, 0.0
    %v1252 = vmax.f32 %v1248, 0.0
    %v1253 = vmul.f32 %v790, %v1249
    %v1254 = vmul.f32 %v800, %v1250
    %v1255 = vmul.f32 %v810, %v1251
    %v1256 = vmul.f32 %v820, %v1252
    %v1257 = vpack.c.bf16 %v1253, %v1253
    %v1258 = vpack.c.bf16 %v1254, %v1254
    %v1259 = vpack.c.bf16 %v1255, %v1255
    %v1260 = vpack.c.bf16 %v1256, %v1256
    %v1263 = vunpack.c.l.b16 %v1257
    %v1264 = vunpack.c.l.b16 %v1258
    %v1265 = vpack.c.b16 %v1264, %v1263
    %1267 = vmatpush.bf16.msra.mxu0 0
    %1268 = vmatpush.bf16.msra.mxu0 0
    %1269 = vmatpush.bf16.msra.mxu0 0
    %1270 = vmatpush.bf16.msra.mxu0 0
    %1271 = vmatpush.bf16.msra.mxu0 0
    %1272 = vmatpush.bf16.msra.mxu0 0
    %1273 = vmatpush.bf16.msra.mxu0 0
    %1274 = vmatpush.bf16.msra.mxu0 %v1265
    %1275 = vmatmul.bf16.gmra.mxu0 %v845
    %v1276 = vpop.f32.mrf.mxu0
    %v1277 = vadd.f32 %v1253, %v1276
    %v1278 = vpop.f32.mrf.mxu0
    %v1279 = vadd.f32 %v1254, %v1278
    %1280 = vdwg.mxu0
    %v1283 = vunpack.c.l.b16 %v1259
    %v1284 = vunpack.c.l.b16 %v1260
    %v1285 = vpack.c.b16 %v1284, %v1283
    %1287 = vmatpush.bf16.msra.mxu0 0
    %1288 = vmatpush.bf16.msra.mxu0 0
    %1289 = vmatpush.bf16.msra.mxu0 0
    %1290 = vmatpush.bf16.msra.mxu0 0
    %1291 = vmatpush.bf16.msra.mxu0 0
    %1292 = vmatpush.bf16.msra.mxu0 0
    %1293 = vmatpush.bf16.msra.mxu0 0
    %1294 = vmatpush.bf16.msra.mxu0 %v1285
    %1295 = vmatmul.bf16.gmra.mxu0 %v873
    %v1296 = vpop.f32.mrf.mxu0
    %v1297 = vadd.f32 %v1255, %v1296
    %v1298 = vpop.f32.mrf.mxu0
    %v1299 = vadd.f32 %v1256, %v1298
    %1300 = vdwg.mxu0
    %v1301 = vmul.f32 %v790, %v1277
    %v1302 = vmul.f32 %v800, %v1279
    %v1303 = vmul.f32 %v810, %v1297
    %v1304 = vmul.f32 %v820, %v1299
    %v1305 = vpack.c.bf16 %v1302, %v1301
    %v1306 = vpack.c.bf16 %v1304, %v1303
    %v1307 = vld [vmem:[%s29] sm:$0xff]
    %v1308 = vld [vmem:[%s29 + $0x8] sm:$0xff]
    %v1309 = vld [vmem:[%s29 + $0x10] sm:$0xff]
    %v1310 = vld [vmem:[%s29 + $0x18] sm:$0xff]
    %v1311 = vpack.c.bf16 %v1308, %v1307
    %v1312 = vpack.c.bf16 %v1310, %v1309
    %vm1313 = vcmask 261120
    %v1315 = vsel %vm1313, %v1305, 0
    %v1318 = vsel %vm1313, %v1306, 0
    %1320 = vmatpush.bf16.msra.mxu0 0
    %1321 = vmatpush.bf16.msra.mxu0 0
    %1322 = vmatpush.bf16.msra.mxu0 0
    %1323 = vmatpush.bf16.msra.mxu0 0
    %1324 = vmatpush.bf16.msra.mxu0 0
    %1325 = vmatpush.bf16.msra.mxu0 0
    %1326 = vmatpush.bf16.msra.mxu0 %v1312
    %1327 = vmatpush.bf16.msra.mxu0 %v1311
    %1328 = vmatmul.bf16.gmra.mxu0 %v1315
    %v1329 = vpop.f32.mrf.mxu0
    %v1330 = vadd.f32 0.0, %v1329
    %v1331 = vpop.f32.mrf.mxu0
    %v1332 = vadd.f32 0.0, %v1331
    %1333 = vmatmul.bf16.gmra.mxu0 %v1318
    %v1334 = vpop.f32.mrf.mxu0
    %v1335 = vadd.f32 0.0, %v1334
    %v1336 = vpop.f32.mrf.mxu0
    %v1337 = vadd.f32 0.0, %v1336
    %1338 = vdwg.mxu0
    %v1339 = vld [vmem:[%s31] sm:$0x1]
    %v1341 = vperm.slane %v1339, 0
    %v1343 = vadd.f32 %v1330, %v1341
    %v1344 = vadd.f32 %v1332, %v1341
    %v1345 = vadd.f32 %v1335, %v1341
    %v1346 = vadd.f32 %v1337, %v1341
    %v1347 = vmax.f32 %v1343, 0.0
    %v1348 = vmax.f32 %v1344, 0.0
    %v1349 = vmax.f32 %v1345, 0.0
    %v1350 = vmax.f32 %v1346, 0.0
    %v1351 = vmul.f32 %v790, %v1347
    %v1352 = vmul.f32 %v800, %v1348
    %v1353 = vmul.f32 %v810, %v1349
    %v1354 = vmul.f32 %v820, %v1350
    %v1355 = vpack.c.bf16 %v1351, %v1351
    %v1356 = vpack.c.bf16 %v1352, %v1352
    %v1357 = vpack.c.bf16 %v1353, %v1353
    %v1358 = vpack.c.bf16 %v1354, %v1354
    %v1361 = vunpack.c.l.b16 %v1355
    %v1362 = vunpack.c.l.b16 %v1356
    %v1363 = vpack.c.b16 %v1362, %v1361
    %1365 = vmatpush.bf16.msra.mxu0 0
    %1366 = vmatpush.bf16.msra.mxu0 0
    %1367 = vmatpush.bf16.msra.mxu0 0
    %1368 = vmatpush.bf16.msra.mxu0 0
    %1369 = vmatpush.bf16.msra.mxu0 0
    %1370 = vmatpush.bf16.msra.mxu0 0
    %1371 = vmatpush.bf16.msra.mxu0 0
    %1372 = vmatpush.bf16.msra.mxu0 %v1363
    %1373 = vmatmul.bf16.gmra.mxu0 %v845
    %v1374 = vpop.f32.mrf.mxu0
    %v1375 = vadd.f32 %v1351, %v1374
    %v1376 = vpop.f32.mrf.mxu0
    %v1377 = vadd.f32 %v1352, %v1376
    %1378 = vdwg.mxu0
    %v1381 = vunpack.c.l.b16 %v1357
    %v1382 = vunpack.c.l.b16 %v1358
    %v1383 = vpack.c.b16 %v1382, %v1381
    %1385 = vmatpush.bf16.msra.mxu0 0
    %1386 = vmatpush.bf16.msra.mxu0 0
    %1387 = vmatpush.bf16.msra.mxu0 0
    %1388 = vmatpush.bf16.msra.mxu0 0
    %1389 = vmatpush.bf16.msra.mxu0 0
    %1390 = vmatpush.bf16.msra.mxu0 0
    %1391 = vmatpush.bf16.msra.mxu0 0
    %1392 = vmatpush.bf16.msra.mxu0 %v1383
    %1393 = vmatmul.bf16.gmra.mxu0 %v873
    %v1394 = vpop.f32.mrf.mxu0
    %v1395 = vadd.f32 %v1353, %v1394
    %v1396 = vpop.f32.mrf.mxu0
    %v1397 = vadd.f32 %v1354, %v1396
    %1398 = vdwg.mxu0
    %v1399 = vmul.f32 %v790, %v1375
    %v1400 = vmul.f32 %v800, %v1377
    %v1401 = vmul.f32 %v810, %v1395
    %v1402 = vmul.f32 %v820, %v1397
    %v1403 = vpack.c.bf16 %v1400, %v1399
    %v1404 = vpack.c.bf16 %v1402, %v1401
    %v1405 = vld [vmem:[%s33] sm:$0xff]
    %v1406 = vld [vmem:[%s33 + $0x8] sm:$0xff]
    %v1407 = vld [vmem:[%s33 + $0x10] sm:$0xff]
    %v1408 = vld [vmem:[%s33 + $0x18] sm:$0xff]
    %v1409 = vpack.c.bf16 %v1406, %v1405
    %v1410 = vpack.c.bf16 %v1408, %v1407
    %v1412 = vsel %vm1313, %v1403, 0
    %v1415 = vsel %vm1313, %v1404, 0
    %1417 = vmatpush.bf16.msra.mxu0 0
    %1418 = vmatpush.bf16.msra.mxu0 0
    %1419 = vmatpush.bf16.msra.mxu0 0
    %1420 = vmatpush.bf16.msra.mxu0 0
    %1421 = vmatpush.bf16.msra.mxu0 0
    %1422 = vmatpush.bf16.msra.mxu0 0
    %1423 = vmatpush.bf16.msra.mxu0 %v1410
    %1424 = vmatpush.bf16.msra.mxu0 %v1409
    %1425 = vmatmul.bf16.gmra.mxu0 %v1412
    %v1426 = vpop.f32.mrf.mxu0
    %v1427 = vadd.f32 0.0, %v1426
    %v1428 = vpop.f32.mrf.mxu0
    %v1429 = vadd.f32 0.0, %v1428
    %1430 = vmatmul.bf16.gmra.mxu0 %v1415
    %v1431 = vpop.f32.mrf.mxu0
    %v1432 = vadd.f32 0.0, %v1431
    %v1433 = vpop.f32.mrf.mxu0
    %v1434 = vadd.f32 0.0, %v1433
    %1435 = vdwg.mxu0
    %v1436 = vld [vmem:[#allocation8] sm:$0x1]
    %v1438 = vperm.slane %v1436, 0
    %v1440 = vadd.f32 %v1427, %v1438
    %v1441 = vadd.f32 %v1429, %v1438
    %v1442 = vadd.f32 %v1432, %v1438
    %v1443 = vadd.f32 %v1434, %v1438
    %v1444 = vmax.f32 %v1440, 0.0
    %v1445 = vmax.f32 %v1441, 0.0
    %v1446 = vmax.f32 %v1442, 0.0
    %v1447 = vmax.f32 %v1443, 0.0
    %v1448 = vmul.f32 %v790, %v1444
    %v1449 = vmul.f32 %v800, %v1445
    %v1450 = vmul.f32 %v810, %v1446
    %v1451 = vmul.f32 %v820, %v1447
    %v1452 = vpack.c.bf16 %v1448, %v1448
    %v1453 = vpack.c.bf16 %v1449, %v1449
    %v1454 = vpack.c.bf16 %v1450, %v1450
    %v1455 = vpack.c.bf16 %v1451, %v1451
    %v1458 = vunpack.c.l.b16 %v1452
    %v1459 = vunpack.c.l.b16 %v1453
    %v1460 = vpack.c.b16 %v1459, %v1458
    %1462 = vmatpush.bf16.msra.mxu0 0
    %1463 = vmatpush.bf16.msra.mxu0 0
    %1464 = vmatpush.bf16.msra.mxu0 0
    %1465 = vmatpush.bf16.msra.mxu0 0
    %1466 = vmatpush.bf16.msra.mxu0 0
    %1467 = vmatpush.bf16.msra.mxu0 0
    %1468 = vmatpush.bf16.msra.mxu0 0
    %1469 = vmatpush.bf16.msra.mxu0 %v1460
    %1470 = vmatmul.bf16.gmra.mxu0 %v845
    %v1471 = vpop.f32.mrf.mxu0
    %v1472 = vadd.f32 %v1448, %v1471
    %v1473 = vpop.f32.mrf.mxu0
    %v1474 = vadd.f32 %v1449, %v1473
    %1475 = vdwg.mxu0
    %v1478 = vunpack.c.l.b16 %v1454
    %v1479 = vunpack.c.l.b16 %v1455
    %v1480 = vpack.c.b16 %v1479, %v1478
    %1482 = vmatpush.bf16.msra.mxu0 0
    %1483 = vmatpush.bf16.msra.mxu0 0
    %1484 = vmatpush.bf16.msra.mxu0 0
    %1485 = vmatpush.bf16.msra.mxu0 0
    %1486 = vmatpush.bf16.msra.mxu0 0
    %1487 = vmatpush.bf16.msra.mxu0 0
    %1488 = vmatpush.bf16.msra.mxu0 0
    %1489 = vmatpush.bf16.msra.mxu0 %v1480
    %1490 = vmatmul.bf16.gmra.mxu0 %v873
    %v1491 = vpop.f32.mrf.mxu0
    %v1492 = vadd.f32 %v1450, %v1491
    %v1493 = vpop.f32.mrf.mxu0
    %v1494 = vadd.f32 %v1451, %v1493
    %1495 = vdwg.mxu0
    %v1496 = vmul.f32 %v790, %v1472
    %v1497 = vmul.f32 %v800, %v1474
    %v1498 = vmul.f32 %v810, %v1492
    %v1499 = vmul.f32 %v820, %v1494
    %v1500 = vpack.c.bf16 %v1497, %v1496
    %v1501 = vpack.c.bf16 %v1499, %v1498
    %v1502 = vld [vmem:[%s37] sm:$0xff]
    %v1503 = vld [vmem:[%s37 + $0x8] sm:$0xff]
    %v1504 = vld [vmem:[%s37 + $0x10] sm:$0xff]
    %v1505 = vld [vmem:[%s37 + $0x18] sm:$0xff]
    %v1506 = vpack.c.bf16 %v1503, %v1502
    %v1507 = vpack.c.bf16 %v1505, %v1504
    %v1509 = vsel %vm1313, %v1500, 0
    %v1512 = vsel %vm1313, %v1501, 0
    %1514 = vmatpush.bf16.msra.mxu0 0
    %1515 = vmatpush.bf16.msra.mxu0 0
    %1516 = vmatpush.bf16.msra.mxu0 0
    %1517 = vmatpush.bf16.msra.mxu0 0
    %1518 = vmatpush.bf16.msra.mxu0 0
    %1519 = vmatpush.bf16.msra.mxu0 0
    %1520 = vmatpush.bf16.msra.mxu0 %v1507
    %1521 = vmatpush.bf16.msra.mxu0 %v1506
    %1522 = vmatmul.bf16.gmra.mxu0 %v1509
    %v1523 = vpop.f32.mrf.mxu0
    %v1524 = vadd.f32 0.0, %v1523
    %v1525 = vpop.f32.mrf.mxu0
    %v1526 = vadd.f32 0.0, %v1525
    %1527 = vmatmul.bf16.gmra.mxu0 %v1512
    %v1528 = vpop.f32.mrf.mxu0
    %v1529 = vadd.f32 0.0, %v1528
    %v1530 = vpop.f32.mrf.mxu0
    %v1531 = vadd.f32 0.0, %v1530
    %1532 = vdwg.mxu0
    %v1533 = vld [vmem:[#allocation10] sm:$0x1]
    %v1535 = vperm.slane %v1533, 0
    %v1537 = vadd.f32 %v1524, %v1535
    %v1538 = vadd.f32 %v1526, %v1535
    %v1539 = vadd.f32 %v1529, %v1535
    %v1540 = vadd.f32 %v1531, %v1535
    %v1541 = vmax.f32 %v1537, 0.0
    %v1542 = vmax.f32 %v1538, 0.0
    %v1543 = vmax.f32 %v1539, 0.0
    %v1544 = vmax.f32 %v1540, 0.0
    %vm1545 = vcmask 64512
    %v1546 = vsel %vm1545, %v1213, -inf
    %1547 = vmax.xlane.f32.xlu0 %v1546
    %v1548 = vpop.xlane.xlu0 %1547
    %v1549 = vsel %vm1545, %v1214, -inf
    %1550 = vmax.xlane.f32.xlu0 %v1549
    %v1551 = vpop.xlane.xlu0 %1550
    %v1552 = vsel %vm1545, %v1215, -inf
    %1553 = vmax.xlane.f32.xlu0 %v1552
    %v1554 = vpop.xlane.xlu0 %1553
    %v1555 = vsel %vm1545, %v1216, -inf
    %1556 = vmax.xlane.f32.xlu0 %v1555
    %v1557 = vpop.xlane.xlu0 %1556
    %v1558 = vsub.f32 %v1213, %v1548
    %v1559 = vsub.f32 %v1214, %v1551
    %v1560 = vsub.f32 %v1215, %v1554
    %v1561 = vsub.f32 %v1216, %v1557
    %v1562 = vmul.f32 %v1558, 1.442695
    %v1563 = vpow.pop %v1562
    %v1564 = vmul.f32 %v1559, 1.442695
    %v1565 = vpow.pop %v1564
    %v1566 = vmul.f32 %v1560, 1.442695
    %v1567 = vpow.pop %v1566
    %v1568 = vmul.f32 %v1561, 1.442695
    %v1569 = vpow.pop %v1568
    %v1570 = vsel %vm1545, %v1563, 0.0
    %1571 = vadd.xlane.f32.xlu0 %v1570
    %v1572 = vpop.xlane.xlu0 %1571
    %v1573 = vsel %vm1545, %v1565, 0.0
    %1574 = vadd.xlane.f32.xlu0 %v1573
    %v1575 = vpop.xlane.xlu0 %1574
    %v1576 = vsel %vm1545, %v1567, 0.0
    %1577 = vadd.xlane.f32.xlu0 %v1576
    %v1578 = vpop.xlane.xlu0 %1577
    %v1579 = vsel %vm1545, %v1569, 0.0
    %1580 = vadd.xlane.f32.xlu0 %v1579
    %v1581 = vpop.xlane.xlu0 %1580
    %v1582 = vrcp.pop %v1572
    %v1583 = vrcp.pop %v1575
    %v1584 = vrcp.pop %v1578
    %v1585 = vrcp.pop %v1581
    %v1586 = vmul.f32 %v1563, %v1582
    %v1587 = vmul.f32 %v1565, %v1583
    %v1588 = vmul.f32 %v1567, %v1584
    %v1589 = vmul.f32 %v1569, %v1585
    %1591 = vset.pattern.permute.xlu0 0
    %1592 = vperm.xlu0 %1591, %v760
    %v1593 = vpop.permute.xlu0 %1592
    %1596 = vset.pattern.permute.xlu0 0
    %1597 = vperm.xlu0 %1596, %v761
    %v1598 = vpop.permute.xlu0 %1597
    %1601 = vset.pattern.permute.xlu0 0
    %1602 = vperm.xlu0 %1601, %v762
    %v1603 = vpop.permute.xlu0 %1602
    %1606 = vset.pattern.permute.xlu0 0
    %1607 = vperm.xlu0 %1606, %v763
    %v1608 = vpop.permute.xlu0 %1607
    %v1610 = vmul.f32 %v1586, %v1593
    %v1611 = vmul.f32 %v1587, %v1598
    %v1612 = vmul.f32 %v1588, %v1603
    %v1613 = vmul.f32 %v1589, %v1608
    %v1614 = vmul.f32 %v1541, %v1593
    %v1615 = vmul.f32 %v1542, %v1598
    %v1616 = vmul.f32 %v1543, %v1603
    %v1617 = vmul.f32 %v1544, %v1608
    %v1618 = vpack.c.bf16 %v1610, %v1610
    %v1619 = vpack.c.bf16 %v1611, %v1611
    %v1620 = vpack.c.bf16 %v1612, %v1612
    %v1621 = vpack.c.bf16 %v1613, %v1613
    %v1622 = vpack.c.bf16 %v1614, %v1614
    %v1623 = vpack.c.bf16 %v1615, %v1615
    %v1624 = vpack.c.bf16 %v1616, %v1616
    %v1625 = vpack.c.bf16 %v1617, %v1617
    %v1628 = vunpack.c.l.b16 %v1618
    %v1629 = vunpack.c.l.b16 %v1619
    %v1630 = vpack.c.b16 %v1629, %v1628
    %1632 = vxpose.xlu0.c.b16.start [1/8] %v1630, 128
    %1633 = vxpose.xlu0.c.b16.cont [2/8] 0, 128
    %1634 = vxpose.xlu0.c.b16.cont [3/8] 0, 128
    %1635 = vxpose.xlu0.c.b16.cont [4/8] 0, 128
    %1636 = vxpose.xlu0.c.b16.cont [5/8] 0, 128
    %1637 = vxpose.xlu0.c.b16.cont [6/8] 0, 128
    %1638 = vxpose.xlu0.c.b16.cont [7/8] 0, 128
    %1639 = vxpose.xlu0.c.b16.end [8/8] 0, 128
    %v1640 = vpop.trf.xlu0
    %v1641 = vpop.trf.xlu0
    %v1642 = vpop.trf.xlu0
    %v1643 = vpop.trf.xlu0
    %v1644 = vpop.trf.xlu0
    %v1645 = vpop.trf.xlu0
    %v1646 = vpop.trf.xlu0
    %v1647 = vpop.trf.xlu0
    %v1650 = vunpack.c.l.b16 %v1622
    %v1651 = vunpack.c.l.b16 %v1623
    %v1652 = vpack.c.b16 %v1651, %v1650
    %v1655 = vsel %vm764, %v1640, 0
    %1657 = vmatpush.bf16.msra.mxu0 0
    %1658 = vmatpush.bf16.msra.mxu0 0
    %1659 = vmatpush.bf16.msra.mxu0 0
    %1660 = vmatpush.bf16.msra.mxu0 0
    %1661 = vmatpush.bf16.msra.mxu0 0
    %1662 = vmatpush.bf16.msra.mxu0 0
    %1663 = vmatpush.bf16.msra.mxu0 0
    %1664 = vmatpush.bf16.msra.mxu0 %v1652
    %1665 = vmatmul.bf16.gmra.mxu0 %v1655
    %v1666 = vpop.f32.mrf.mxu0
    %v1667 = vadd.f32 0.0, %v1666
    %v1668 = vpop.f32.mrf.mxu0
    %1669 = vdwg.mxu0
    %v1672 = vunpack.c.l.b16 %v1620
    %v1673 = vunpack.c.l.b16 %v1621
    %v1674 = vpack.c.b16 %v1673, %v1672
    %1676 = vxpose.xlu0.c.b16.start [1/8] %v1674, 128
    %1677 = vxpose.xlu0.c.b16.cont [2/8] 0, 128
    %1678 = vxpose.xlu0.c.b16.cont [3/8] 0, 128
    %1679 = vxpose.xlu0.c.b16.cont [4/8] 0, 128
    %1680 = vxpose.xlu0.c.b16.cont [5/8] 0, 128
    %1681 = vxpose.xlu0.c.b16.cont [6/8] 0, 128
    %1682 = vxpose.xlu0.c.b16.cont [7/8] 0, 128
    %1683 = vxpose.xlu0.c.b16.end [8/8] 0, 128
    %v1684 = vpop.trf.xlu0
    %v1685 = vpop.trf.xlu0
    %v1686 = vpop.trf.xlu0
    %v1687 = vpop.trf.xlu0
    %v1688 = vpop.trf.xlu0
    %v1689 = vpop.trf.xlu0
    %v1690 = vpop.trf.xlu0
    %v1691 = vpop.trf.xlu0
    %v1694 = vunpack.c.l.b16 %v1624
    %v1695 = vunpack.c.l.b16 %v1625
    %v1696 = vpack.c.b16 %v1695, %v1694
    %v1699 = vsel %vm764, %v1684, 0
    %1701 = vmatpush.bf16.msra.mxu0 0
    %1702 = vmatpush.bf16.msra.mxu0 0
    %1703 = vmatpush.bf16.msra.mxu0 0
    %1704 = vmatpush.bf16.msra.mxu0 0
    %1705 = vmatpush.bf16.msra.mxu0 0
    %1706 = vmatpush.bf16.msra.mxu0 0
    %1707 = vmatpush.bf16.msra.mxu0 0
    %1708 = vmatpush.bf16.msra.mxu0 %v1696
    %1709 = vmatmul.bf16.gmra.mxu0 %v1699
    %v1710 = vpop.f32.mrf.mxu0
    %v1711 = vadd.f32 0.0, %v1710
    %v1712 = vpop.f32.mrf.mxu0
    %1713 = vdwg.mxu0
    %1715 = vmatpush.bf16.msra.mxu0 0
    %1716 = vmatpush.bf16.msra.mxu0 0
    %1717 = vmatpush.bf16.msra.mxu0 0
    %1718 = vmatpush.bf16.msra.mxu0 0
    %1719 = vmatpush.bf16.msra.mxu0 0
    %1720 = vmatpush.bf16.msra.mxu0 0
    %1721 = vmatpush.bf16.msra.mxu0 0
    %1722 = vmatpush.bf16.msra.mxu0 %v837
    %1723 = vmatmul.bf16.gmra.mxu0 %v1655
    %v1724 = vpop.f32.mrf.mxu0
    %v1725 = vadd.f32 0.0, %v1724
    %v1726 = vpop.f32.mrf.mxu0
    %1727 = vdwg.mxu0
    %1729 = vmatpush.bf16.msra.mxu0 0
    %1730 = vmatpush.bf16.msra.mxu0 0
    %1731 = vmatpush.bf16.msra.mxu0 0
    %1732 = vmatpush.bf16.msra.mxu0 0
    %1733 = vmatpush.bf16.msra.mxu0 0
    %1734 = vmatpush.bf16.msra.mxu0 0
    %1735 = vmatpush.bf16.msra.mxu0 0
    %1736 = vmatpush.bf16.msra.mxu0 %v865
    %1737 = vmatmul.bf16.gmra.mxu0 %v1699
    %v1738 = vpop.f32.mrf.mxu0
    %v1739 = vadd.f32 0.0, %v1738
    %v1740 = vpop.f32.mrf.mxu0
    %1741 = vdwg.mxu0
    %v1742 = vpack.c.bf16 %v1725, %v1725
    %v1743 = vpack.c.bf16 %v1739, %v1739
    %v1745 = vsel %vm764, %v1742, 0
    %1747 = vmatpush.bf16.msra.mxu0 0
    %1748 = vmatpush.bf16.msra.mxu0 0
    %1749 = vmatpush.bf16.msra.mxu0 0
    %1750 = vmatpush.bf16.msra.mxu0 0
    %1751 = vmatpush.bf16.msra.mxu0 0
    %1752 = vmatpush.bf16.msra.mxu0 0
    %1753 = vmatpush.bf16.msra.mxu0 0
    %1754 = vmatpush.bf16.msra.mxu0 %v1630
    %1755 = vmatmul.bf16.gmra.mxu0 %v1745
    %v1756 = vpop.f32.mrf.mxu0
    %v1757 = vadd.f32 0.0, %v1756
    %v1758 = vpop.f32.mrf.mxu0
    %1759 = vdwg.mxu0
    %v1761 = vsel %vm764, %v1743, 0
    %1763 = vmatpush.bf16.msra.mxu0 0
    %1764 = vmatpush.bf16.msra.mxu0 0
    %1765 = vmatpush.bf16.msra.mxu0 0
    %1766 = vmatpush.bf16.msra.mxu0 0
    %1767 = vmatpush.bf16.msra.mxu0 0
    %1768 = vmatpush.bf16.msra.mxu0 0
    %1769 = vmatpush.bf16.msra.mxu0 0
    %1770 = vmatpush.bf16.msra.mxu0 %v1674
    %1771 = vmatmul.bf16.gmra.mxu0 %v1761
    %v1772 = vpop.f32.mrf.mxu0
    %v1773 = vadd.f32 0.0, %v1772
    %v1774 = vpop.f32.mrf.mxu0
    %1775 = vdwg.mxu0
    %v1777 = vsel %vm1545, %v1630, 0
    %1779 = vmatpush.bf16.xpose.msra.mxu0 0
    %1780 = vmatpush.bf16.xpose.msra.mxu0 0
    %1781 = vmatpush.bf16.xpose.msra.mxu0 0
    %1782 = vmatpush.bf16.xpose.msra.mxu0 0
    %1783 = vmatpush.bf16.xpose.msra.mxu0 0
    %1784 = vmatpush.bf16.xpose.msra.mxu0 0
    %1785 = vmatpush.bf16.xpose.msra.mxu0 0
    %1786 = vmatpush.bf16.xpose.msra.mxu0 %v1777
    %1787 = vmatmul.bf16.gmra.mxu0 %v1777
    %v1788 = vpop.f32.mrf.mxu0
    %v1789 = vadd.f32 0.0, %v1788
    %v1790 = vpop.f32.mrf.mxu0
    %v1791 = vadd.f32 0.0, %v1790
    %1792 = vdwg.mxu0
    %v1794 = vsel %vm1545, %v1674, 0
    %1796 = vmatpush.bf16.xpose.msra.mxu0 0
    %1797 = vmatpush.bf16.xpose.msra.mxu0 0
    %1798 = vmatpush.bf16.xpose.msra.mxu0 0
    %1799 = vmatpush.bf16.xpose.msra.mxu0 0
    %1800 = vmatpush.bf16.xpose.msra.mxu0 0
    %1801 = vmatpush.bf16.xpose.msra.mxu0 0
    %1802 = vmatpush.bf16.xpose.msra.mxu0 0
    %1803 = vmatpush.bf16.xpose.msra.mxu0 %v1794
    %1804 = vmatmul.bf16.gmra.mxu0 %v1794
    %v1805 = vpop.f32.mrf.mxu0
    %v1806 = vadd.f32 0.0, %v1805
    %v1807 = vpop.f32.mrf.mxu0
    %v1808 = vadd.f32 0.0, %v1807
    %1809 = vdwg.mxu0
    %v1810 = vsub.f32 %v752, %v1789
    %v1811 = vsub.f32 %v753, %v1791
    %v1812 = vsub.f32 %v754, %v1806
    %v1813 = vsub.f32 %v755, %v1808
    %v1814 = vmul.f32 %v1810, %v1810
    %v1815 = vmul.f32 %v1811, %v1811
    %v1816 = vmul.f32 %v1812, %v1812
    %v1817 = vmul.f32 %v1813, %v1813
    %v1818 = vsel %vm764, %v1814, 0.0
    %v1819 = vsel %vm764, %v1815, 0.0
    %v1820 = vadd.f32 %v1818, %v1819
    %v1821 = vsel %vm764, %v1816, 0.0
    %v1822 = vadd.f32 %v1820, %v1821
    %v1823 = vsel %vm764, %v1817, 0.0
    %v1824 = vadd.f32 %v1822, %v1823
    %1825 = vadd.xlane.f32.xlu0 %v1824
    %v1826 = vpop.xlane.xlu0 %1825
    %v1827 = vrot.slane %v1826, 4
    %v1828 = vadd.f32 %v1826, %v1827
    %v1829 = vrot.slane %v1828, 2
    %v1830 = vadd.f32 %v1828, %v1829
    %v1831 = vrot.slane %v1830, 1
    %v1832 = vadd.f32 %v1830, %v1831
    %s1833 = vtos %v1832
    %v1834 = vsub.f32 0.0, %v1610
    %v1835 = vsub.f32 0.0, %v1611
    %v1836 = vsub.f32 0.0, %v1612
    %v1837 = vsub.f32 0.0, %v1613
    %v1838 = vadd.f32 %v1610, 1e-15
    %v1839 = vadd.f32 %v1611, 1e-15
    %v1840 = vadd.f32 %v1612, 1e-15
    %v1841 = vadd.f32 %v1613, 1e-15
    %v1842 = vlog2.pop %v1838
    %v1843 = vmul.f32 %v1842, 0.6931472
    %v1844 = vlog2.pop %v1839
    %v1845 = vmul.f32 %v1844, 0.6931472
    %v1846 = vlog2.pop %v1840
    %v1847 = vmul.f32 %v1846, 0.6931472
    %v1848 = vlog2.pop %v1841
    %v1849 = vmul.f32 %v1848, 0.6931472
    %v1850 = vmul.f32 %v1834, %v1843
    %v1851 = vmul.f32 %v1835, %v1845
    %v1852 = vmul.f32 %v1836, %v1847
    %v1853 = vmul.f32 %v1837, %v1849
    %v1854 = vsel %vm1545, %v1850, 0.0
    %v1855 = vsel %vm1545, %v1851, 0.0
    %v1856 = vadd.f32 %v1854, %v1855
    %v1857 = vsel %vm1545, %v1852, 0.0
    %v1858 = vadd.f32 %v1856, %v1857
    %v1859 = vsel %vm1545, %v1853, 0.0
    %v1860 = vadd.f32 %v1858, %v1859
    %1861 = vadd.xlane.f32.xlu0 %v1860
    %v1862 = vpop.xlane.xlu0 %1861
    %v1863 = vrot.slane %v1862, 4
    %v1864 = vadd.f32 %v1862, %v1863
    %v1865 = vrot.slane %v1864, 2
    %v1866 = vadd.f32 %v1864, %v1865
    %v1867 = vrot.slane %v1866, 1
    %v1868 = vadd.f32 %v1866, %v1867
    %s1869 = vtos %v1868
    %v1870 = vsel %vm1545, %v1757, 0.0
    %1871 = vadd.xlane.f32.xlu0 %v1870
    %v1872 = vpop.xlane.xlu0 %1871
    %v1873 = vsel %vm1545, %v1773, 0.0
    %1874 = vadd.xlane.f32.xlu0 %v1873
    %v1875 = vpop.xlane.xlu0 %1874
    %v1876 = vadd.f32 %v1872, 1.0
    %v1877 = vadd.f32 %v1875, 1.0
    %v1878 = vrsqrt.pop %v1876
    %v1879 = vmul.f32 %v1878, %v1876
    %v1880 = vmul.f32 %v1879, %v1878
    %v1881 = vmul.f32 0.5, %v1880
    %v1882 = vsub.f32 1.5, %v1881
    %v1883 = vmul.f32 %v1878, %v1882
    %vm1884 = vweird.f32 %v1876
    %vm1885 = vweird.f32 %v1878
    %vm1886 = vmor %vm1884, %vm1885
    %v1887 = vsel %vm1886, %v1878, %v1883
    %v1888 = vrsqrt.pop %v1877
    %v1889 = vmul.f32 %v1888, %v1877
    %v1890 = vmul.f32 %v1889, %v1888
    %v1891 = vmul.f32 0.5, %v1890
    %v1892 = vsub.f32 1.5, %v1891
    %v1893 = vmul.f32 %v1888, %v1892
    %vm1894 = vweird.f32 %v1877
    %vm1895 = vweird.f32 %v1888
    %vm1896 = vmor %vm1894, %vm1895
    %v1897 = vsel %vm1896, %v1888, %v1893
    %v1898 = vpack.c.bf16 %v1757, %v1757
    %v1899 = vpack.c.bf16 %v1773, %v1773
    %v1900 = vpack.c.bf16 %v1711, %v1667
    %v1901 = vld [vmem:[%s41] sm:$0xff]
    %v1902 = vld [vmem:[%s41 + $0x8] sm:$0xff]
    %v1903 = vld [vmem:[%s41 + $0x10] sm:$0xff]
    %v1904 = vld [vmem:[%s41 + $0x18] sm:$0xff]
    %v1905 = vpack.c.bf16 %v1902, %v1901
    %v1906 = vpack.c.bf16 %v1904, %v1903
    %v1908 = vsel %vm1313, %v1900, 0
    %1910 = vmatpush.bf16.msra.mxu0 0
    %1911 = vmatpush.bf16.msra.mxu0 0
    %1912 = vmatpush.bf16.msra.mxu0 0
    %1913 = vmatpush.bf16.msra.mxu0 0
    %1914 = vmatpush.bf16.msra.mxu0 0
    %1915 = vmatpush.bf16.msra.mxu0 0
    %1916 = vmatpush.bf16.msra.mxu0 %v1906
    %1917 = vmatpush.bf16.msra.mxu0 %v1905
    %1918 = vmatmul.bf16.gmra.mxu0 %v1908
    %v1919 = vpop.f32.mrf.mxu0
    %v1920 = vadd.f32 0.0, %v1919
    %v1921 = vpop.f32.mrf.mxu0
    %v1922 = vadd.f32 0.0, %v1921
    %1923 = vdwg.mxu0
    %v1924 = vmul.f32 %v1887, %v1920
    %v1925 = vmul.f32 %v1897, %v1922
    %v1926 = vpack.c.bf16 %v1924, %v1924
    %v1927 = vpack.c.bf16 %v1925, %v1925
    %v1929 = vsel %vm1545, %v1898, 0
    %vm1931 = vcmask 1043456
    %v1933 = vsel %vm1931, %v1926, 0
    %1935 = vmatpush.bf16.msra.mxu0 0
    %1936 = vmatpush.bf16.msra.mxu0 0
    %1937 = vmatpush.bf16.msra.mxu0 0
    %1938 = vmatpush.bf16.msra.mxu0 0
    %1939 = vmatpush.bf16.msra.mxu0 0
    %1940 = vmatpush.bf16.msra.mxu0 0
    %1941 = vmatpush.bf16.msra.mxu0 0
    %1942 = vmatpush.bf16.msra.mxu0 %v1933
    %1943 = vmatmul.bf16.gmra.mxu0 %v1929
    %v1944 = vpop.f32.mrf.mxu0
    %v1945 = vadd.f32 %v1924, %v1944
    %v1946 = vpop.f32.mrf.mxu0
    %1947 = vdwg.mxu0
    %v1949 = vsel %vm1545, %v1899, 0
    %v1952 = vsel %vm1931, %v1927, 0
    %1954 = vmatpush.bf16.msra.mxu0 0
    %1955 = vmatpush.bf16.msra.mxu0 0
    %1956 = vmatpush.bf16.msra.mxu0 0
    %1957 = vmatpush.bf16.msra.mxu0 0
    %1958 = vmatpush.bf16.msra.mxu0 0
    %1959 = vmatpush.bf16.msra.mxu0 0
    %1960 = vmatpush.bf16.msra.mxu0 0
    %1961 = vmatpush.bf16.msra.mxu0 %v1952
    %1962 = vmatmul.bf16.gmra.mxu0 %v1949
    %v1963 = vpop.f32.mrf.mxu0
    %v1964 = vadd.f32 %v1925, %v1963
    %v1965 = vpop.f32.mrf.mxu0
    %1966 = vdwg.mxu0
    %v1967 = vmul.f32 %v1887, %v1945
    %v1968 = vmul.f32 %v1897, %v1964
    %v1969 = vld [vmem:[#allocation11] sm:$0x1]
    %v1971 = vperm.slane %v1969, 0
    %v1973 = vadd.f32 %v1967, %v1971
    %v1974 = vadd.f32 %v1968, %v1971
    %v1975 = vmax.f32 %v1973, 0.0
    %v1976 = vmax.f32 %v1974, 0.0
    %v1977 = vmul.f32 %v1887, %v1975
    %v1978 = vmul.f32 %v1897, %v1976
    %v1979 = vpack.c.bf16 %v1977, %v1977
    %v1980 = vpack.c.bf16 %v1978, %v1978
    %v1982 = vsel %vm1931, %v1979, 0
    %1984 = vmatpush.bf16.msra.mxu0 0
    %1985 = vmatpush.bf16.msra.mxu0 0
    %1986 = vmatpush.bf16.msra.mxu0 0
    %1987 = vmatpush.bf16.msra.mxu0 0
    %1988 = vmatpush.bf16.msra.mxu0 0
    %1989 = vmatpush.bf16.msra.mxu0 0
    %1990 = vmatpush.bf16.msra.mxu0 0
    %1991 = vmatpush.bf16.msra.mxu0 %v1982
    %1992 = vmatmul.bf16.gmra.mxu0 %v1929
    %v1993 = vpop.f32.mrf.mxu0
    %v1994 = vadd.f32 %v1977, %v1993
    %v1995 = vpop.f32.mrf.mxu0
    %1996 = vdwg.mxu0
    %v1998 = vsel %vm1931, %v1980, 0
    %2000 = vmatpush.bf16.msra.mxu0 0
    %2001 = vmatpush.bf16.msra.mxu0 0
    %2002 = vmatpush.bf16.msra.mxu0 0
    %2003 = vmatpush.bf16.msra.mxu0 0
    %2004 = vmatpush.bf16.msra.mxu0 0
    %2005 = vmatpush.bf16.msra.mxu0 0
    %2006 = vmatpush.bf16.msra.mxu0 0
    %2007 = vmatpush.bf16.msra.mxu0 %v1998
    %2008 = vmatmul.bf16.gmra.mxu0 %v1949
    %v2009 = vpop.f32.mrf.mxu0
    %v2010 = vadd.f32 %v1978, %v2009
    %v2011 = vpop.f32.mrf.mxu0
    %2012 = vdwg.mxu0
    %v2013 = vmul.f32 %v1887, %v1994
    %v2014 = vmul.f32 %v1897, %v2010
    %v2015 = vpack.c.bf16 %v2014, %v2013
    %v2016 = vld [vmem:[#allocation13] sm:$0xff]
    %v2017 = vld [vmem:[#allocation13 + $0x8] sm:$0xff]
    %v2018 = vpack.c.bf16 %v2017, %v2016
    %v2020 = vsel %vm764, %v2015, 0
    %2022 = vmatpush.bf16.msra.mxu0 0
    %2023 = vmatpush.bf16.msra.mxu0 0
    %2024 = vmatpush.bf16.msra.mxu0 0
    %2025 = vmatpush.bf16.msra.mxu0 0
    %2026 = vmatpush.bf16.msra.mxu0 0
    %2027 = vmatpush.bf16.msra.mxu0 0
    %2028 = vmatpush.bf16.msra.mxu0 0
    %2029 = vmatpush.bf16.msra.mxu0 %v2018
    %2030 = vmatmul.bf16.gmra.mxu0 %v2020
    %v2031 = vpop.f32.mrf.mxu0
    %v2032 = vadd.f32 0.0, %v2031
    %v2033 = vpop.f32.mrf.mxu0
    %v2034 = vadd.f32 0.0, %v2033
    %2035 = vdwg.mxu0
    %v2036 = vld [vmem:[#allocation14] sm:$0x1]
    %v2038 = vperm.slane %v2036, 0
    %v2040 = vadd.f32 %v2032, %v2038
    %v2041 = vadd.f32 %v2034, %v2038
    %v2042 = vmax.f32 %v2040, 0.0
    %v2043 = vmax.f32 %v2041, 0.0
    %v2044 = vmul.f32 %v1887, %v2042
    %v2045 = vmul.f32 %v1897, %v2043
    %v2046 = vpack.c.bf16 %v2044, %v2044
    %v2047 = vpack.c.bf16 %v2045, %v2045
    %v2049 = vsel %vm1931, %v2046, 0
    %2051 = vmatpush.bf16.msra.mxu0 0
    %2052 = vmatpush.bf16.msra.mxu0 0
    %2053 = vmatpush.bf16.msra.mxu0 0
    %2054 = vmatpush.bf16.msra.mxu0 0
    %2055 = vmatpush.bf16.msra.mxu0 0
    %2056 = vmatpush.bf16.msra.mxu0 0
    %2057 = vmatpush.bf16.msra.mxu0 0
    %2058 = vmatpush.bf16.msra.mxu0 %v2049
    %2059 = vmatmul.bf16.gmra.mxu0 %v1929
    %v2060 = vpop.f32.mrf.mxu0
    %v2061 = vadd.f32 %v2044, %v2060
    %v2062 = vpop.f32.mrf.mxu0
    %2063 = vdwg.mxu0
    %v2065 = vsel %vm1931, %v2047, 0
    %2067 = vmatpush.bf16.msra.mxu0 0
    %2068 = vmatpush.bf16.msra.mxu0 0
    %2069 = vmatpush.bf16.msra.mxu0 0
    %2070 = vmatpush.bf16.msra.mxu0 0
    %2071 = vmatpush.bf16.msra.mxu0 0
    %2072 = vmatpush.bf16.msra.mxu0 0
    %2073 = vmatpush.bf16.msra.mxu0 0
    %2074 = vmatpush.bf16.msra.mxu0 %v2065
    %2075 = vmatmul.bf16.gmra.mxu0 %v1949
    %v2076 = vpop.f32.mrf.mxu0
    %v2077 = vadd.f32 %v2045, %v2076
    %v2078 = vpop.f32.mrf.mxu0
    %2079 = vdwg.mxu0
    %v2080 = vmul.f32 %v1887, %v2061
    %v2081 = vmul.f32 %v1897, %v2077
    %v2082 = vpack.c.bf16 %v2081, %v2080
    %v2083 = vld [vmem:[#allocation16] sm:$0xff]
    %v2084 = vld [vmem:[#allocation16 + $0x8] sm:$0xff]
    %v2085 = vpack.c.bf16 %v2084, %v2083
    %v2087 = vsel %vm764, %v2082, 0
    %2089 = vmatpush.bf16.msra.mxu0 0
    %2090 = vmatpush.bf16.msra.mxu0 0
    %2091 = vmatpush.bf16.msra.mxu0 0
    %2092 = vmatpush.bf16.msra.mxu0 0
    %2093 = vmatpush.bf16.msra.mxu0 0
    %2094 = vmatpush.bf16.msra.mxu0 0
    %2095 = vmatpush.bf16.msra.mxu0 0
    %2096 = vmatpush.bf16.msra.mxu0 %v2085
    %2097 = vmatmul.bf16.gmra.mxu0 %v2087
    %v2098 = vpop.f32.mrf.mxu0
    %v2099 = vadd.f32 0.0, %v2098
    %v2100 = vpop.f32.mrf.mxu0
    %v2101 = vadd.f32 0.0, %v2100
    %2102 = vdwg.mxu0
    %v2103 = vld [vmem:[#allocation17] sm:$0x1]
    %v2105 = vperm.slane %v2103, 0
    %v2107 = vadd.f32 %v2099, %v2105
    %v2108 = vadd.f32 %v2101, %v2105
    %v2109 = vmax.f32 %v2107, 0.0
    %v2110 = vmax.f32 %v2108, 0.0
    %v2111 = vpack.c.bf16 %v2110, %v2109
    %v2112 = vld [vmem:[%s53] sm:$0xff]
    %v2113 = vld [vmem:[%s53 + $0x8] sm:$0xff]
    %v2114 = vpack.c.bf16 %v2113, %v2112
    %v2116 = vsel %vm764, %v2111, 0
    %2118 = vmatpush.bf16.msra.mxu0 0
    %2119 = vmatpush.bf16.msra.mxu0 0
    %2120 = vmatpush.bf16.msra.mxu0 0
    %2121 = vmatpush.bf16.msra.mxu0 0
    %2122 = vmatpush.bf16.msra.mxu0 0
    %2123 = vmatpush.bf16.msra.mxu0 0
    %2124 = vmatpush.bf16.msra.mxu0 0
    %2125 = vmatpush.bf16.msra.mxu0 %v2114
    %2126 = vmatmul.bf16.gmra.mxu0 %v2116
    %v2127 = vpop.f32.mrf.mxu0
    %v2128 = vadd.f32 0.0, %v2127
    %v2129 = vpop.f32.mrf.mxu0
    %v2130 = vadd.f32 0.0, %v2129
    %2131 = vdwg.mxu0
    %v2132 = vmul.f32 %v1887, %v2128
    %v2133 = vmul.f32 %v1897, %v2130
    %v2134 = vpack.c.bf16 %v2132, %v2132
    %v2135 = vpack.c.bf16 %v2133, %v2133
    %v2137 = vsel %vm1931, %v2134, 0
    %2139 = vmatpush.bf16.msra.mxu0 0
    %2140 = vmatpush.bf16.msra.mxu0 0
    %2141 = vmatpush.bf16.msra.mxu0 0
    %2142 = vmatpush.bf16.msra.mxu0 0
    %2143 = vmatpush.bf16.msra.mxu0 0
    %2144 = vmatpush.bf16.msra.mxu0 0
    %2145 = vmatpush.bf16.msra.mxu0 0
    %2146 = vmatpush.bf16.msra.mxu0 %v2137
    %2147 = vmatmul.bf16.gmra.mxu0 %v1929
    %v2148 = vpop.f32.mrf.mxu0
    %v2149 = vadd.f32 %v2132, %v2148
    %v2150 = vpop.f32.mrf.mxu0
    %2151 = vdwg.mxu0
    %v2153 = vsel %vm1931, %v2135, 0
    %2155 = vmatpush.bf16.msra.mxu0 0
    %2156 = vmatpush.bf16.msra.mxu0 0
    %2157 = vmatpush.bf16.msra.mxu0 0
    %2158 = vmatpush.bf16.msra.mxu0 0
    %2159 = vmatpush.bf16.msra.mxu0 0
    %2160 = vmatpush.bf16.msra.mxu0 0
    %2161 = vmatpush.bf16.msra.mxu0 0
    %2162 = vmatpush.bf16.msra.mxu0 %v2153
    %2163 = vmatmul.bf16.gmra.mxu0 %v1949
    %v2164 = vpop.f32.mrf.mxu0
    %v2165 = vadd.f32 %v2133, %v2164
    %v2166 = vpop.f32.mrf.mxu0
    %2167 = vdwg.mxu0
    %v2168 = vmul.f32 %v1887, %v2149
    %v2169 = vmul.f32 %v1897, %v2165
    %v2170 = vld [vmem:[#allocation19] sm:$0x1]
    %v2172 = vperm.slane %v2170, 0
    %v2174 = vadd.f32 %v2168, %v2172
    %v2175 = vadd.f32 %v2169, %v2172
    %v2176 = vmul.f32 %v1887, %v1667
    %v2177 = vmul.f32 %v1897, %v1711
    %v2178 = vpack.c.bf16 %v2176, %v2176
    %v2179 = vpack.c.bf16 %v2177, %v2177
    %v2181 = vsel %vm1931, %v2178, 0
    %2183 = vmatpush.bf16.msra.mxu0 0
    %2184 = vmatpush.bf16.msra.mxu0 0
    %2185 = vmatpush.bf16.msra.mxu0 0
    %2186 = vmatpush.bf16.msra.mxu0 0
    %2187 = vmatpush.bf16.msra.mxu0 0
    %2188 = vmatpush.bf16.msra.mxu0 0
    %2189 = vmatpush.bf16.msra.mxu0 0
    %2190 = vmatpush.bf16.msra.mxu0 %v2181
    %2191 = vmatmul.bf16.gmra.mxu0 %v1929
    %v2192 = vpop.f32.mrf.mxu0
    %v2193 = vadd.f32 %v2176, %v2192
    %v2194 = vpop.f32.mrf.mxu0
    %2195 = vdwg.mxu0
    %v2197 = vsel %vm1931, %v2179, 0
    %2199 = vmatpush.bf16.msra.mxu0 0
    %2200 = vmatpush.bf16.msra.mxu0 0
    %2201 = vmatpush.bf16.msra.mxu0 0
    %2202 = vmatpush.bf16.msra.mxu0 0
    %2203 = vmatpush.bf16.msra.mxu0 0
    %2204 = vmatpush.bf16.msra.mxu0 0
    %2205 = vmatpush.bf16.msra.mxu0 0
    %2206 = vmatpush.bf16.msra.mxu0 %v2197
    %2207 = vmatmul.bf16.gmra.mxu0 %v1949
    %v2208 = vpop.f32.mrf.mxu0
    %v2209 = vadd.f32 %v2177, %v2208
    %v2210 = vpop.f32.mrf.mxu0
    %2211 = vdwg.mxu0
    %v2212 = vmul.f32 %v1887, %v2193
    %v2213 = vmul.f32 %v1897, %v2209
    %v2214 = vpack.c.bf16 %v2213, %v2212
    %v2215 = vld [vmem:[%s57] sm:$0xff]
    %v2216 = vld [vmem:[%s57 + $0x8] sm:$0xff]
    %v2217 = vld [vmem:[%s57 + $0x10] sm:$0xff]
    %v2218 = vld [vmem:[%s57 + $0x18] sm:$0xff]
    %v2219 = vpack.c.bf16 %v2216, %v2215
    %v2220 = vpack.c.bf16 %v2218, %v2217
    %v2222 = vsel %vm1313, %v2214, 0
    %2224 = vmatpush.bf16.msra.mxu0 0
    %2225 = vmatpush.bf16.msra.mxu0 0
    %2226 = vmatpush.bf16.msra.mxu0 0
    %2227 = vmatpush.bf16.msra.mxu0 0
    %2228 = vmatpush.bf16.msra.mxu0 0
    %2229 = vmatpush.bf16.msra.mxu0 0
    %2230 = vmatpush.bf16.msra.mxu0 %v2220
    %2231 = vmatpush.bf16.msra.mxu0 %v2219
    %2232 = vmatmul.bf16.gmra.mxu0 %v2222
    %v2233 = vpop.f32.mrf.mxu0
    %v2234 = vadd.f32 0.0, %v2233
    %v2235 = vpop.f32.mrf.mxu0
    %v2236 = vadd.f32 0.0, %v2235
    %2237 = vdwg.mxu0
    %v2238 = vld [vmem:[#allocation20] sm:$0x1]
    %v2240 = vperm.slane %v2238, 0
    %v2242 = vadd.f32 %v2234, %v2240
    %v2243 = vadd.f32 %v2236, %v2240
    %v2244 = vmax.f32 %v2242, 0.0
    %v2245 = vmax.f32 %v2243, 0.0
    %v2246 = vmul.f32 %v1887, %v2244
    %v2247 = vmul.f32 %v1897, %v2245
    %v2248 = vpack.c.bf16 %v2246, %v2246
    %v2249 = vpack.c.bf16 %v2247, %v2247
    %v2251 = vsel %vm1931, %v2248, 0
    %2253 = vmatpush.bf16.msra.mxu0 0
    %2254 = vmatpush.bf16.msra.mxu0 0
    %2255 = vmatpush.bf16.msra.mxu0 0
    %2256 = vmatpush.bf16.msra.mxu0 0
    %2257 = vmatpush.bf16.msra.mxu0 0
    %2258 = vmatpush.bf16.msra.mxu0 0
    %2259 = vmatpush.bf16.msra.mxu0 0
    %2260 = vmatpush.bf16.msra.mxu0 %v2251
    %2261 = vmatmul.bf16.gmra.mxu0 %v1929
    %v2262 = vpop.f32.mrf.mxu0
    %v2263 = vadd.f32 %v2246, %v2262
    %v2264 = vpop.f32.mrf.mxu0
    %2265 = vdwg.mxu0
    %v2267 = vsel %vm1931, %v2249, 0
    %2269 = vmatpush.bf16.msra.mxu0 0
    %2270 = vmatpush.bf16.msra.mxu0 0
    %2271 = vmatpush.bf16.msra.mxu0 0
    %2272 = vmatpush.bf16.msra.mxu0 0
    %2273 = vmatpush.bf16.msra.mxu0 0
    %2274 = vmatpush.bf16.msra.mxu0 0
    %2275 = vmatpush.bf16.msra.mxu0 0
    %2276 = vmatpush.bf16.msra.mxu0 %v2267
    %2277 = vmatmul.bf16.gmra.mxu0 %v1949
    %v2278 = vpop.f32.mrf.mxu0
    %v2279 = vadd.f32 %v2247, %v2278
    %v2280 = vpop.f32.mrf.mxu0
    %2281 = vdwg.mxu0
    %v2282 = vmul.f32 %v1887, %v2263
    %v2283 = vmul.f32 %v1897, %v2279
    %v2284 = vpack.c.bf16 %v2283, %v2282
    %v2285 = vld [vmem:[%s61] sm:$0xff]
    %v2286 = vld [vmem:[%s61 + $0x8] sm:$0xff]
    %v2287 = vld [vmem:[%s61 + $0x10] sm:$0xff]
    %v2288 = vld [vmem:[%s61 + $0x18] sm:$0xff]
    %v2289 = vpack.c.bf16 %v2286, %v2285
    %v2290 = vpack.c.bf16 %v2288, %v2287
    %v2292 = vsel %vm1313, %v2284, 0
    %2294 = vmatpush.bf16.msra.mxu0 0
    %2295 = vmatpush.bf16.msra.mxu0 0
    %2296 = vmatpush.bf16.msra.mxu0 0
    %2297 = vmatpush.bf16.msra.mxu0 0
    %2298 = vmatpush.bf16.msra.mxu0 0
    %2299 = vmatpush.bf16.msra.mxu0 0
    %2300 = vmatpush.bf16.msra.mxu0 %v2290
    %2301 = vmatpush.bf16.msra.mxu0 %v2289
    %2302 = vmatmul.bf16.gmra.mxu0 %v2292
    %v2303 = vpop.f32.mrf.mxu0
    %v2304 = vadd.f32 0.0, %v2303
    %v2305 = vpop.f32.mrf.mxu0
    %v2306 = vadd.f32 0.0, %v2305
    %2307 = vdwg.mxu0
    %v2308 = vld [vmem:[#allocation22] sm:$0x1]
    %v2310 = vperm.slane %v2308, 0
    %v2312 = vadd.f32 %v2304, %v2310
    %v2313 = vadd.f32 %v2306, %v2310
    %v2314 = vmax.f32 %v2312, 0.0
    %v2315 = vmax.f32 %v2313, 0.0
    %v2316 = vmul.f32 %v1887, %v2314
    %v2317 = vmul.f32 %v1897, %v2315
    %v2318 = vpack.c.bf16 %v2316, %v2316
    %v2319 = vpack.c.bf16 %v2317, %v2317
    %v2321 = vsel %vm1931, %v2318, 0
    %2323 = vmatpush.bf16.msra.mxu0 0
    %2324 = vmatpush.bf16.msra.mxu0 0
    %2325 = vmatpush.bf16.msra.mxu0 0
    %2326 = vmatpush.bf16.msra.mxu0 0
    %2327 = vmatpush.bf16.msra.mxu0 0
    %2328 = vmatpush.bf16.msra.mxu0 0
    %2329 = vmatpush.bf16.msra.mxu0 0
    %2330 = vmatpush.bf16.msra.mxu0 %v2321
    %2331 = vmatmul.bf16.gmra.mxu0 %v1929
    %v2332 = vpop.f32.mrf.mxu0
    %v2333 = vadd.f32 %v2316, %v2332
    %v2334 = vpop.f32.mrf.mxu0
    %2335 = vdwg.mxu0
    %v2337 = vsel %vm1931, %v2319, 0
    %2339 = vmatpush.bf16.msra.mxu0 0
    %2340 = vmatpush.bf16.msra.mxu0 0
    %2341 = vmatpush.bf16.msra.mxu0 0
    %2342 = vmatpush.bf16.msra.mxu0 0
    %2343 = vmatpush.bf16.msra.mxu0 0
    %2344 = vmatpush.bf16.msra.mxu0 0
    %2345 = vmatpush.bf16.msra.mxu0 0
    %2346 = vmatpush.bf16.msra.mxu0 %v2337
    %2347 = vmatmul.bf16.gmra.mxu0 %v1949
    %v2348 = vpop.f32.mrf.mxu0
    %v2349 = vadd.f32 %v2317, %v2348
    %v2350 = vpop.f32.mrf.mxu0
    %2351 = vdwg.mxu0
    %v2352 = vmul.f32 %v1887, %v2333
    %v2353 = vmul.f32 %v1897, %v2349
    %v2354 = vpack.c.bf16 %v2353, %v2352
    %v2355 = vld [vmem:[%s65] sm:$0xff]
    %v2356 = vld [vmem:[%s65 + $0x8] sm:$0xff]
    %v2357 = vld [vmem:[%s65 + $0x10] sm:$0xff]
    %v2358 = vld [vmem:[%s65 + $0x18] sm:$0xff]
    %v2359 = vpack.c.bf16 %v2356, %v2355
    %v2360 = vpack.c.bf16 %v2358, %v2357
    %v2362 = vsel %vm1313, %v2354, 0
    %2364 = vmatpush.bf16.msra.mxu0 0
    %2365 = vmatpush.bf16.msra.mxu0 0
    %2366 = vmatpush.bf16.msra.mxu0 0
    %2367 = vmatpush.bf16.msra.mxu0 0
    %2368 = vmatpush.bf16.msra.mxu0 0
    %2369 = vmatpush.bf16.msra.mxu0 0
    %2370 = vmatpush.bf16.msra.mxu0 %v2360
    %2371 = vmatpush.bf16.msra.mxu0 %v2359
    %2372 = vmatmul.bf16.gmra.mxu0 %v2362
    %v2373 = vpop.f32.mrf.mxu0
    %v2374 = vadd.f32 0.0, %v2373
    %v2375 = vpop.f32.mrf.mxu0
    %v2376 = vadd.f32 0.0, %v2375
    %2377 = vdwg.mxu0
    %v2378 = vld [vmem:[#allocation23] sm:$0x1]
    %v2380 = vperm.slane %v2378, 0
    %v2382 = vadd.f32 %v2374, %v2380
    %v2383 = vadd.f32 %v2376, %v2380
    %v2384 = vmax.f32 %v2382, 0.0
    %v2385 = vmax.f32 %v2383, 0.0
    %v2386 = vmul.f32 %v1887, %v2384
    %v2387 = vmul.f32 %v1897, %v2385
    %v2388 = vpack.c.bf16 %v2386, %v2386
    %v2389 = vpack.c.bf16 %v2387, %v2387
    %v2391 = vsel %vm1931, %v2388, 0
    %2393 = vmatpush.bf16.msra.mxu0 0
    %2394 = vmatpush.bf16.msra.mxu0 0
    %2395 = vmatpush.bf16.msra.mxu0 0
    %2396 = vmatpush.bf16.msra.mxu0 0
    %2397 = vmatpush.bf16.msra.mxu0 0
    %2398 = vmatpush.bf16.msra.mxu0 0
    %2399 = vmatpush.bf16.msra.mxu0 0
    %2400 = vmatpush.bf16.msra.mxu0 %v2391
    %2401 = vmatmul.bf16.gmra.mxu0 %v1929
    %v2402 = vpop.f32.mrf.mxu0
    %v2403 = vadd.f32 %v2386, %v2402
    %v2404 = vpop.f32.mrf.mxu0
    %2405 = vdwg.mxu0
    %v2407 = vsel %vm1931, %v2389, 0
    %2409 = vmatpush.bf16.msra.mxu0 0
    %2410 = vmatpush.bf16.msra.mxu0 0
    %2411 = vmatpush.bf16.msra.mxu0 0
    %2412 = vmatpush.bf16.msra.mxu0 0
    %2413 = vmatpush.bf16.msra.mxu0 0
    %2414 = vmatpush.bf16.msra.mxu0 0
    %2415 = vmatpush.bf16.msra.mxu0 0
    %2416 = vmatpush.bf16.msra.mxu0 %v2407
    %2417 = vmatmul.bf16.gmra.mxu0 %v1949
    %v2418 = vpop.f32.mrf.mxu0
    %v2419 = vadd.f32 %v2387, %v2418
    %v2420 = vpop.f32.mrf.mxu0
    %2421 = vdwg.mxu0
    %v2422 = vmul.f32 %v1887, %v2403
    %v2423 = vmul.f32 %v1897, %v2419
    %v2424 = vpack.c.bf16 %v2423, %v2422
    %v2425 = vld [vmem:[%s69] sm:$0xff]
    %v2426 = vld [vmem:[%s69 + $0x8] sm:$0xff]
    %v2427 = vld [vmem:[%s69 + $0x10] sm:$0xff]
    %v2428 = vld [vmem:[%s69 + $0x18] sm:$0xff]
    %v2429 = vpack.c.bf16 %v2426, %v2425
    %v2430 = vpack.c.bf16 %v2428, %v2427
    %v2432 = vsel %vm1313, %v2424, 0
    %2434 = vmatpush.bf16.msra.mxu0 0
    %2435 = vmatpush.bf16.msra.mxu0 0
    %2436 = vmatpush.bf16.msra.mxu0 0
    %2437 = vmatpush.bf16.msra.mxu0 0
    %2438 = vmatpush.bf16.msra.mxu0 0
    %2439 = vmatpush.bf16.msra.mxu0 0
    %2440 = vmatpush.bf16.msra.mxu0 %v2430
    %2441 = vmatpush.bf16.msra.mxu0 %v2429
    %2442 = vmatmul.bf16.gmra.mxu0 %v2432
    %v2443 = vpop.f32.mrf.mxu0
    %v2444 = vadd.f32 0.0, %v2443
    %v2445 = vpop.f32.mrf.mxu0
    %v2446 = vadd.f32 0.0, %v2445
    %2447 = vdwg.mxu0
    %v2448 = vld [vmem:[#allocation25] sm:$0x1]
    %v2450 = vperm.slane %v2448, 0
    %v2452 = vadd.f32 %v2444, %v2450
    %v2453 = vadd.f32 %v2446, %v2450
    %v2454 = vmax.f32 %v2452, 0.0
    %v2455 = vmax.f32 %v2453, 0.0
    %v2456 = vsel %vm897, %v2174, -inf
    %2457 = vmax.xlane.f32.xlu0 %v2456
    %v2458 = vpop.xlane.xlu0 %2457
    %v2459 = vsel %vm897, %v2175, -inf
    %2460 = vmax.xlane.f32.xlu0 %v2459
    %v2461 = vpop.xlane.xlu0 %2460
    %v2462 = vsub.f32 %v2174, %v2458
    %v2463 = vsub.f32 %v2175, %v2461
    %v2464 = vmul.f32 %v2462, 1.442695
    %v2465 = vpow.pop %v2464
    %v2466 = vmul.f32 %v2463, 1.442695
    %v2467 = vpow.pop %v2466
    %v2468 = vsel %vm897, %v2465, 0.0
    %2469 = vadd.xlane.f32.xlu0 %v2468
    %v2470 = vpop.xlane.xlu0 %2469
    %v2471 = vsel %vm897, %v2467, 0.0
    %2472 = vadd.xlane.f32.xlu0 %v2471
    %v2473 = vpop.xlane.xlu0 %2472
    %v2474 = vrcp.pop %v2470
    %v2475 = vrcp.pop %v2473
    %v2476 = vmul.f32 %v2465, %v2474
    %v2477 = vmul.f32 %v2467, %v2475
    %v2478 = vpack.c.bf16 %v2476, %v2476
    %v2479 = vpack.c.bf16 %v2477, %v2477
    %v2480 = vpack.c.bf16 %v2454, %v2454
    %v2481 = vpack.c.bf16 %v2455, %v2455
    %2482 = vxpose.xlu0.c.b16.start [1/8] %v2478, 128
    %2483 = vxpose.xlu0.c.b16.cont [2/8] 0, 128
    %2484 = vxpose.xlu0.c.b16.cont [3/8] 0, 128
    %2485 = vxpose.xlu0.c.b16.cont [4/8] 0, 128
    %2486 = vxpose.xlu0.c.b16.cont [5/8] 0, 128
    %2487 = vxpose.xlu0.c.b16.cont [6/8] 0, 128
    %2488 = vxpose.xlu0.c.b16.cont [7/8] 0, 128
    %2489 = vxpose.xlu0.c.b16.end [8/8] 0, 128
    %v2490 = vpop.trf.xlu0
    %v2491 = vpop.trf.xlu0
    %v2492 = vpop.trf.xlu0
    %v2493 = vpop.trf.xlu0
    %v2494 = vpop.trf.xlu0
    %v2495 = vpop.trf.xlu0
    %v2496 = vpop.trf.xlu0
    %v2497 = vpop.trf.xlu0
    %v2499 = vsel %vm1545, %v2490, 0
    %v2502 = vsel %vm1931, %v2480, 0
    %2504 = vmatpush.bf16.msra.mxu0 0
    %2505 = vmatpush.bf16.msra.mxu0 0
    %2506 = vmatpush.bf16.msra.mxu0 0
    %2507 = vmatpush.bf16.msra.mxu0 0
    %2508 = vmatpush.bf16.msra.mxu0 0
    %2509 = vmatpush.bf16.msra.mxu0 0
    %2510 = vmatpush.bf16.msra.mxu0 0
    %2511 = vmatpush.bf16.msra.mxu0 %v2502
    %2512 = vmatmul.bf16.gmra.mxu0 %v2499
    %v2513 = vpop.f32.mrf.mxu0
    %v2514 = vadd.f32 0.0, %v2513
    %v2515 = vpop.f32.mrf.mxu0
    %2516 = vdwg.mxu0
    %2517 = vxpose.xlu0.c.b16.start [1/8] %v2479, 128
    %2518 = vxpose.xlu0.c.b16.cont [2/8] 0, 128
    %2519 = vxpose.xlu0.c.b16.cont [3/8] 0, 128
    %2520 = vxpose.xlu0.c.b16.cont [4/8] 0, 128
    %2521 = vxpose.xlu0.c.b16.cont [5/8] 0, 128
    %2522 = vxpose.xlu0.c.b16.cont [6/8] 0, 128
    %2523 = vxpose.xlu0.c.b16.cont [7/8] 0, 128
    %2524 = vxpose.xlu0.c.b16.end [8/8] 0, 128
    %v2525 = vpop.trf.xlu0
    %v2526 = vpop.trf.xlu0
    %v2527 = vpop.trf.xlu0
    %v2528 = vpop.trf.xlu0
    %v2529 = vpop.trf.xlu0
    %v2530 = vpop.trf.xlu0
    %v2531 = vpop.trf.xlu0
    %v2532 = vpop.trf.xlu0
    %v2534 = vsel %vm1545, %v2525, 0
    %v2537 = vsel %vm1931, %v2481, 0
    %2539 = vmatpush.bf16.msra.mxu0 0
    %2540 = vmatpush.bf16.msra.mxu0 0
    %2541 = vmatpush.bf16.msra.mxu0 0
    %2542 = vmatpush.bf16.msra.mxu0 0
    %2543 = vmatpush.bf16.msra.mxu0 0
    %2544 = vmatpush.bf16.msra.mxu0 0
    %2545 = vmatpush.bf16.msra.mxu0 0
    %2546 = vmatpush.bf16.msra.mxu0 %v2537
    %2547 = vmatmul.bf16.gmra.mxu0 %v2534
    %v2548 = vpop.f32.mrf.mxu0
    %v2549 = vadd.f32 0.0, %v2548
    %v2550 = vpop.f32.mrf.mxu0
    %2551 = vdwg.mxu0
    %v2552 = vsel %vm1931, %v1898, 0
    %2554 = vmatpush.bf16.msra.mxu0 0
    %2555 = vmatpush.bf16.msra.mxu0 0
    %2556 = vmatpush.bf16.msra.mxu0 0
    %2557 = vmatpush.bf16.msra.mxu0 0
    %2558 = vmatpush.bf16.msra.mxu0 0
    %2559 = vmatpush.bf16.msra.mxu0 0
    %2560 = vmatpush.bf16.msra.mxu0 0
    %2561 = vmatpush.bf16.msra.mxu0 %v2552
    %2562 = vmatmul.bf16.gmra.mxu0 %v2499
    %v2563 = vpop.f32.mrf.mxu0
    %v2564 = vadd.f32 0.0, %v2563
    %v2565 = vpop.f32.mrf.mxu0
    %2566 = vdwg.mxu0
    %v2567 = vsel %vm1931, %v1899, 0
    %2569 = vmatpush.bf16.msra.mxu0 0
    %2570 = vmatpush.bf16.msra.mxu0 0
    %2571 = vmatpush.bf16.msra.mxu0 0
    %2572 = vmatpush.bf16.msra.mxu0 0
    %2573 = vmatpush.bf16.msra.mxu0 0
    %2574 = vmatpush.bf16.msra.mxu0 0
    %2575 = vmatpush.bf16.msra.mxu0 0
    %2576 = vmatpush.bf16.msra.mxu0 %v2567
    %2577 = vmatmul.bf16.gmra.mxu0 %v2534
    %v2578 = vpop.f32.mrf.mxu0
    %v2579 = vadd.f32 0.0, %v2578
    %v2580 = vpop.f32.mrf.mxu0
    %2581 = vdwg.mxu0
    %v2582 = vpack.c.bf16 %v2564, %v2564
    %v2583 = vpack.c.bf16 %v2579, %v2579
    %v2585 = vsel %vm1545, %v2582, 0
    %v2588 = vsel %vm1931, %v2478, 0
    %2590 = vmatpush.bf16.msra.mxu0 0
    %2591 = vmatpush.bf16.msra.mxu0 0
    %2592 = vmatpush.bf16.msra.mxu0 0
    %2593 = vmatpush.bf16.msra.mxu0 0
    %2594 = vmatpush.bf16.msra.mxu0 0
    %2595 = vmatpush.bf16.msra.mxu0 0
    %2596 = vmatpush.bf16.msra.mxu0 0
    %2597 = vmatpush.bf16.msra.mxu0 %v2588
    %2598 = vmatmul.bf16.gmra.mxu0 %v2585
    %v2599 = vpop.f32.mrf.mxu0
    %v2600 = vadd.f32 0.0, %v2599
    %v2601 = vpop.f32.mrf.mxu0
    %2602 = vdwg.mxu0
    %v2604 = vsel %vm1545, %v2583, 0
    %v2607 = vsel %vm1931, %v2479, 0
    %2609 = vmatpush.bf16.msra.mxu0 0
    %2610 = vmatpush.bf16.msra.mxu0 0
    %2611 = vmatpush.bf16.msra.mxu0 0
    %2612 = vmatpush.bf16.msra.mxu0 0
    %2613 = vmatpush.bf16.msra.mxu0 0
    %2614 = vmatpush.bf16.msra.mxu0 0
    %2615 = vmatpush.bf16.msra.mxu0 0
    %2616 = vmatpush.bf16.msra.mxu0 %v2607
    %2617 = vmatmul.bf16.gmra.mxu0 %v2604
    %v2618 = vpop.f32.mrf.mxu0
    %v2619 = vadd.f32 0.0, %v2618
    %v2620 = vpop.f32.mrf.mxu0
    %2621 = vdwg.mxu0
    %v2622 = vsel %vm897, %v2478, 0
    %2624 = vmatpush.bf16.xpose.msra.mxu0 0
    %2625 = vmatpush.bf16.xpose.msra.mxu0 0
    %2626 = vmatpush.bf16.xpose.msra.mxu0 0
    %2627 = vmatpush.bf16.xpose.msra.mxu0 0
    %2628 = vmatpush.bf16.xpose.msra.mxu0 0
    %2629 = vmatpush.bf16.xpose.msra.mxu0 0
    %2630 = vmatpush.bf16.xpose.msra.mxu0 0
    %2631 = vmatpush.bf16.xpose.msra.mxu0 %v2622
    %2632 = vmatmul.bf16.gmra.mxu0 %v2622
    %v2633 = vpop.f32.mrf.mxu0
    %v2634 = vadd.f32 0.0, %v2633
    %v2635 = vpop.f32.mrf.mxu0
    %2636 = vdwg.mxu0
    %v2637 = vsel %vm897, %v2479, 0
    %2639 = vmatpush.bf16.xpose.msra.mxu0 0
    %2640 = vmatpush.bf16.xpose.msra.mxu0 0
    %2641 = vmatpush.bf16.xpose.msra.mxu0 0
    %2642 = vmatpush.bf16.xpose.msra.mxu0 0
    %2643 = vmatpush.bf16.xpose.msra.mxu0 0
    %2644 = vmatpush.bf16.xpose.msra.mxu0 0
    %2645 = vmatpush.bf16.xpose.msra.mxu0 0
    %2646 = vmatpush.bf16.xpose.msra.mxu0 %v2637
    %2647 = vmatmul.bf16.gmra.mxu0 %v2637
    %v2648 = vpop.f32.mrf.mxu0
    %v2649 = vadd.f32 0.0, %v2648
    %v2650 = vpop.f32.mrf.mxu0
    %2651 = vdwg.mxu0
    %v2652 = vsub.f32 %v1757, %v2634
    %v2653 = vsub.f32 %v1773, %v2649
    %v2654 = vmul.f32 %v2652, %v2652
    %v2655 = vmul.f32 %v2653, %v2653
    %v2656 = vsel %vm1545, %v2654, 0.0
    %v2657 = vsel %vm1545, %v2655, 0.0
    %v2658 = vadd.f32 %v2656, %v2657
    %2659 = vadd.xlane.f32.xlu0 %v2658
    %v2660 = vpop.xlane.xlu0 %2659
    %v2661 = vrot.slane %v2660, 4
    %v2662 = vadd.f32 %v2660, %v2661
    %v2663 = vrot.slane %v2662, 2
    %v2664 = vadd.f32 %v2662, %v2663
    %v2665 = vrot.slane %v2664, 1
    %v2666 = vadd.f32 %v2664, %v2665
    %s2667 = vtos %v2666
    %v2668 = vsub.f32 0.0, %v2476
    %v2669 = vsub.f32 0.0, %v2477
    %v2670 = vadd.f32 %v2476, 1e-15
    %v2671 = vadd.f32 %v2477, 1e-15
    %v2672 = vlog2.pop %v2670
    %v2673 = vmul.f32 %v2672, 0.6931472
    %v2674 = vlog2.pop %v2671
    %v2675 = vmul.f32 %v2674, 0.6931472
    %v2676 = vmul.f32 %v2668, %v2673
    %v2677 = vmul.f32 %v2669, %v2675
    %v2678 = vsel %vm897, %v2676, 0.0
    %v2679 = vsel %vm897, %v2677, 0.0
    %v2680 = vadd.f32 %v2678, %v2679
    %2681 = vadd.xlane.f32.xlu0 %v2680
    %v2682 = vpop.xlane.xlu0 %2681
    %v2683 = vrot.slane %v2682, 4
    %v2684 = vadd.f32 %v2682, %v2683
    %v2685 = vrot.slane %v2684, 2
    %v2686 = vadd.f32 %v2684, %v2685
    %v2687 = vrot.slane %v2686, 1
    %v2688 = vadd.f32 %v2686, %v2687
    %s2689 = vtos %v2688
    %vm2690 = vcmask 27648
    %v2691 = vsel %vm2690, %v2600, 0.0
    %2692 = vadd.xlane.f32.xlu0 %v2691
    %v2693 = vpop.xlane.xlu0 %2692
    %v2694 = vsel %vm2690, %v2619, 0.0
    %2695 = vadd.xlane.f32.xlu0 %v2694
    %v2696 = vpop.xlane.xlu0 %2695
    %v2697 = vadd.f32 %v2693, 1.0
    %v2698 = vadd.f32 %v2696, 1.0
    %v2699 = vrsqrt.pop %v2697
    %v2700 = vmul.f32 %v2699, %v2697
    %v2701 = vmul.f32 %v2700, %v2699
    %v2702 = vmul.f32 0.5, %v2701
    %v2703 = vsub.f32 1.5, %v2702
    %v2704 = vmul.f32 %v2699, %v2703
    %vm2705 = vweird.f32 %v2697
    %vm2706 = vweird.f32 %v2699
    %vm2707 = vmor %vm2705, %vm2706
    %v2708 = vsel %vm2707, %v2699, %v2704
    %v2709 = vrsqrt.pop %v2698
    %v2710 = vmul.f32 %v2709, %v2698
    %v2711 = vmul.f32 %v2710, %v2709
    %v2712 = vmul.f32 0.5, %v2711
    %v2713 = vsub.f32 1.5, %v2712
    %v2714 = vmul.f32 %v2709, %v2713
    %vm2715 = vweird.f32 %v2698
    %vm2716 = vweird.f32 %v2709
    %vm2717 = vmor %vm2715, %vm2716
    %v2718 = vsel %vm2717, %v2709, %v2714
    %v2719 = vpack.c.bf16 %v2600, %v2600
    %v2720 = vpack.c.bf16 %v2619, %v2619
    %2723 = vst [vmem:[#allocation1] ss:$2 sm:$0xff] %v2514
    %s2724 = scalar_lea.vmem [#allocation1], 1
    %2725 = vst [vmem:[%s2724] ss:$2 sm:$0xff] %v2549
    %v2726 = vld.sshfl [vmem:[#allocation1] sm:$0xff pattern:$0x75316420]
    %v2728 = vpack.c.bf16 %v2726, %v2726
    %v2729 = vld [vmem:[%s73] sm:$0xff]
    %v2730 = vld [vmem:[%s73 + $0x8] sm:$0xff]
    %v2731 = vld [vmem:[%s73 + $0x10] sm:$0xff]
    %v2732 = vld [vmem:[%s73 + $0x18] sm:$0xff]
    %v2733 = vpack.c.bf16 %v2730, %v2729
    %v2734 = vpack.c.bf16 %v2732, %v2731
    %v2736 = vsel %vm1313, %v2728, 0
    %2738 = vmatpush.bf16.msra.mxu0 0
    %2739 = vmatpush.bf16.msra.mxu0 0
    %2740 = vmatpush.bf16.msra.mxu0 0
    %2741 = vmatpush.bf16.msra.mxu0 0
    %2742 = vmatpush.bf16.msra.mxu0 0
    %2743 = vmatpush.bf16.msra.mxu0 0
    %2744 = vmatpush.bf16.msra.mxu0 %v2734
    %2745 = vmatpush.bf16.msra.mxu0 %v2733
    %2746 = vmatmul.bf16.gmra.mxu0 %v2736
    %v2747 = vpop.f32.mrf.mxu0
    %v2748 = vadd.f32 0.0, %v2747
    %v2749 = vpop.f32.mrf.mxu0
    %2750 = vdwg.mxu0
    %v2752 = vrot.slane %v2748, 4
    %v2754 = vmul.f32 %v2708, %v2748
    %v2755 = vmul.f32 %v2718, %v2752
    %v2756 = vpack.c.bf16 %v2754, %v2754
    %v2757 = vpack.c.bf16 %v2755, %v2755
    %v2759 = vsel %vm897, %v2719, 0
    %v2762 = vsel %vm904, %v2756, 0
    %2764 = vmatpush.bf16.msra.mxu0 0
    %2765 = vmatpush.bf16.msra.mxu0 0
    %2766 = vmatpush.bf16.msra.mxu0 0
    %2767 = vmatpush.bf16.msra.mxu0 0
    %2768 = vmatpush.bf16.msra.mxu0 0
    %2769 = vmatpush.bf16.msra.mxu0 0
    %2770 = vmatpush.bf16.msra.mxu0 0
    %2771 = vmatpush.bf16.msra.mxu0 %v2762
    %2772 = vmatmul.bf16.gmra.mxu0 %v2759
    %v2773 = vpop.f32.mrf.mxu0
    %v2774 = vadd.f32 %v2754, %v2773
    %v2775 = vpop.f32.mrf.mxu0
    %2776 = vdwg.mxu0
    %v2778 = vsel %vm897, %v2720, 0
    %v2781 = vsel %vm904, %v2757, 0
    %2783 = vmatpush.bf16.msra.mxu0 0
    %2784 = vmatpush.bf16.msra.mxu0 0
    %2785 = vmatpush.bf16.msra.mxu0 0
    %2786 = vmatpush.bf16.msra.mxu0 0
    %2787 = vmatpush.bf16.msra.mxu0 0
    %2788 = vmatpush.bf16.msra.mxu0 0
    %2789 = vmatpush.bf16.msra.mxu0 0
    %2790 = vmatpush.bf16.msra.mxu0 %v2781
    %2791 = vmatmul.bf16.gmra.mxu0 %v2778
    %v2792 = vpop.f32.mrf.mxu0
    %v2793 = vadd.f32 %v2755, %v2792
    %v2794 = vpop.f32.mrf.mxu0
    %2795 = vdwg.mxu0
    %v2796 = vmul.f32 %v2708, %v2774
    %v2797 = vmul.f32 %v2718, %v2793
    %v2798 = vld [vmem:[#allocation26] sm:$0x1]
    %v2800 = vperm.slane %v2798, 0
    %v2802 = vadd.f32 %v2796, %v2800
    %v2803 = vadd.f32 %v2797, %v2800
    %v2804 = vmax.f32 %v2802, 0.0
    %v2805 = vmax.f32 %v2803, 0.0
    %v2806 = vmul.f32 %v2708, %v2804
    %v2807 = vmul.f32 %v2718, %v2805
    %v2808 = vpack.c.bf16 %v2806, %v2806
    %v2809 = vpack.c.bf16 %v2807, %v2807
    %v2811 = vsel %vm904, %v2808, 0
    %2813 = vmatpush.bf16.msra.mxu0 0
    %2814 = vmatpush.bf16.msra.mxu0 0
    %2815 = vmatpush.bf16.msra.mxu0 0
    %2816 = vmatpush.bf16.msra.mxu0 0
    %2817 = vmatpush.bf16.msra.mxu0 0
    %2818 = vmatpush.bf16.msra.mxu0 0
    %2819 = vmatpush.bf16.msra.mxu0 0
    %2820 = vmatpush.bf16.msra.mxu0 %v2811
    %2821 = vmatmul.bf16.gmra.mxu0 %v2759
    %v2822 = vpop.f32.mrf.mxu0
    %v2823 = vadd.f32 %v2806, %v2822
    %v2824 = vpop.f32.mrf.mxu0
    %2825 = vdwg.mxu0
    %v2827 = vsel %vm904, %v2809, 0
    %2829 = vmatpush.bf16.msra.mxu0 0
    %2830 = vmatpush.bf16.msra.mxu0 0
    %2831 = vmatpush.bf16.msra.mxu0 0
    %2832 = vmatpush.bf16.msra.mxu0 0
    %2833 = vmatpush.bf16.msra.mxu0 0
    %2834 = vmatpush.bf16.msra.mxu0 0
    %2835 = vmatpush.bf16.msra.mxu0 0
    %2836 = vmatpush.bf16.msra.mxu0 %v2827
    %2837 = vmatmul.bf16.gmra.mxu0 %v2778
    %v2838 = vpop.f32.mrf.mxu0
    %v2839 = vadd.f32 %v2807, %v2838
    %v2840 = vpop.f32.mrf.mxu0
    %2841 = vdwg.mxu0
    %v2842 = vmul.f32 %v2708, %v2823
    %v2843 = vmul.f32 %v2718, %v2839
    %2846 = vst [vmem:[#allocation1] ss:$2 sm:$0xff] %v2842
    %s2847 = scalar_lea.vmem [#allocation1], 1
    %2848 = vst [vmem:[%s2847] ss:$2 sm:$0xff] %v2843
    %v2849 = vld.sshfl [vmem:[#allocation1] sm:$0xff pattern:$0x75316420]
    %v2851 = vpack.c.bf16 %v2849, %v2849
    %v2852 = vld [vmem:[%s77] sm:$0xff]
    %v2853 = vld [vmem:[%s77 + $0x8] sm:$0xff]
    %v2854 = vpack.c.bf16 %v2853, %v2852
    %v2856 = vsel %vm764, %v2851, 0
    %2858 = vmatpush.bf16.msra.mxu0 0
    %2859 = vmatpush.bf16.msra.mxu0 0
    %2860 = vmatpush.bf16.msra.mxu0 0
    %2861 = vmatpush.bf16.msra.mxu0 0
    %2862 = vmatpush.bf16.msra.mxu0 0
    %2863 = vmatpush.bf16.msra.mxu0 0
    %2864 = vmatpush.bf16.msra.mxu0 0
    %2865 = vmatpush.bf16.msra.mxu0 %v2854
    %2866 = vmatmul.bf16.gmra.mxu0 %v2856
    %v2867 = vpop.f32.mrf.mxu0
    %v2868 = vadd.f32 0.0, %v2867
    %v2869 = vpop.f32.mrf.mxu0
    %2870 = vdwg.mxu0
    %v2872 = vrot.slane %v2868, 4
    %v2874 = vld [vmem:[#allocation28] sm:$0x1]
    %v2876 = vperm.slane %v2874, 0
    %v2878 = vadd.f32 %v2868, %v2876
    %v2879 = vadd.f32 %v2872, %v2876
    %v2880 = vmax.f32 %v2878, 0.0
    %v2881 = vmax.f32 %v2879, 0.0
    %v2882 = vmul.f32 %v2708, %v2880
    %v2883 = vmul.f32 %v2718, %v2881
    %v2884 = vpack.c.bf16 %v2882, %v2882
    %v2885 = vpack.c.bf16 %v2883, %v2883
    %v2887 = vsel %vm904, %v2884, 0
    %2889 = vmatpush.bf16.msra.mxu0 0
    %2890 = vmatpush.bf16.msra.mxu0 0
    %2891 = vmatpush.bf16.msra.mxu0 0
    %2892 = vmatpush.bf16.msra.mxu0 0
    %2893 = vmatpush.bf16.msra.mxu0 0
    %2894 = vmatpush.bf16.msra.mxu0 0
    %2895 = vmatpush.bf16.msra.mxu0 0
    %2896 = vmatpush.bf16.msra.mxu0 %v2887
    %2897 = vmatmul.bf16.gmra.mxu0 %v2759
    %v2898 = vpop.f32.mrf.mxu0
    %v2899 = vadd.f32 %v2882, %v2898
    %v2900 = vpop.f32.mrf.mxu0
    %2901 = vdwg.mxu0
    %v2903 = vsel %vm904, %v2885, 0
    %2905 = vmatpush.bf16.msra.mxu0 0
    %2906 = vmatpush.bf16.msra.mxu0 0
    %2907 = vmatpush.bf16.msra.mxu0 0
    %2908 = vmatpush.bf16.msra.mxu0 0
    %2909 = vmatpush.bf16.msra.mxu0 0
    %2910 = vmatpush.bf16.msra.mxu0 0
    %2911 = vmatpush.bf16.msra.mxu0 0
    %2912 = vmatpush.bf16.msra.mxu0 %v2903
    %2913 = vmatmul.bf16.gmra.mxu0 %v2778
    %v2914 = vpop.f32.mrf.mxu0
    %v2915 = vadd.f32 %v2883, %v2914
    %v2916 = vpop.f32.mrf.mxu0
    %2917 = vdwg.mxu0
    %v2918 = vmul.f32 %v2708, %v2899
    %v2919 = vmul.f32 %v2718, %v2915
    %2922 = vst [vmem:[#allocation1] ss:$2 sm:$0xff] %v2918
    %s2923 = scalar_lea.vmem [#allocation1], 1
    %2924 = vst [vmem:[%s2923] ss:$2 sm:$0xff] %v2919
    %v2925 = vld.sshfl [vmem:[#allocation1] sm:$0xff pattern:$0x75316420]
    %v2927 = vpack.c.bf16 %v2925, %v2925
    %v2928 = vld [vmem:[#allocation29] sm:$0xff]
    %v2929 = vld [vmem:[#allocation29 + $0x8] sm:$0xff]
    %v2930 = vpack.c.bf16 %v2929, %v2928
    %v2932 = vsel %vm764, %v2927, 0
    %2934 = vmatpush.bf16.msra.mxu0 0
    %2935 = vmatpush.bf16.msra.mxu0 0
    %2936 = vmatpush.bf16.msra.mxu0 0
    %2937 = vmatpush.bf16.msra.mxu0 0
    %2938 = vmatpush.bf16.msra.mxu0 0
    %2939 = vmatpush.bf16.msra.mxu0 0
    %2940 = vmatpush.bf16.msra.mxu0 0
    %2941 = vmatpush.bf16.msra.mxu0 %v2930
    %2942 = vmatmul.bf16.gmra.mxu0 %v2932
    %v2943 = vpop.f32.mrf.mxu0
    %v2944 = vadd.f32 0.0, %v2943
    %v2945 = vpop.f32.mrf.mxu0
    %2946 = vdwg.mxu0
    %v2948 = vrot.slane %v2944, 4
    %v2950 = vld [vmem:[%s83] sm:$0x1]
    %v2952 = vperm.slane %v2950, 0
    %v2954 = vadd.f32 %v2944, %v2952
    %v2955 = vadd.f32 %v2948, %v2952
    %v2956 = vmax.f32 %v2954, 0.0
    %v2957 = vmax.f32 %v2955, 0.0
    %2960 = vst [vmem:[#allocation1] ss:$2 sm:$0xff] %v2956
    %s2961 = scalar_lea.vmem [#allocation1], 1
    %2962 = vst [vmem:[%s2961] ss:$2 sm:$0xff] %v2957
    %v2963 = vld.sshfl [vmem:[#allocation1] sm:$0xff pattern:$0x75316420]
    %v2965 = vpack.c.bf16 %v2963, %v2963
    %v2966 = vld [vmem:[%s85] sm:$0xff]
    %v2967 = vld [vmem:[%s85 + $0x8] sm:$0xff]
    %v2968 = vpack.c.bf16 %v2967, %v2966
    %v2970 = vsel %vm764, %v2965, 0
    %2972 = vmatpush.bf16.msra.mxu0 0
    %2973 = vmatpush.bf16.msra.mxu0 0
    %2974 = vmatpush.bf16.msra.mxu0 0
    %2975 = vmatpush.bf16.msra.mxu0 0
    %2976 = vmatpush.bf16.msra.mxu0 0
    %2977 = vmatpush.bf16.msra.mxu0 0
    %2978 = vmatpush.bf16.msra.mxu0 0
    %2979 = vmatpush.bf16.msra.mxu0 %v2968
    %2980 = vmatmul.bf16.gmra.mxu0 %v2970
    %v2981 = vpop.f32.mrf.mxu0
    %v2982 = vadd.f32 0.0, %v2981
    %v2983 = vpop.f32.mrf.mxu0
    %2984 = vdwg.mxu0
    %v2986 = vrot.slane %v2982, 4
    %v2988 = vmul.f32 %v2708, %v2982
    %v2989 = vmul.f32 %v2718, %v2986
    %v2990 = vpack.c.bf16 %v2988, %v2988
    %v2991 = vpack.c.bf16 %v2989, %v2989
    %v2993 = vsel %vm904, %v2990, 0
    %2995 = vmatpush.bf16.msra.mxu0 0
    %2996 = vmatpush.bf16.msra.mxu0 0
    %2997 = vmatpush.bf16.msra.mxu0 0
    %2998 = vmatpush.bf16.msra.mxu0 0
    %2999 = vmatpush.bf16.msra.mxu0 0
    %3000 = vmatpush.bf16.msra.mxu0 0
    %3001 = vmatpush.bf16.msra.mxu0 0
    %3002 = vmatpush.bf16.msra.mxu0 %v2993
    %3003 = vmatmul.bf16.gmra.mxu0 %v2759
    %v3004 = vpop.f32.mrf.mxu0
    %v3005 = vadd.f32 %v2988, %v3004
    %v3006 = vpop.f32.mrf.mxu0
    %3007 = vdwg.mxu0
    %v3009 = vsel %vm904, %v2991, 0
    %3011 = vmatpush.bf16.msra.mxu0 0
    %3012 = vmatpush.bf16.msra.mxu0 0
    %3013 = vmatpush.bf16.msra.mxu0 0
    %3014 = vmatpush.bf16.msra.mxu0 0
    %3015 = vmatpush.bf16.msra.mxu0 0
    %3016 = vmatpush.bf16.msra.mxu0 0
    %3017 = vmatpush.bf16.msra.mxu0 0
    %3018 = vmatpush.bf16.msra.mxu0 %v3009
    %3019 = vmatmul.bf16.gmra.mxu0 %v2778
    %v3020 = vpop.f32.mrf.mxu0
    %v3021 = vadd.f32 %v2989, %v3020
    %v3022 = vpop.f32.mrf.mxu0
    %3023 = vdwg.mxu0
    %v3024 = vmul.f32 %v2708, %v3005
    %v3025 = vmul.f32 %v2718, %v3021
    %v3026 = vld [vmem:[%s87] sm:$0x1]
    %v3028 = vperm.slane %v3026, 0
    %v3030 = vadd.f32 %v3024, %v3028
    %v3031 = vadd.f32 %v3025, %v3028
    %v3032 = vmul.f32 %v2708, %v2514
    %v3033 = vmul.f32 %v2718, %v2549
    %v3034 = vpack.c.bf16 %v3032, %v3032
    %v3035 = vpack.c.bf16 %v3033, %v3033
    %v3037 = vsel %vm904, %v3034, 0
    %3039 = vmatpush.bf16.msra.mxu0 0
    %3040 = vmatpush.bf16.msra.mxu0 0
    %3041 = vmatpush.bf16.msra.mxu0 0
    %3042 = vmatpush.bf16.msra.mxu0 0
    %3043 = vmatpush.bf16.msra.mxu0 0
    %3044 = vmatpush.bf16.msra.mxu0 0
    %3045 = vmatpush.bf16.msra.mxu0 0
    %3046 = vmatpush.bf16.msra.mxu0 %v3037
    %3047 = vmatmul.bf16.gmra.mxu0 %v2759
    %v3048 = vpop.f32.mrf.mxu0
    %v3049 = vadd.f32 %v3032, %v3048
    %v3050 = vpop.f32.mrf.mxu0
    %3051 = vdwg.mxu0
    %v3053 = vsel %vm904, %v3035, 0
    %3055 = vmatpush.bf16.msra.mxu0 0
    %3056 = vmatpush.bf16.msra.mxu0 0
    %3057 = vmatpush.bf16.msra.mxu0 0
    %3058 = vmatpush.bf16.msra.mxu0 0
    %3059 = vmatpush.bf16.msra.mxu0 0
    %3060 = vmatpush.bf16.msra.mxu0 0
    %3061 = vmatpush.bf16.msra.mxu0 0
    %3062 = vmatpush.bf16.msra.mxu0 %v3053
    %3063 = vmatmul.bf16.gmra.mxu0 %v2778
    %v3064 = vpop.f32.mrf.mxu0
    %v3065 = vadd.f32 %v3033, %v3064
    %v3066 = vpop.f32.mrf.mxu0
    %3067 = vdwg.mxu0
    %v3068 = vmul.f32 %v2708, %v3049
    %v3069 = vmul.f32 %v2718, %v3065
    %3072 = vst [vmem:[#allocation1] ss:$2 sm:$0xff] %v3068
    %s3073 = scalar_lea.vmem [#allocation1], 1
    %3074 = vst [vmem:[%s3073] ss:$2 sm:$0xff] %v3069
    %v3075 = vld.sshfl [vmem:[#allocation1] sm:$0xff pattern:$0x75316420]
    %v3077 = vpack.c.bf16 %v3075, %v3075
    %v3078 = vld [vmem:[#allocation31] sm:$0xff]
    %v3079 = vld [vmem:[#allocation31 + $0x8] sm:$0xff]
    %v3080 = vld [vmem:[#allocation31 + $0x10] sm:$0xff]
    %v3081 = vld [vmem:[#allocation31 + $0x18] sm:$0xff]
    %v3082 = vpack.c.bf16 %v3079, %v3078
    %v3083 = vpack.c.bf16 %v3081, %v3080
    %v3085 = vsel %vm1313, %v3077, 0
    %3087 = vmatpush.bf16.msra.mxu0 0
    %3088 = vmatpush.bf16.msra.mxu0 0
    %3089 = vmatpush.bf16.msra.mxu0 0
    %3090 = vmatpush.bf16.msra.mxu0 0
    %3091 = vmatpush.bf16.msra.mxu0 0
    %3092 = vmatpush.bf16.msra.mxu0 0
    %3093 = vmatpush.bf16.msra.mxu0 %v3083
    %3094 = vmatpush.bf16.msra.mxu0 %v3082
    %3095 = vmatmul.bf16.gmra.mxu0 %v3085
    %v3096 = vpop.f32.mrf.mxu0
    %v3097 = vadd.f32 0.0, %v3096
    %v3098 = vpop.f32.mrf.mxu0
    %3099 = vdwg.mxu0
    %v3101 = vrot.slane %v3097, 4
    %v3103 = vld [vmem:[#allocation32] sm:$0x1]
    %v3105 = vperm.slane %v3103, 0
    %v3107 = vadd.f32 %v3097, %v3105
    %v3108 = vadd.f32 %v3101, %v3105
    %v3109 = vmax.f32 %v3107, 0.0
    %v3110 = vmax.f32 %v3108, 0.0
    %v3111 = vmul.f32 %v2708, %v3109
    %v3112 = vmul.f32 %v2718, %v3110
    %v3113 = vpack.c.bf16 %v3111, %v3111
    %v3114 = vpack.c.bf16 %v3112, %v3112
    %v3116 = vsel %vm904, %v3113, 0
    %3118 = vmatpush.bf16.msra.mxu0 0
    %3119 = vmatpush.bf16.msra.mxu0 0
    %3120 = vmatpush.bf16.msra.mxu0 0
    %3121 = vmatpush.bf16.msra.mxu0 0
    %3122 = vmatpush.bf16.msra.mxu0 0
    %3123 = vmatpush.bf16.msra.mxu0 0
    %3124 = vmatpush.bf16.msra.mxu0 0
    %3125 = vmatpush.bf16.msra.mxu0 %v3116
    %3126 = vmatmul.bf16.gmra.mxu0 %v2759
    %v3127 = vpop.f32.mrf.mxu0
    %v3128 = vadd.f32 %v3111, %v3127
    %v3129 = vpop.f32.mrf.mxu0
    %3130 = vdwg.mxu0
    %v3132 = vsel %vm904, %v3114, 0
    %3134 = vmatpush.bf16.msra.mxu0 0
    %3135 = vmatpush.bf16.msra.mxu0 0
    %3136 = vmatpush.bf16.msra.mxu0 0
    %3137 = vmatpush.bf16.msra.mxu0 0
    %3138 = vmatpush.bf16.msra.mxu0 0
    %3139 = vmatpush.bf16.msra.mxu0 0
    %3140 = vmatpush.bf16.msra.mxu0 0
    %3141 = vmatpush.bf16.msra.mxu0 %v3132
    %3142 = vmatmul.bf16.gmra.mxu0 %v2778
    %v3143 = vpop.f32.mrf.mxu0
    %v3144 = vadd.f32 %v3112, %v3143
    %v3145 = vpop.f32.mrf.mxu0
    %3146 = vdwg.mxu0
    %v3147 = vmul.f32 %v2708, %v3128
    %v3148 = vmul.f32 %v2718, %v3144
    %3151 = vst [vmem:[#allocation1] ss:$2 sm:$0xff] %v3147
    %s3152 = scalar_lea.vmem [#allocation1], 1
    %3153 = vst [vmem:[%s3152] ss:$2 sm:$0xff] %v3148
    %v3154 = vld.sshfl [vmem:[#allocation1] sm:$0xff pattern:$0x75316420]
    %v3156 = vpack.c.bf16 %v3154, %v3154
    %v3157 = vld [vmem:[#allocation34] sm:$0xff]
    %v3158 = vld [vmem:[#allocation34 + $0x8] sm:$0xff]
    %v3159 = vld [vmem:[#allocation34 + $0x10] sm:$0xff]
    %v3160 = vld [vmem:[#allocation34 + $0x18] sm:$0xff]
    %v3161 = vpack.c.bf16 %v3158, %v3157
    %v3162 = vpack.c.bf16 %v3160, %v3159
    %v3164 = vsel %vm1313, %v3156, 0
    %3166 = vmatpush.bf16.msra.mxu0 0
    %3167 = vmatpush.bf16.msra.mxu0 0
    %3168 = vmatpush.bf16.msra.mxu0 0
    %3169 = vmatpush.bf16.msra.mxu0 0
    %3170 = vmatpush.bf16.msra.mxu0 0
    %3171 = vmatpush.bf16.msra.mxu0 0
    %3172 = vmatpush.bf16.msra.mxu0 %v3162
    %3173 = vmatpush.bf16.msra.mxu0 %v3161
    %3174 = vmatmul.bf16.gmra.mxu0 %v3164
    %v3175 = vpop.f32.mrf.mxu0
    %v3176 = vadd.f32 0.0, %v3175
    %v3177 = vpop.f32.mrf.mxu0
    %3178 = vdwg.mxu0
    %v3180 = vrot.slane %v3176, 4
    %v3182 = vld [vmem:[#allocation35] sm:$0x1]
    %v3184 = vperm.slane %v3182, 0
    %v3186 = vadd.f32 %v3176, %v3184
    %v3187 = vadd.f32 %v3180, %v3184
    %v3188 = vmax.f32 %v3186, 0.0
    %v3189 = vmax.f32 %v3187, 0.0
    %v3190 = vmul.f32 %v2708, %v3188
    %v3191 = vmul.f32 %v2718, %v3189
    %v3192 = vpack.c.bf16 %v3190, %v3190
    %v3193 = vpack.c.bf16 %v3191, %v3191
    %v3195 = vsel %vm904, %v3192, 0
    %3197 = vmatpush.bf16.msra.mxu0 0
    %3198 = vmatpush.bf16.msra.mxu0 0
    %3199 = vmatpush.bf16.msra.mxu0 0
    %3200 = vmatpush.bf16.msra.mxu0 0
    %3201 = vmatpush.bf16.msra.mxu0 0
    %3202 = vmatpush.bf16.msra.mxu0 0
    %3203 = vmatpush.bf16.msra.mxu0 0
    %3204 = vmatpush.bf16.msra.mxu0 %v3195
    %3205 = vmatmul.bf16.gmra.mxu0 %v2759
    %v3206 = vpop.f32.mrf.mxu0
    %v3207 = vadd.f32 %v3190, %v3206
    %v3208 = vpop.f32.mrf.mxu0
    %3209 = vdwg.mxu0
    %v3211 = vsel %vm904, %v3193, 0
    %3213 = vmatpush.bf16.msra.mxu0 0
    %3214 = vmatpush.bf16.msra.mxu0 0
    %3215 = vmatpush.bf16.msra.mxu0 0
    %3216 = vmatpush.bf16.msra.mxu0 0
    %3217 = vmatpush.bf16.msra.mxu0 0
    %3218 = vmatpush.bf16.msra.mxu0 0
    %3219 = vmatpush.bf16.msra.mxu0 0
    %3220 = vmatpush.bf16.msra.mxu0 %v3211
    %3221 = vmatmul.bf16.gmra.mxu0 %v2778
    %v3222 = vpop.f32.mrf.mxu0
    %v3223 = vadd.f32 %v3191, %v3222
    %v3224 = vpop.f32.mrf.mxu0
    %3225 = vdwg.mxu0
    %v3226 = vmul.f32 %v2708, %v3207
    %v3227 = vmul.f32 %v2718, %v3223
    %3230 = vst [vmem:[#allocation1] ss:$2 sm:$0xff] %v3226
    %s3231 = scalar_lea.vmem [#allocation1], 1
    %3232 = vst [vmem:[%s3231] ss:$2 sm:$0xff] %v3227
    %v3233 = vld.sshfl [vmem:[#allocation1] sm:$0xff pattern:$0x75316420]
    %v3235 = vpack.c.bf16 %v3233, %v3233
    %v3236 = vld [vmem:[#allocation37] sm:$0xff]
    %v3237 = vld [vmem:[#allocation37 + $0x8] sm:$0xff]
    %v3238 = vld [vmem:[#allocation37 + $0x10] sm:$0xff]
    %v3239 = vld [vmem:[#allocation37 + $0x18] sm:$0xff]
    %v3240 = vpack.c.bf16 %v3237, %v3236
    %v3241 = vpack.c.bf16 %v3239, %v3238
    %v3243 = vsel %vm1313, %v3235, 0
    %3245 = vmatpush.bf16.msra.mxu0 0
    %3246 = vmatpush.bf16.msra.mxu0 0
    %3247 = vmatpush.bf16.msra.mxu0 0
    %3248 = vmatpush.bf16.msra.mxu0 0
    %3249 = vmatpush.bf16.msra.mxu0 0
    %3250 = vmatpush.bf16.msra.mxu0 0
    %3251 = vmatpush.bf16.msra.mxu0 %v3241
    %3252 = vmatpush.bf16.msra.mxu0 %v3240
    %3253 = vmatmul.bf16.gmra.mxu0 %v3243
    %v3254 = vpop.f32.mrf.mxu0
    %v3255 = vadd.f32 0.0, %v3254
    %v3256 = vpop.f32.mrf.mxu0
    %3257 = vdwg.mxu0
    %v3259 = vrot.slane %v3255, 4
    %v3261 = vld [vmem:[#allocation38] sm:$0x1]
    %v3263 = vperm.slane %v3261, 0
    %v3265 = vadd.f32 %v3255, %v3263
    %v3266 = vadd.f32 %v3259, %v3263
    %v3267 = vmax.f32 %v3265, 0.0
    %v3268 = vmax.f32 %v3266, 0.0
    %v3269 = vmul.f32 %v2708, %v3267
    %v3270 = vmul.f32 %v2718, %v3268
    %v3271 = vpack.c.bf16 %v3269, %v3269
    %v3272 = vpack.c.bf16 %v3270, %v3270
    %v3274 = vsel %vm904, %v3271, 0
    %3276 = vmatpush.bf16.msra.mxu0 0
    %3277 = vmatpush.bf16.msra.mxu0 0
    %3278 = vmatpush.bf16.msra.mxu0 0
    %3279 = vmatpush.bf16.msra.mxu0 0
    %3280 = vmatpush.bf16.msra.mxu0 0
    %3281 = vmatpush.bf16.msra.mxu0 0
    %3282 = vmatpush.bf16.msra.mxu0 0
    %3283 = vmatpush.bf16.msra.mxu0 %v3274
    %3284 = vmatmul.bf16.gmra.mxu0 %v2759
    %v3285 = vpop.f32.mrf.mxu0
    %v3286 = vadd.f32 %v3269, %v3285
    %v3287 = vpop.f32.mrf.mxu0
    %3288 = vdwg.mxu0
    %v3290 = vsel %vm904, %v3272, 0
    %3292 = vmatpush.bf16.msra.mxu0 0
    %3293 = vmatpush.bf16.msra.mxu0 0
    %3294 = vmatpush.bf16.msra.mxu0 0
    %3295 = vmatpush.bf16.msra.mxu0 0
    %3296 = vmatpush.bf16.msra.mxu0 0
    %3297 = vmatpush.bf16.msra.mxu0 0
    %3298 = vmatpush.bf16.msra.mxu0 0
    %3299 = vmatpush.bf16.msra.mxu0 %v3290
    %3300 = vmatmul.bf16.gmra.mxu0 %v2778
    %v3301 = vpop.f32.mrf.mxu0
    %v3302 = vadd.f32 %v3270, %v3301
    %v3303 = vpop.f32.mrf.mxu0
    %3304 = vdwg.mxu0
    %v3305 = vmul.f32 %v2708, %v3286
    %v3306 = vmul.f32 %v2718, %v3302
    %3309 = vst [vmem:[#allocation1] ss:$2 sm:$0xff] %v3305
    %s3310 = scalar_lea.vmem [#allocation1], 1
    %3311 = vst [vmem:[%s3310] ss:$2 sm:$0xff] %v3306
    %v3312 = vld.sshfl [vmem:[#allocation1] sm:$0xff pattern:$0x75316420]
    %v3314 = vpack.c.bf16 %v3312, %v3312
    %v3315 = vld [vmem:[#allocation40] sm:$0xff]
    %v3316 = vld [vmem:[#allocation40 + $0x8] sm:$0xff]
    %v3317 = vld [vmem:[#allocation40 + $0x10] sm:$0xff]
    %v3318 = vld [vmem:[#allocation40 + $0x18] sm:$0xff]
    %v3319 = vpack.c.bf16 %v3316, %v3315
    %v3320 = vpack.c.bf16 %v3318, %v3317
    %v3322 = vsel %vm1313, %v3314, 0
    %3324 = vmatpush.bf16.msra.mxu0 0
    %3325 = vmatpush.bf16.msra.mxu0 0
    %3326 = vmatpush.bf16.msra.mxu0 0
    %3327 = vmatpush.bf16.msra.mxu0 0
    %3328 = vmatpush.bf16.msra.mxu0 0
    %3329 = vmatpush.bf16.msra.mxu0 0
    %3330 = vmatpush.bf16.msra.mxu0 %v3320
    %3331 = vmatpush.bf16.msra.mxu0 %v3319
    %3332 = vmatmul.bf16.gmra.mxu0 %v3322
    %v3333 = vpop.f32.mrf.mxu0
    %v3334 = vadd.f32 0.0, %v3333
    %v3335 = vpop.f32.mrf.mxu0
    %3336 = vdwg.mxu0
    %v3338 = vrot.slane %v3334, 4
    %v3340 = vld [vmem:[#allocation41] sm:$0x1]
    %v3342 = vperm.slane %v3340, 0
    %v3344 = vadd.f32 %v3334, %v3342
    %v3345 = vadd.f32 %v3338, %v3342
    %v3346 = vmax.f32 %v3344, 0.0
    %v3347 = vmax.f32 %v3345, 0.0
    %vm3348 = vcmask 11264
    %v3349 = vsel %vm3348, %v3030, -inf
    %3350 = vmax.xlane.f32.xlu0 %v3349
    %v3351 = vpop.xlane.xlu0 %3350
    %v3352 = vsel %vm3348, %v3031, -inf
    %3353 = vmax.xlane.f32.xlu0 %v3352
    %v3354 = vpop.xlane.xlu0 %3353
    %v3355 = vsub.f32 %v3030, %v3351
    %v3356 = vsub.f32 %v3031, %v3354
    %v3357 = vmul.f32 %v3355, 1.442695
    %v3358 = vpow.pop %v3357
    %v3359 = vmul.f32 %v3356, 1.442695
    %v3360 = vpow.pop %v3359
    %v3361 = vsel %vm3348, %v3358, 0.0
    %3362 = vadd.xlane.f32.xlu0 %v3361
    %v3363 = vpop.xlane.xlu0 %3362
    %v3364 = vsel %vm3348, %v3360, 0.0
    %3365 = vadd.xlane.f32.xlu0 %v3364
    %v3366 = vpop.xlane.xlu0 %3365
    %v3367 = vrcp.pop %v3363
    %v3368 = vrcp.pop %v3366
    %v3369 = vmul.f32 %v3358, %v3367
    %v3370 = vmul.f32 %v3360, %v3368
    %v3371 = vpack.c.bf16 %v3369, %v3369
    %v3372 = vpack.c.bf16 %v3370, %v3370
    %v3373 = vpack.c.bf16 %v3346, %v3346
    %v3374 = vpack.c.bf16 %v3347, %v3347
    %3375 = vxpose.xlu0.c.b16.start [1/8] %v3371, 128
    %3376 = vxpose.xlu0.c.b16.cont [2/8] 0, 128
    %3377 = vxpose.xlu0.c.b16.cont [3/8] 0, 128
    %3378 = vxpose.xlu0.c.b16.cont [4/8] 0, 128
    %3379 = vxpose.xlu0.c.b16.cont [5/8] 0, 128
    %3380 = vxpose.xlu0.c.b16.cont [6/8] 0, 128
    %3381 = vxpose.xlu0.c.b16.cont [7/8] 0, 128
    %3382 = vxpose.xlu0.c.b16.end [8/8] 0, 128
    %v3383 = vpop.trf.xlu0
    %v3384 = vpop.trf.xlu0
    %v3385 = vpop.trf.xlu0
    %v3386 = vpop.trf.xlu0
    %v3387 = vpop.trf.xlu0
    %v3388 = vpop.trf.xlu0
    %v3389 = vpop.trf.xlu0
    %v3390 = vpop.trf.xlu0
    %v3392 = vsel %vm897, %v3383, 0
    %v3395 = vsel %vm904, %v3373, 0
    %3397 = vmatpush.bf16.msra.mxu0 0
    %3398 = vmatpush.bf16.msra.mxu0 0
    %3399 = vmatpush.bf16.msra.mxu0 0
    %3400 = vmatpush.bf16.msra.mxu0 0
    %3401 = vmatpush.bf16.msra.mxu0 0
    %3402 = vmatpush.bf16.msra.mxu0 0
    %3403 = vmatpush.bf16.msra.mxu0 0
    %3404 = vmatpush.bf16.msra.mxu0 %v3395
    %3405 = vmatmul.bf16.gmra.mxu0 %v3392
    %v3406 = vpop.f32.mrf.mxu0
    %v3407 = vadd.f32 0.0, %v3406
    %v3408 = vpop.f32.mrf.mxu0
    %3409 = vdwg.mxu0
    %3410 = vxpose.xlu0.c.b16.start [1/8] %v3372, 128
    %3411 = vxpose.xlu0.c.b16.cont [2/8] 0, 128
    %3412 = vxpose.xlu0.c.b16.cont [3/8] 0, 128
    %3413 = vxpose.xlu0.c.b16.cont [4/8] 0, 128
    %3414 = vxpose.xlu0.c.b16.cont [5/8] 0, 128
    %3415 = vxpose.xlu0.c.b16.cont [6/8] 0, 128
    %3416 = vxpose.xlu0.c.b16.cont [7/8] 0, 128
    %3417 = vxpose.xlu0.c.b16.end [8/8] 0, 128
    %v3418 = vpop.trf.xlu0
    %v3419 = vpop.trf.xlu0
    %v3420 = vpop.trf.xlu0
    %v3421 = vpop.trf.xlu0
    %v3422 = vpop.trf.xlu0
    %v3423 = vpop.trf.xlu0
    %v3424 = vpop.trf.xlu0
    %v3425 = vpop.trf.xlu0
    %v3427 = vsel %vm897, %v3418, 0
    %v3430 = vsel %vm904, %v3374, 0
    %3432 = vmatpush.bf16.msra.mxu0 0
    %3433 = vmatpush.bf16.msra.mxu0 0
    %3434 = vmatpush.bf16.msra.mxu0 0
    %3435 = vmatpush.bf16.msra.mxu0 0
    %3436 = vmatpush.bf16.msra.mxu0 0
    %3437 = vmatpush.bf16.msra.mxu0 0
    %3438 = vmatpush.bf16.msra.mxu0 0
    %3439 = vmatpush.bf16.msra.mxu0 %v3430
    %3440 = vmatmul.bf16.gmra.mxu0 %v3427
    %v3441 = vpop.f32.mrf.mxu0
    %v3442 = vadd.f32 0.0, %v3441
    %v3443 = vpop.f32.mrf.mxu0
    %3444 = vdwg.mxu0
    %vm3445 = vcmask 15360
    %v3447 = vsel %vm3445, %v3371, 0
    %3449 = vmatpush.bf16.xpose.msra.mxu0 0
    %3450 = vmatpush.bf16.xpose.msra.mxu0 0
    %3451 = vmatpush.bf16.xpose.msra.mxu0 0
    %3452 = vmatpush.bf16.xpose.msra.mxu0 0
    %3453 = vmatpush.bf16.xpose.msra.mxu0 0
    %3454 = vmatpush.bf16.xpose.msra.mxu0 0
    %3455 = vmatpush.bf16.xpose.msra.mxu0 0
    %3456 = vmatpush.bf16.xpose.msra.mxu0 %v3447
    %3457 = vmatmul.bf16.gmra.mxu0 %v3447
    %v3458 = vpop.f32.mrf.mxu0
    %v3459 = vadd.f32 0.0, %v3458
    %v3460 = vpop.f32.mrf.mxu0
    %3461 = vdwg.mxu0
    %v3463 = vsel %vm3445, %v3372, 0
    %3465 = vmatpush.bf16.xpose.msra.mxu0 0
    %3466 = vmatpush.bf16.xpose.msra.mxu0 0
    %3467 = vmatpush.bf16.xpose.msra.mxu0 0
    %3468 = vmatpush.bf16.xpose.msra.mxu0 0
    %3469 = vmatpush.bf16.xpose.msra.mxu0 0
    %3470 = vmatpush.bf16.xpose.msra.mxu0 0
    %3471 = vmatpush.bf16.xpose.msra.mxu0 0
    %3472 = vmatpush.bf16.xpose.msra.mxu0 %v3463
    %3473 = vmatmul.bf16.gmra.mxu0 %v3463
    %v3474 = vpop.f32.mrf.mxu0
    %v3475 = vadd.f32 0.0, %v3474
    %v3476 = vpop.f32.mrf.mxu0
    %3477 = vdwg.mxu0
    %v3478 = vsub.f32 %v2600, %v3459
    %v3479 = vsub.f32 %v2619, %v3475
    %v3480 = vmul.f32 %v3478, %v3478
    %v3481 = vmul.f32 %v3479, %v3479
    %v3482 = vsel %vm2690, %v3480, 0.0
    %v3483 = vsel %vm2690, %v3481, 0.0
    %v3484 = vadd.f32 %v3482, %v3483
    %3485 = vadd.xlane.f32.xlu0 %v3484
    %v3486 = vpop.xlane.xlu0 %3485
    %v3487 = vrot.slane %v3486, 4
    %v3488 = vadd.f32 %v3486, %v3487
    %v3489 = vrot.slane %v3488, 2
    %v3490 = vadd.f32 %v3488, %v3489
    %v3491 = vrot.slane %v3490, 1
    %v3492 = vadd.f32 %v3490, %v3491
    %s3493 = vtos %v3492
    %v3494 = vsub.f32 0.0, %v3369
    %v3495 = vsub.f32 0.0, %v3370
    %v3496 = vadd.f32 %v3369, 1e-15
    %v3497 = vadd.f32 %v3370, 1e-15
    %v3498 = vlog2.pop %v3496
    %v3499 = vmul.f32 %v3498, 0.6931472
    %v3500 = vlog2.pop %v3497
    %v3501 = vmul.f32 %v3500, 0.6931472
    %v3502 = vmul.f32 %v3494, %v3499
    %v3503 = vmul.f32 %v3495, %v3501
    %v3504 = vsel %vm3348, %v3502, 0.0
    %v3505 = vsel %vm3348, %v3503, 0.0
    %v3506 = vadd.f32 %v3504, %v3505
    %3507 = vadd.xlane.f32.xlu0 %v3506
    %v3508 = vpop.xlane.xlu0 %3507
    %v3509 = vrot.slane %v3508, 4
    %v3510 = vadd.f32 %v3508, %v3509
    %v3511 = vrot.slane %v3510, 2
    %v3512 = vadd.f32 %v3510, %v3511
    %v3513 = vrot.slane %v3512, 1
    %v3514 = vadd.f32 %v3512, %v3513
    %s3515 = vtos %v3514
    %vm3516 = vcmask 254976
    %v3517 = vsel %vm3516, %v3407, 0.0
    %v3518 = vrot.slane %v3517, 4
    %v3519 = vadd.f32 %v3517, %v3518
    %v3520 = vrot.slane %v3519, 2
    %v3521 = vadd.f32 %v3519, %v3520
    %v3522 = vrot.slane %v3521, 1
    %v3523 = vadd.f32 %v3521, %v3522
    %v3524 = vsel %vm3516, %v3442, 0.0
    %v3525 = vrot.slane %v3524, 4
    %v3526 = vadd.f32 %v3524, %v3525
    %v3527 = vrot.slane %v3526, 2
    %v3528 = vadd.f32 %v3526, %v3527
    %v3529 = vrot.slane %v3528, 1
    %v3530 = vadd.f32 %v3528, %v3529
    %v3531 = vrcp.pop 2.0
    %v3532 = vmul.f32 2.0, %v3531
    %v3533 = vsub.f32 1.0, %v3532
    %v3534 = vmul.f32 %v3531, %v3533
    %v3535 = vadd.f32 %v3531, %v3534
    %vm3536 = vweird.f32 %v3531
    %v3537 = vsel %vm3536, %v3531, %v3535
    %v3538 = vmul.f32 %v3523, %v3537
    %v3539 = vmul.f32 %v3530, %v3537
    %v3540 = vld [vmem:[%s105] sm:$0xff]
    %v3541 = vld [vmem:[%s105 + $0x8] sm:$0xff]
    %v3542 = vld [vmem:[%s105 + $0x10] sm:$0xff]
    %v3543 = vld [vmem:[%s105 + $0x18] sm:$0xff]
    %v3544 = vld [vmem:[#allocation2] sm:$0x1]
    %v3546 = vperm.slane %v3544, 0
    %v3550 = vsel %vm695, %v3539, %v3538
    %v3551 = vsel %vm1313, %v3550, 0
    %3553 = vmatpush.msra.mxu0 0.0
    %3554 = vmatpush.msra.mxu0 0.0
    %3555 = vmatpush.msra.mxu0 0.0
    %3556 = vmatpush.msra.mxu0 0.0
    %3557 = vmatpush.msra.mxu0 0.0
    %3558 = vmatpush.msra.mxu0 0.0
    %3559 = vmatpush.msra.mxu0 0.0
    %3560 = vmatpush.msra.mxu0 0.0
    %3561 = vmatpush.msra.mxu0 0.0
    %3562 = vmatpush.msra.mxu0 0.0
    %3563 = vmatpush.msra.mxu0 0.0
    %3564 = vmatpush.msra.mxu0 0.0
    %3565 = vmatpush.msra.mxu0 %v3543
    %3566 = vmatpush.msra.mxu0 %v3542
    %3567 = vmatpush.msra.mxu0 %v3541
    %3568 = vmatpush.msra.mxu0 %v3540
    %3569 = vmatmul.f32.gmra.mxu0 %v3551
    %v3570 = vpop.f32.mrf.mxu0
    %v3571 = vadd.f32 %v3546, %v3570
    %3572 = vdwg.mxu0
    %v3573 = vsub.f32 0.0, %v3571
    %v3574 = vmul.f32 %v3573, 1.442695
    %v3575 = vpow.pop %v3574
    %v3576 = vadd.f32 %v3575, 1.0
    %v3577 = vrcp.pop %v3576
    %v3578 = vmul.f32 %v3576, %v3577
    %v3579 = vsub.f32 1.0, %v3578
    %v3580 = vmul.f32 %v3577, %v3579
    %v3581 = vadd.f32 %v3577, %v3580
    %vm3582 = vweird.f32 %v3576
    %vm3583 = vweird.f32 %v3577
    %vm3584 = vmor %vm3582, %vm3583
    %v3585 = vsel %vm3584, %v3577, %v3581
    %v3586 = vand.u32 2147483647, %v3576
    %vm3587 = vcmp.eq.f32.partialorder %v3586, 8.507059e+37
    %v3588 = vand.u32 %v3576, 2147483648
    %v3589 = vor.u32 1.1754944e-38, %v3588
    %v3590 = vsel %vm3587, %v3589, %v3585
    %v3591 = vmul.f32 1.0, %v3590
    %vm3592 = vcmask 7168
    %v3593 = vsel %vm3592, %v3591, 0.0
    %v3595 = vrot.slane %v3593, 1
    %v3596 = vperm.slane %v3593, 0
    %v3597 = vperm.slane %v3595, 0
    %3600 = vst [vmem:[%s109] sm:$0xff] %v3596
    %3601 = vst [vmem:[%s109 + $0x8] sm:$0xff] %v3597
    %v3602 = vlaneseq
    %v3603 = vshrl.u32 %v3602, 7
    %vm3604 = vcmp.eq.s32.totalorder %v3603, 0
    %vm3605 = vcmp.eq.s32.totalorder %v686, 0
    %vm3606 = vmand %vm3604, %vm3605
    %v3607 = vstv %s1833
    %v3608 = vsel %vm3606, %v3607, 0.0
    %v3609 = vadd.f32 %v3608, 0.0
    %vm3610 = vcmp.eq.s32.totalorder %v3603, 1
    %vm3611 = vmand %vm3610, %vm3605
    %v3612 = vstv %s1869
    %v3613 = vsel %vm3611, %v3612, 0.0
    %v3614 = vadd.f32 %v3609, %v3613
    %vm3615 = vcmp.eq.s32.totalorder %v686, 1
    %vm3616 = vmand %vm3604, %vm3615
    %v3617 = vstv %s2667
    %v3618 = vsel %vm3616, %v3617, 0.0
    %v3619 = vadd.f32 %v3614, %v3618
    %vm3620 = vmand %vm3610, %vm3615
    %v3621 = vstv %s2689
    %v3622 = vsel %vm3620, %v3621, 0.0
    %v3623 = vadd.f32 %v3619, %v3622
    %vm3624 = vcmp.eq.s32.totalorder %v686, 2
    %vm3625 = vmand %vm3604, %vm3624
    %v3626 = vstv %s3493
    %v3627 = vsel %vm3625, %v3626, 0.0
    %v3628 = vadd.f32 %v3623, %v3627
    %vm3629 = vmand %vm3610, %vm3624
    %v3630 = vstv %s3515
    %v3631 = vsel %vm3629, %v3630, 0.0
    %v3632 = vadd.f32 %v3628, %v3631
    %3633 = vst [vmem:[%s111] sm:$0xff] %v3632
    // Predicated region
    $region322: #{gnn_diffpool_forward.1} parent=1 // pred_check
      _
    $region323: #{gnn_diffpool_forward.1} parent=1 // pred_check_branch
      %3635 = sbr.rel (0) target = $region325
    $region324: #{gnn_diffpool_forward.1} parent=1 // pred_region
      _
    $region325: #{gnn_diffpool_forward.1} parent=1 // pred_fallthru
      _
    // Predicated region
    $region326: #{gnn_diffpool_forward.1} parent=1 // pred_check
      _
    $region327: #{gnn_diffpool_forward.1} parent=1 // pred_check_branch
      %3637 = sbr.rel (0) target = $region329
    $region328: #{gnn_diffpool_forward.1} parent=1 // pred_region
      _
    $region329: #{gnn_diffpool_forward.1} parent=1 // pred_fallthru
      _
    // Predicated region
    $region330: #{gnn_diffpool_forward.1} parent=1 // pred_check
      _
    $region331: #{gnn_diffpool_forward.1} parent=1 // pred_check_branch
      %3639 = sbr.rel (0) target = $region333
    $region332: #{gnn_diffpool_forward.1} parent=1 // pred_region
      _
    $region333: #{gnn_diffpool_forward.1} parent=1 // pred_fallthru
      _
    // Predicated region
    $region334: #{gnn_diffpool_forward.1} parent=1 // pred_check
      _
    $region335: #{gnn_diffpool_forward.1} parent=1 // pred_check_branch
      %3641 = sbr.rel (0) target = $region337
    $region336: #{gnn_diffpool_forward.1} parent=1 // pred_region
      _
    $region337: #{gnn_diffpool_forward.1} parent=1 // pred_fallthru
      _
    %3642 = vsyncpa [#allocation4], 1
    %3643 = vsyncpa [#allocation6], 1
    %3644 = vsyncpa [#allocation9], 1
    %3645 = vsyncpa [#allocation12], 1
    %3646 = vsyncpa [#allocation15], 1
    %3647 = vsyncpa [#allocation18], 1
    %3648 = vsyncpa [#allocation21], 1
    %3649 = vsyncpa [#allocation24], 1
    %3650 = vsyncpa [#allocation27], 1
    %3651 = vsyncpa [#allocation30], 1
    %3652 = vsyncpa [#allocation33], 1
    %3653 = vsyncpa [#allocation36], 1
    %3654 = vsyncpa [#allocation39], 1
    %3655 = vsyncpa [#allocation42], 1

</llo_original>
